<compile_context>
chip_gen: v7x
topology: tpu7x:2x2x1
jax: 0.10.0
libtpu: 0.0.40
codegen_flags: <defaults>
</compile_context>

<pallas_src>
import functools
import math

import numpy as np

import jax
import jax.numpy as jnp
from jax import lax
from jax.experimental import pallas as pl
from jax.experimental.pallas import tpu as pltpu


# ----------------------------------------------------------------------------
# Relative shift (Transformer-XL "pad zero column, reinterpret, drop row 0").
# Row r of the result is concat(P[r, T-1-r:], [0], P[r+1, :T-r-2]) -- i.e. a
# per-row rotation of [P_r | 0 | P_{r+1}] -- including the "wrapped" upper
# triangle of the reference trick.
# ----------------------------------------------------------------------------
def _rel_shift_next_rows(pscore, T):
    f32 = pscore.dtype
    return jnp.concatenate([pscore[1:, :], jnp.zeros((1, T), f32)], axis=0)


def _rel_shift_roll_np(pscore, T):
    # [0 | P_{r+1}[:T-1] | P_r] right-rotated by (r+1) per row (np.roll sign).
    f32 = pscore.dtype
    p_dn = _rel_shift_next_rows(pscore, T)
    acc = jnp.concatenate(
        [jnp.zeros((T, 1), f32), p_dn[:, : T - 1], pscore], axis=1)      # (T, 2T)
    rolled = pltpu.roll(acc, shift=1, axis=1, stride=1, stride_axis=0)
    return rolled[:, :T]


def _rel_shift_roll_left(pscore, T):
    # [P_r | 0 | P_{r+1}[:T-1]] left-rotated by (T-1-r) per row.
    f32 = pscore.dtype
    p_dn = _rel_shift_next_rows(pscore, T)
    acc = jnp.concatenate(
        [pscore, jnp.zeros((T, 1), f32), p_dn[:, : T - 1]], axis=1)      # (T, 2T)
    rolled = pltpu.roll(acc, shift=T - 1, axis=1, stride=-1, stride_axis=0)
    return rolled[:, :T]


def _rel_shift_loop(pscore, T):
    # Fallback: log2(T) conditional power-of-two lane rotations (VALU selects).
    f32 = pscore.dtype
    p_dn = _rel_shift_next_rows(pscore, T)
    acc = jnp.concatenate(
        [pscore, jnp.zeros((T, 1), f32), p_dn[:, : T - 1]], axis=1)      # (T, 2T)
    shift_amt = (T - 1) - lax.broadcasted_iota(jnp.int32, (T, 1), 0)
    for b in range((T - 1).bit_length()):
        k = 1 << b
        rolled = jnp.concatenate([acc[:, k:], acc[:, :k]], axis=1)       # left by k
        acc = jnp.where((shift_amt & k) != 0, rolled, acc)
    return acc[:, :T]


_REL_SHIFT_IMPLS = {
    "roll_np": _rel_shift_roll_np,
    "roll_left": _rel_shift_roll_left,
    "loop": _rel_shift_loop,
}


def _rel_shift(pscore, T, mode):
    if T == 1:
        return pscore
    return _REL_SHIFT_IMPLS[mode](pscore, T)


def _rel_shift_reference_np(p):
    # numpy mirror of the PyTorch pad/view/drop trick.
    T = p.shape[0]
    padded = np.concatenate([np.zeros((T, 1), p.dtype), p], axis=1)      # (T, T+1)
    return padded.reshape(-1)[T:].reshape(T, T)


@functools.lru_cache(maxsize=None)
def _rel_shift_mode(T):
    """Pick the cheapest rel-shift implementation that is exact on this build.

    The strided pltpu.roll (XLU) variants are preferred; whichever rotation
    direction convention the installed tpu.dynamic_rotate uses is detected by
    a one-off tiny probe (cached per T).  If neither lowers / matches, the
    always-correct select-loop fallback is used.
    """
    if T <= 1:
        return "loop"
    p = np.random.default_rng(0).standard_normal((T, T)).astype(np.float32)
    want = _rel_shift_reference_np(p)
    for mode in ("roll_np", "roll_left"):
        impl = _REL_SHIFT_IMPLS[mode]
        try:
            def probe(x_ref, o_ref, impl=impl):
                o_ref[...] = impl(x_ref[...], T)
            got = pl.pallas_call(
                probe, out_shape=jax.ShapeDtypeStruct((T, T), jnp.float32),
            )(jnp.asarray(p))
            got = np.asarray(jax.block_until_ready(got))
            if got.shape == want.shape and np.allclose(got, want, atol=1e-5, rtol=1e-5):
                return mode
        except Exception:
            pass
    return "loop"


@functools.lru_cache(maxsize=None)
def _vmem_limit_bytes():
    # ~3/4 of physical VMEM per TensorCore: 96 MiB on v5e/v6e (128 MiB
    # physical), 48 MiB on v7x (64 MiB physical).  Conservative fallback.
    try:
        cap = int(pltpu.get_tpu_info().vmem_capacity_bytes)
    except Exception:
        cap = 64 * 1024 * 1024
    return cap * 3 // 4


# ----------------------------------------------------------------------------
# Fused kernel: projections + scores + rel-shift + mask + softmax + attn@v + fc.
# ----------------------------------------------------------------------------
def fused_rel_mha_kernel(*refs, n_heads, d_head, inv_sqrt_dim, compute_dtype,
                         exp_dtype, mask_rows, approx_recip, rel_shift_mode):
    if mask_rows:
        (q_ref, k_ref, v_ref, pos_ref, mask_ref,
         wq_ref, wpos_ref, wfc_ref, bias_ref, out_ref, ctx_ref) = refs
    else:
        (q_ref, k_ref, v_ref, pos_ref,
         wq_ref, wpos_ref, wfc_ref, bias_ref, out_ref, ctx_ref) = refs
        mask_ref = None

    f32 = jnp.float32
    cd = compute_dtype
    T = q_ref.shape[0]

    bias = bias_ref[...]                                   # (8, d_model) f32
    bq, u_row, v_row, bfc = bias[0:1], bias[1:2], bias[2:3], bias[3:4]

    # ---- fused projections: q/k/v all go through linear_q (faithful), so one
    # (3T, d_model) @ (d_model, d_model) matmul = one MXU weight push for Wq.
    qkv = jnp.concatenate([q_ref[...], k_ref[...], v_ref[...]], axis=0)  # (3T, d)
    proj = jnp.dot(qkv, wq_ref[...], preferred_element_type=f32) + bq
    qh, kh, vh = proj[:T], proj[T:2 * T], proj[2 * T:]
    ph = jnp.dot(pos_ref[...], wpos_ref[...], preferred_element_type=f32)

    # 1/sqrt(d_model) folded into the query side (u/v rows pre-scaled in glue).
    qh_s = qh * inv_sqrt_dim
    qh_u = (qh_s + u_row).astype(cd)
    qh_v = (qh_s + v_row).astype(cd)
    kh_c = kh.astype(cd)
    ph_c = ph.astype(cd)
    vh_c = vh.astype(cd)

    if mask_rows:
        masked = mask_ref[...] != 0.0            # (1, T) or (T, T); broadcasts

    dn = (((1,), (1,)), ((), ()))                # contract last dims, no transpose
    for h in range(n_heads):
        lo, hi = h * d_head, (h + 1) * d_head
        content = lax.dot_general(qh_u[:, lo:hi], kh_c[:, lo:hi], dn,
                                  preferred_element_type=f32)
        pscore = lax.dot_general(qh_v[:, lo:hi], ph_c[:, lo:hi], dn,
                                 preferred_element_type=f32)
        score = content + _rel_shift(pscore, T, rel_shift_mode)
        if mask_rows:
            score = jnp.where(masked, -1000000000.0, score)  # exact masked_fill
        m = jnp.max(score, axis=-1, keepdims=True)
        p = jnp.exp((score - m).astype(exp_dtype))           # bf16 exp on v6e/v7x
        p32 = p.astype(f32)
        denom = jnp.sum(p32, axis=-1, keepdims=True)
        attn = (p32 * pl.reciprocal(denom, approx=approx_recip)).astype(cd)
        # TODO(synk): dropout on attn omitted -- eval/inference semantics.
        # Write this head's context straight into the (T, d_model) scratch slab
        # (bounds live ranges of the unrolled head loop, no concat copy).
        ctx_ref[:, lo:hi] = jnp.dot(attn, vh_c[:, lo:hi],
                                    preferred_element_type=f32)

    out = jnp.dot(ctx_ref[...].astype(cd), wfc_ref[...],
                  preferred_element_type=f32) + bfc
    out_ref[...] = out.astype(out_ref.dtype)


# ----------------------------------------------------------------------------
# Glue
# ----------------------------------------------------------------------------
def relative_mha_forward(params, q, k, v, pos_embedding, mask=None, *,
                         compute_dtype=jnp.bfloat16, exp_dtype=None,
                         out_dtype=None):
    """Fused forward pass of RelativeMultiHeadAttention.

    compute_dtype: matmul-operand dtype (bf16 default; f32 MXU accumulation).
    exp_dtype:     dtype of the softmax exp; defaults to compute_dtype (bf16
                   offloads the EUP on v6e/v7x).  Pass jnp.float32 on v5e
                   (no bf16 EUP/VPU there).
    out_dtype:     output dtype (default f32, matching the PyTorch module).
    """
    B, T, d_model = q.shape
    H, d_head = params["u_bias"].shape
    if d_model != H * d_head:
        raise ValueError("d_model must equal n_heads * d_head")
    inv_sqrt_dim = 1.0 / math.sqrt(d_model)
    cd = compute_dtype
    if exp_dtype is None:
        exp_dtype = cd
    if out_dtype is None:
        out_dtype = jnp.float32

    qc, kc, vc, pc = (x.astype(cd) for x in (q, k, v, pos_embedding))
    wq, wpos, wfc = (params[n].astype(cd) for n in ("Wq", "Wpos", "Wfc"))

    # All four (1, d_model) bias rows packed into ONE (8, d_model) f32 operand
    # (row 0: bq, 1: u/sqrt(d), 2: v/sqrt(d), 3: bfc, 4-7: pad) -> one stream.
    bias_rows = jnp.stack([
        params["bq"].astype(jnp.float32),
        params["u_bias"].astype(jnp.float32).reshape(d_model) * inv_sqrt_dim,
        params["v_bias"].astype(jnp.float32).reshape(d_model) * inv_sqrt_dim,
        params["bfc"].astype(jnp.float32)], axis=0)
    biases = jnp.concatenate(
        [bias_rows, jnp.zeros((4, d_model), jnp.float32)], axis=0)

    act_spec = pl.BlockSpec((None, T, d_model), lambda b: (b, 0, 0))
    operands = [qc, kc, vc, pc]
    in_specs = [act_spec, act_spec, act_spec, act_spec]

    mask_rows = 0
    if mask is not None:
        m = jnp.asarray(mask)
        if m.ndim != 3 or m.shape[0] != B or m.shape[-1] != T or m.shape[1] not in (1, T):
            raise ValueError(
                f"mask must be (batch, 1, time) or (batch, time, time); got {m.shape}")
        mask_rows = int(m.shape[1])
        # Shipped in its native shape -- never broadcast to (B, T, T) in HBM.
        operands.append((m != 0).astype(jnp.float32))
        in_specs.append(pl.BlockSpec((None, mask_rows, T), lambda b: (b, 0, 0)))

    operands += [wq, wpos, wfc, biases]

    kernel = functools.partial(
        fused_rel_mha_kernel,
        n_heads=H, d_head=d_head, inv_sqrt_dim=inv_sqrt_dim,
        compute_dtype=cd, exp_dtype=exp_dtype, mask_rows=mask_rows,
        approx_recip=(cd != jnp.float32), rel_shift_mode=_rel_shift_mode(T))

    def build(single_buffer_consts):
        if single_buffer_consts:
            const_spec = lambda r, c: pl.BlockSpec(
                (r, c), lambda b: (0, 0), pipeline_mode=pl.Buffered(1))
        else:
            const_spec = lambda r, c: pl.BlockSpec((r, c), lambda b: (0, 0))
        w_specs = [const_spec(d_model, d_model), const_spec(d_model, d_model),
                   const_spec(d_model, d_model), const_spec(8, d_model)]
        return pl.pallas_call(
            kernel,
            grid=(B,),
            in_specs=in_specs + w_specs,
            out_specs=pl.BlockSpec((None, T, d_model), lambda b: (b, 0, 0)),
            out_shape=jax.ShapeDtypeStruct((B, T, d_model), out_dtype),
            scratch_shapes=[pltpu.VMEM((T, d_model), jnp.float32)],
            compiler_params=pltpu.CompilerParams(
                dimension_semantics=("parallel",),
                vmem_limit_bytes=_vmem_limit_bytes()),
        )

    # TODO(synk): for v7x (64 MiB VMEM/TC, 2 TCs) at production shapes
    # (d_model>=1024, T>=1024) split the score/softmax phase over a second
    # "parallel" query-tile grid axis with a flash-style key loop so per-step
    # residency fits and both TensorCores stay busy even when B is 1 or odd.
    try:
        # Constant-index weight operands single-buffered: saves one full extra
        # VMEM copy of Wq/Wpos/Wfc (~3*d_model^2*sizeof(compute_dtype)).
        return build(True)(*operands)
    except Exception:
        # pl.Buffered(1) not supported on this jax build -> default buffering.
        return build(False)(*operands)


# ----------------------------------------------------------------------------
# Pure-JAX reference (mirrors the PyTorch forward) for correctness checks.
# ----------------------------------------------------------------------------
def _relative_shift_ref(pos_score):
    B, H, T1, T2 = pos_score.shape
    zeros = jnp.zeros((B, H, T1, 1), pos_score.dtype)
    padded = jnp.concatenate([zeros, pos_score], axis=-1)
    padded = padded.reshape(B, H, T2 + 1, T1)
    return padded[:, :, 1:].reshape(B, H, T1, T2)


def reference_forward(params, q, k, v, pos_embedding, mask=None):
    B, T, d_model = q.shape
    H = params["u_bias"].shape[0]
    d_head = d_model // H
    sqrt_dim = math.sqrt(d_model)

    qp = (q @ params["Wq"] + params["bq"]).reshape(B, T, H, d_head)
    kp = (k @ params["Wq"] + params["bq"]).reshape(B, T, H, d_head).transpose(0, 2, 1, 3)
    vp = (v @ params["Wq"] + params["bq"]).reshape(B, T, H, d_head).transpose(0, 2, 1, 3)
    pp = (pos_embedding @ params["Wpos"]).reshape(B, T, H, d_head)

    content = jnp.einsum("bihd,bhjd->bhij", qp + params["u_bias"], kp)
    pos_score = jnp.einsum("bihd,bjhd->bhij", qp + params["v_bias"], pp)
    pos_score = _relative_shift_ref(pos_score)
    score = (content + pos_score) / sqrt_dim
    if mask is not None:
        score = jnp.where(mask[:, None] != 0, -1000000000.0, score)
    attn = jax.nn.softmax(score, axis=-1)
    ctx = jnp.einsum("bhij,bhjd->bihd", attn, vp).reshape(B, T, d_model)
    return ctx @ params["Wfc"] + params["bfc"]


def init_params(key, d_model, n_heads):
    d_head = d_model // n_heads
    ks = jax.random.split(key, 8)
    s = 0.05
    return {
        "Wq": jax.random.normal(ks[0], (d_model, d_model), jnp.float32) * s,
        "bq": jax.random.normal(ks[1], (d_model,), jnp.float32) * s,
        "Wpos": jax.random.normal(ks[2], (d_model, d_model), jnp.float32) * s,
        "u_bias": jax.random.normal(ks[3], (n_heads, d_head), jnp.float32) * s,
        "v_bias": jax.random.normal(ks[4], (n_heads, d_head), jnp.float32) * s,
        "Wfc": jax.random.normal(ks[5], (d_model, d_model), jnp.float32) * s,
        "bfc": jax.random.normal(ks[6], (d_model,), jnp.float32) * s,
        # linear_k / linear_v exist in the module's __init__ but are unused in forward.
    }


if __name__ == "__main__":
    B, T, d_model, n_heads = 2, 8, 64, 4

    key = jax.random.PRNGKey(0)
    kp, kq, kk_, kv, kpos, kmask = jax.random.split(key, 6)
    params = init_params(kp, d_model, n_heads)
    q = jax.random.normal(kq, (B, T, d_model), jnp.float32)
    k = jax.random.normal(kk_, (B, T, d_model), jnp.float32)
    v = jax.random.normal(kv, (B, T, d_model), jnp.float32)
    pos_embedding = jax.random.normal(kpos, (B, T, d_model), jnp.float32)

    # 1) exact f32 path, no mask
    out_f32 = jax.block_until_ready(
        relative_mha_forward(params, q, k, v, pos_embedding, mask=None,
                             compute_dtype=jnp.float32))
    ref = reference_forward(params, q, k, v, pos_embedding, mask=None)
    assert out_f32.shape == (B, T, d_model)
    assert jnp.allclose(out_f32, ref, atol=1e-3, rtol=1e-3), \
        float(jnp.max(jnp.abs(out_f32 - ref)))

    # 2) masked path ((batch, 1, time2) mask per module spec), f32
    mask = (jax.random.uniform(kmask, (B, 1, T)) > 0.7).astype(jnp.int32)
    out_m = jax.block_until_ready(
        relative_mha_forward(params, q, k, v, pos_embedding, mask=mask,
                             compute_dtype=jnp.float32))
    ref_m = reference_forward(params, q, k, v, pos_embedding, mask=mask)
    assert jnp.allclose(out_m, ref_m, atol=1e-3, rtol=1e-3), \
        float(jnp.max(jnp.abs(out_m - ref_m)))

    # 3) bf16 fast path (default perf configuration: bf16 matmuls + bf16 exp),
    #    bf16 output, no mask
    out_bf16 = jax.block_until_ready(
        relative_mha_forward(params, q, k, v, pos_embedding, mask=None,
                             out_dtype=jnp.bfloat16))
    assert out_bf16.dtype == jnp.bfloat16
    diff = jnp.abs(out_bf16.astype(jnp.float32) - ref)
    assert jnp.allclose(out_bf16.astype(jnp.float32), ref, atol=3e-2, rtol=3e-2), \
        float(jnp.max(diff))

    # 4) non-power-of-two T, odd batch, full (batch, time1, time2) mask, f32
    #    (exercises the rel-shift at another lane width and the (T,T) mask path)
    B2, T2 = 1, 24
    kq2, kk2, kv2, kpos2, kmask2 = jax.random.split(jax.random.PRNGKey(1), 5)
    q2 = jax.random.normal(kq2, (B2, T2, d_model), jnp.float32)
    k2 = jax.random.normal(kk2, (B2, T2, d_model), jnp.float32)
    v2 = jax.random.normal(kv2, (B2, T2, d_model), jnp.float32)
    p2 = jax.random.normal(kpos2, (B2, T2, d_model), jnp.float32)
    m2 = (jax.random.uniform(kmask2, (B2, T2, T2)) > 0.8).astype(jnp.int32)
    out2 = jax.block_until_ready(
        relative_mha_forward(params, q2, k2, v2, p2, mask=m2,
                             compute_dtype=jnp.float32))
    ref2 = reference_forward(params, q2, k2, v2, p2, mask=m2)
    assert jnp.allclose(out2, ref2, atol=1e-3, rtol=1e-3), \
        float(jnp.max(jnp.abs(out2 - ref2)))

    print("KERNEL_OK")
</pallas_src>

<mosaic_0001>
module attributes {stable_mosaic.version = 11 : i64} {
  func.func @probe(%arg0: memref<8x8xf32, #tpu.memory_space<vmem>>, %arg1: memref<8x8xf32, #tpu.memory_space<vmem>>) attributes {dimension_semantics = [], scalar_prefetch = 0 : i64, scratch_operands = 0 : i64, tpu.core_type = #tpu.core_type<tc>} {
    %c0 = arith.constant 0 : index
    %c0_0 = arith.constant 0 : index
    %0 = vector.load %arg0[%c0, %c0_0] : memref<8x8xf32, #tpu.memory_space<vmem>>, vector<8x8xf32>
    %1 = vector.extract_strided_slice %0 {offsets = [1, 0], sizes = [7, 8], strides = [1, 1]} : vector<8x8xf32> to vector<7x8xf32>
    %cst = arith.constant 0.000000e+00 : f32
    %2 = vector.broadcast %cst : f32 to vector<1x8xf32>
    %3 = tpu.concatenate %1, %2 in 0 : vector<7x8xf32>, vector<1x8xf32> -> vector<8x8xf32>
    %cst_1 = arith.constant 0.000000e+00 : f32
    %4 = vector.broadcast %cst_1 : f32 to vector<8x1xf32>
    %5 = vector.extract_strided_slice %3 {offsets = [0, 0], sizes = [8, 7], strides = [1, 1]} : vector<8x8xf32> to vector<8x7xf32>
    %6 = tpu.concatenate %4, %5, %0 in 1 : vector<8x1xf32>, vector<8x7xf32>, vector<8x8xf32> -> vector<8x16xf32>
    %c1_i32 = arith.constant 1 : i32
    %7 = tpu.dynamic_rotate %6 by %c1_i32 dim 1 {stride = 1 : si32, stride_dimension = 0 : si32} : vector<8x16xf32>, i32 -> vector<8x16xf32>
    %8 = vector.extract_strided_slice %7 {offsets = [0, 0], sizes = [8, 8], strides = [1, 1]} : vector<8x16xf32> to vector<8x8xf32>
    %c0_2 = arith.constant 0 : index
    %c0_3 = arith.constant 0 : index
    %9 = vector.load %arg1[%c0_2, %c0_3] : memref<8x8xf32, #tpu.memory_space<vmem>>, vector<8x8xf32>
    tpu.vector_store %arg1[%c0_2, %c0_3], %8 {strides = array<i32>} : memref<8x8xf32, #tpu.memory_space<vmem>>, vector<8x8xf32>,
    return
  }
}

module attributes {stable_mosaic.version = 11 : i64} {
  func.func @fused_rel_mha_kernel(%arg0: i32, %arg1: memref<1x8x64xf32, #tpu.memory_space<vmem>>, %arg2: memref<1x8x64xf32, #tpu.memory_space<vmem>>, %arg3: memref<1x8x64xf32, #tpu.memory_space<vmem>>, %arg4: memref<1x8x64xf32, #tpu.memory_space<vmem>>, %arg5: memref<64x64xf32, #tpu.memory_space<vmem>>, %arg6: memref<64x64xf32, #tpu.memory_space<vmem>>, %arg7: memref<64x64xf32, #tpu.memory_space<vmem>>, %arg8: memref<8x64xf32, #tpu.memory_space<vmem>>, %arg9: memref<1x8x64xf32, #tpu.memory_space<vmem>>, %arg10: memref<8x64xf32, #tpu.memory_space<vmem>>) attributes {dimension_semantics = [#tpu.dimension_semantics<parallel>], iteration_bounds = array<i64: 2>, scalar_prefetch = 0 : i64, scratch_operands = 1 : i64, tpu.core_type = #tpu.core_type<tc>, window_params = [{transform_indices = @transform_0, window_bounds = array<i64: 1, 8, 64>}, {transform_indices = @transform_1, window_bounds = array<i64: 1, 8, 64>}, {transform_indices = @transform_2, window_bounds = array<i64: 1, 8, 64>}, {transform_indices = @transform_3, window_bounds = array<i64: 1, 8, 64>}, {pipeline_mode = #tpu.pipeline_mode<synchronous>, transform_indices = @transform_4, window_bounds = array<i64: 64, 64>}, {pipeline_mode = #tpu.pipeline_mode<synchronous>, transform_indices = @transform_5, window_bounds = array<i64: 64, 64>}, {pipeline_mode = #tpu.pipeline_mode<synchronous>, transform_indices = @transform_6, window_bounds = array<i64: 64, 64>}, {pipeline_mode = #tpu.pipeline_mode<synchronous>, transform_indices = @transform_7, window_bounds = array<i64: 8, 64>}, {transform_indices = @transform_8, window_bounds = array<i64: 1, 8, 64>}]} {
    %c0 = arith.constant 0 : index
    %c0_0 = arith.constant 0 : index
    %0 = vector.load %arg8[%c0, %c0_0] : memref<8x64xf32, #tpu.memory_space<vmem>>, vector<8x64xf32>
    %1 = vector.extract_strided_slice %0 {offsets = [0, 0], sizes = [1, 64], strides = [1, 1]} : vector<8x64xf32> to vector<1x64xf32>
    %2 = vector.extract_strided_slice %0 {offsets = [1, 0], sizes = [1, 64], strides = [1, 1]} : vector<8x64xf32> to vector<1x64xf32>
    %3 = vector.extract_strided_slice %0 {offsets = [2, 0], sizes = [1, 64], strides = [1, 1]} : vector<8x64xf32> to vector<1x64xf32>
    %4 = vector.extract_strided_slice %0 {offsets = [3, 0], sizes = [1, 64], strides = [1, 1]} : vector<8x64xf32> to vector<1x64xf32>
    %c0_1 = arith.constant 0 : index
    %c0_2 = arith.constant 0 : index
    %c0_3 = arith.constant 0 : index
    %5 = vector.load %arg1[%c0_1, %c0_2, %c0_3] : memref<1x8x64xf32, #tpu.memory_space<vmem>>, vector<1x8x64xf32>
    %6 = vector.shape_cast %5 : vector<1x8x64xf32> to vector<8x64xf32>
    %c0_4 = arith.constant 0 : index
    %c0_5 = arith.constant 0 : index
    %c0_6 = arith.constant 0 : index
    %7 = vector.load %arg2[%c0_4, %c0_5, %c0_6] : memref<1x8x64xf32, #tpu.memory_space<vmem>>, vector<1x8x64xf32>
    %8 = vector.shape_cast %7 : vector<1x8x64xf32> to vector<8x64xf32>
    %c0_7 = arith.constant 0 : index
    %c0_8 = arith.constant 0 : index
    %c0_9 = arith.constant 0 : index
    %9 = vector.load %arg3[%c0_7, %c0_8, %c0_9] : memref<1x8x64xf32, #tpu.memory_space<vmem>>, vector<1x8x64xf32>
    %10 = vector.shape_cast %9 : vector<1x8x64xf32> to vector<8x64xf32>
    %11 = tpu.concatenate %6, %8, %10 in 0 : vector<8x64xf32>, vector<8x64xf32>, vector<8x64xf32> -> vector<24x64xf32>
    %c0_10 = arith.constant 0 : index
    %c0_11 = arith.constant 0 : index
    %12 = vector.load %arg5[%c0_10, %c0_11] : memref<64x64xf32, #tpu.memory_space<vmem>>, vector<64x64xf32>
    %cst = arith.constant dense<0.000000e+00> : vector<24x64xf32>
    %13 = tpu.matmul %11, %12, %cst {dimension_numbers = #tpu.dot_dimension_numbers<[1], [0], [0], [1], [0, 0, 1, 1], [], []>} : vector<24x64xf32>, vector<64x64xf32>, vector<24x64xf32> -> vector<24x64xf32>
    %14 = vector.broadcast %1 : vector<1x64xf32> to vector<24x64xf32>
    %15 = arith.addf %13, %14 : vector<24x64xf32>
    %16 = vector.extract_strided_slice %15 {offsets = [0, 0], sizes = [8, 64], strides = [1, 1]} : vector<24x64xf32> to vector<8x64xf32>
    %17 = vector.extract_strided_slice %15 {offsets = [8, 0], sizes = [8, 64], strides = [1, 1]} : vector<24x64xf32> to vector<8x64xf32>
    %18 = vector.extract_strided_slice %15 {offsets = [16, 0], sizes = [8, 64], strides = [1, 1]} : vector<24x64xf32> to vector<8x64xf32>
    %c0_12 = arith.constant 0 : index
    %c0_13 = arith.constant 0 : index
    %c0_14 = arith.constant 0 : index
    %19 = vector.load %arg4[%c0_12, %c0_13, %c0_14] : memref<1x8x64xf32, #tpu.memory_space<vmem>>, vector<1x8x64xf32>
    %20 = vector.shape_cast %19 : vector<1x8x64xf32> to vector<8x64xf32>
    %c0_15 = arith.constant 0 : index
    %c0_16 = arith.constant 0 : index
    %21 = vector.load %arg6[%c0_15, %c0_16] : memref<64x64xf32, #tpu.memory_space<vmem>>, vector<64x64xf32>
    %cst_17 = arith.constant dense<0.000000e+00> : vector<8x64xf32>
    %22 = tpu.matmul %20, %21, %cst_17 {dimension_numbers = #tpu.dot_dimension_numbers<[1], [0], [0], [1], [0, 0, 1, 1], [], []>} : vector<8x64xf32>, vector<64x64xf32>, vector<8x64xf32> -> vector<8x64xf32>
    %cst_18 = arith.constant 1.250000e-01 : f32
    %23 = vector.broadcast %cst_18 : f32 to vector<8x64xf32>
    %24 = arith.mulf %16, %23 : vector<8x64xf32>
    %25 = vector.broadcast %2 : vector<1x64xf32> to vector<8x64xf32>
    %26 = arith.addf %24, %25 : vector<8x64xf32>
    %27 = vector.broadcast %3 : vector<1x64xf32> to vector<8x64xf32>
    %28 = arith.addf %24, %27 : vector<8x64xf32>
    %29 = vector.extract_strided_slice %26 {offsets = [0, 0], sizes = [8, 16], strides = [1, 1]} : vector<8x64xf32> to vector<8x16xf32>
    %30 = vector.extract_strided_slice %17 {offsets = [0, 0], sizes = [8, 16], strides = [1, 1]} : vector<8x64xf32> to vector<8x16xf32>
    %cst_19 = arith.constant dense<0.000000e+00> : vector<8x8xf32>
    %31 = tpu.matmul %29, %30, %cst_19 {dimension_numbers = #tpu.dot_dimension_numbers<[1], [1], [0], [0], [0, 0, 1, 0], [], []>} : vector<8x16xf32>, vector<8x16xf32>, vector<8x8xf32> -> vector<8x8xf32>
    %32 = vector.extract_strided_slice %28 {offsets = [0, 0], sizes = [8, 16], strides = [1, 1]} : vector<8x64xf32> to vector<8x16xf32>
    %33 = vector.extract_strided_slice %22 {offsets = [0, 0], sizes = [8, 16], strides = [1, 1]} : vector<8x64xf32> to vector<8x16xf32>
    %cst_20 = arith.constant dense<0.000000e+00> : vector<8x8xf32>
    %34 = tpu.matmul %32, %33, %cst_20 {dimension_numbers = #tpu.dot_dimension_numbers<[1], [1], [0], [0], [0, 0, 1, 0], [], []>} : vector<8x16xf32>, vector<8x16xf32>, vector<8x8xf32> -> vector<8x8xf32>
    %35 = vector.extract_strided_slice %34 {offsets = [1, 0], sizes = [7, 8], strides = [1, 1]} : vector<8x8xf32> to vector<7x8xf32>
    %cst_21 = arith.constant 0.000000e+00 : f32
    %36 = vector.broadcast %cst_21 : f32 to vector<1x8xf32>
    %37 = tpu.concatenate %35, %36 in 0 : vector<7x8xf32>, vector<1x8xf32> -> vector<8x8xf32>
    %cst_22 = arith.constant 0.000000e+00 : f32
    %38 = vector.broadcast %cst_22 : f32 to vector<8x1xf32>
    %39 = vector.extract_strided_slice %37 {offsets = [0, 0], sizes = [8, 7], strides = [1, 1]} : vector<8x8xf32> to vector<8x7xf32>
    %40 = tpu.concatenate %34, %38, %39 in 1 : vector<8x8xf32>, vector<8x1xf32>, vector<8x7xf32> -> vector<8x16xf32>
    %41 = tpu.iota {dimensions = array<i32: 0>} : vector<8x1xi32>
    %c7_i32 = arith.constant 7 : i32
    %42 = vector.broadcast %c7_i32 : i32 to vector<8x1xi32>
    %43 = arith.subi %42, %41 : vector<8x1xi32>
    %44 = vector.extract_strided_slice %40 {offsets = [0, 1], sizes = [8, 15], strides = [1, 1]} : vector<8x16xf32> to vector<8x15xf32>
    %45 = vector.extract_strided_slice %40 {offsets = [0, 0], sizes = [8, 1], strides = [1, 1]} : vector<8x16xf32> to vector<8x1xf32>
    %46 = tpu.concatenate %44, %45 in 1 : vector<8x15xf32>, vector<8x1xf32> -> vector<8x16xf32>
    %c1_i32 = arith.constant 1 : i32
    %47 = vector.broadcast %c1_i32 : i32 to vector<8x1xi32>
    %48 = arith.andi %43, %47 : vector<8x1xi32>
    %c0_i32 = arith.constant 0 : i32
    %49 = vector.broadcast %c0_i32 : i32 to vector<8x1xi32>
    %50 = arith.cmpi ne, %48, %49 : vector<8x1xi32>
    %51 = vector.shape_cast %50 : vector<8x1xi1> to vector<8x1xi1>
    %52 = vector.broadcast %51 : vector<8x1xi1> to vector<8x16xi1>
    %53 = arith.select %52, %46, %40 : vector<8x16xi1>, vector<8x16xf32>
    %54 = vector.extract_strided_slice %53 {offsets = [0, 2], sizes = [8, 14], strides = [1, 1]} : vector<8x16xf32> to vector<8x14xf32>
    %55 = vector.extract_strided_slice %53 {offsets = [0, 0], sizes = [8, 2], strides = [1, 1]} : vector<8x16xf32> to vector<8x2xf32>
    %56 = tpu.concatenate %54, %55 in 1 : vector<8x14xf32>, vector<8x2xf32> -> vector<8x16xf32>
    %c2_i32 = arith.constant 2 : i32
    %57 = vector.broadcast %c2_i32 : i32 to vector<8x1xi32>
    %58 = arith.andi %43, %57 : vector<8x1xi32>
    %c0_i32_23 = arith.constant 0 : i32
    %59 = vector.broadcast %c0_i32_23 : i32 to vector<8x1xi32>
    %60 = arith.cmpi ne, %58, %59 : vector<8x1xi32>
    %61 = vector.shape_cast %60 : vector<8x1xi1> to vector<8x1xi1>
    %62 = vector.broadcast %61 : vector<8x1xi1> to vector<8x16xi1>
    %63 = arith.select %62, %56, %53 : vector<8x16xi1>, vector<8x16xf32>
    %64 = vector.extract_strided_slice %63 {offsets = [0, 4], sizes = [8, 12], strides = [1, 1]} : vector<8x16xf32> to vector<8x12xf32>
    %65 = vector.extract_strided_slice %63 {offsets = [0, 0], sizes = [8, 4], strides = [1, 1]} : vector<8x16xf32> to vector<8x4xf32>
    %66 = tpu.concatenate %64, %65 in 1 : vector<8x12xf32>, vector<8x4xf32> -> vector<8x16xf32>
    %c4_i32 = arith.constant 4 : i32
    %67 = vector.broadcast %c4_i32 : i32 to vector<8x1xi32>
    %68 = arith.andi %43, %67 : vector<8x1xi32>
    %c0_i32_24 = arith.constant 0 : i32
    %69 = vector.broadcast %c0_i32_24 : i32 to vector<8x1xi32>
    %70 = arith.cmpi ne, %68, %69 : vector<8x1xi32>
    %71 = vector.shape_cast %70 : vector<8x1xi1> to vector<8x1xi1>
    %72 = vector.broadcast %71 : vector<8x1xi1> to vector<8x16xi1>
    %73 = arith.select %72, %66, %63 : vector<8x16xi1>, vector<8x16xf32>
    %74 = vector.extract_strided_slice %73 {offsets = [0, 0], sizes = [8, 8], strides = [1, 1]} : vector<8x16xf32> to vector<8x8xf32>
    %75 = arith.addf %31, %74 : vector<8x8xf32>
    %cst_25 = arith.constant dense<0xFF800000> : vector<8xf32>
    %76 = vector.multi_reduction <maximumf>, %75, %cst_25 [1] : vector<8x8xf32> to vector<8xf32>
    %77 = vector.shape_cast %76 : vector<8xf32> to vector<8x1xf32>
    %78 = vector.broadcast %77 : vector<8x1xf32> to vector<8x8xf32>
    %79 = arith.subf %75, %78 : vector<8x8xf32>
    %80 = math.exp %79 : vector<8x8xf32>
    %cst_26 = arith.constant dense<0.000000e+00> : vector<8xf32>
    %81 = vector.multi_reduction <add>, %80, %cst_26 [1] : vector<8x8xf32> to vector<8xf32>
    %82 = vector.shape_cast %81 : vector<8xf32> to vector<8x1xf32>
    %83 = tpu.reciprocal %82 : vector<8x1xf32> -> vector<8x1xf32>
    %84 = vector.broadcast %83 : vector<8x1xf32> to vector<8x8xf32>
    %85 = arith.mulf %80, %84 : vector<8x8xf32>
    %86 = vector.extract_strided_slice %18 {offsets = [0, 0], sizes = [8, 16], strides = [1, 1]} : vector<8x64xf32> to vector<8x16xf32>
    %cst_27 = arith.constant dense<0.000000e+00> : vector<8x16xf32>
    %87 = tpu.matmul %85, %86, %cst_27 {dimension_numbers = #tpu.dot_dimension_numbers<[1], [0], [0], [1], [0, 0, 1, 1], [], []>} : vector<8x8xf32>, vector<8x16xf32>, vector<8x16xf32> -> vector<8x16xf32>
    %c0_28 = arith.constant 0 : index
    %c0_29 = arith.constant 0 : index
    %88 = vector.load %arg10[%c0_28, %c0_29] : memref<8x64xf32, #tpu.memory_space<vmem>>, vector<8x16xf32>
    tpu.vector_store %arg10[%c0_28, %c0_29], %87 {strides = array<i32>} : memref<8x64xf32, #tpu.memory_space<vmem>>, vector<8x16xf32>,
    %89 = vector.extract_strided_slice %26 {offsets = [0, 16], sizes = [8, 16], strides = [1, 1]} : vector<8x64xf32> to vector<8x16xf32>
    %90 = vector.extract_strided_slice %17 {offsets = [0, 16], sizes = [8, 16], strides = [1, 1]} : vector<8x64xf32> to vector<8x16xf32>
    %cst_30 = arith.constant dense<0.000000e+00> : vector<8x8xf32>
    %91 = tpu.matmul %89, %90, %cst_30 {dimension_numbers = #tpu.dot_dimension_numbers<[1], [1], [0], [0], [0, 0, 1, 0], [], []>} : vector<8x16xf32>, vector<8x16xf32>, vector<8x8xf32> -> vector<8x8xf32>
    %92 = vector.extract_strided_slice %28 {offsets = [0, 16], sizes = [8, 16], strides = [1, 1]} : vector<8x64xf32> to vector<8x16xf32>
    %93 = vector.extract_strided_slice %22 {offsets = [0, 16], sizes = [8, 16], strides = [1, 1]} : vector<8x64xf32> to vector<8x16xf32>
    %cst_31 = arith.constant dense<0.000000e+00> : vector<8x8xf32>
    %94 = tpu.matmul %92, %93, %cst_31 {dimension_numbers = #tpu.dot_dimension_numbers<[1], [1], [0], [0], [0, 0, 1, 0], [], []>} : vector<8x16xf32>, vector<8x16xf32>, vector<8x8xf32> -> vector<8x8xf32>
    %95 = vector.extract_strided_slice %94 {offsets = [1, 0], sizes = [7, 8], strides = [1, 1]} : vector<8x8xf32> to vector<7x8xf32>
    %cst_32 = arith.constant 0.000000e+00 : f32
    %96 = vector.broadcast %cst_32 : f32 to vector<1x8xf32>
    %97 = tpu.concatenate %95, %96 in 0 : vector<7x8xf32>, vector<1x8xf32> -> vector<8x8xf32>
    %cst_33 = arith.constant 0.000000e+00 : f32
    %98 = vector.broadcast %cst_33 : f32 to vector<8x1xf32>
    %99 = vector.extract_strided_slice %97 {offsets = [0, 0], sizes = [8, 7], strides = [1, 1]} : vector<8x8xf32> to vector<8x7xf32>
    %100 = tpu.concatenate %94, %98, %99 in 1 : vector<8x8xf32>, vector<8x1xf32>, vector<8x7xf32> -> vector<8x16xf32>
    %101 = tpu.iota {dimensions = array<i32: 0>} : vector<8x1xi32>
    %c7_i32_34 = arith.constant 7 : i32
    %102 = vector.broadcast %c7_i32_34 : i32 to vector<8x1xi32>
    %103 = arith.subi %102, %101 : vector<8x1xi32>
    %104 = vector.extract_strided_slice %100 {offsets = [0, 1], sizes = [8, 15], strides = [1, 1]} : vector<8x16xf32> to vector<8x15xf32>
    %105 = vector.extract_strided_slice %100 {offsets = [0, 0], sizes = [8, 1], strides = [1, 1]} : vector<8x16xf32> to vector<8x1xf32>
    %106 = tpu.concatenate %104, %105 in 1 : vector<8x15xf32>, vector<8x1xf32> -> vector<8x16xf32>
    %c1_i32_35 = arith.constant 1 : i32
    %107 = vector.broadcast %c1_i32_35 : i32 to vector<8x1xi32>
    %108 = arith.andi %103, %107 : vector<8x1xi32>
    %c0_i32_36 = arith.constant 0 : i32
    %109 = vector.broadcast %c0_i32_36 : i32 to vector<8x1xi32>
    %110 = arith.cmpi ne, %108, %109 : vector<8x1xi32>
    %111 = vector.shape_cast %110 : vector<8x1xi1> to vector<8x1xi1>
    %112 = vector.broadcast %111 : vector<8x1xi1> to vector<8x16xi1>
    %113 = arith.select %112, %106, %100 : vector<8x16xi1>, vector<8x16xf32>
    %114 = vector.extract_strided_slice %113 {offsets = [0, 2], sizes = [8, 14], strides = [1, 1]} : vector<8x16xf32> to vector<8x14xf32>
    %115 = vector.extract_strided_slice %113 {offsets = [0, 0], sizes = [8, 2], strides = [1, 1]} : vector<8x16xf32> to vector<8x2xf32>
    %116 = tpu.concatenate %114, %115 in 1 : vector<8x14xf32>, vector<8x2xf32> -> vector<8x16xf32>
    %c2_i32_37 = arith.constant 2 : i32
    %117 = vector.broadcast %c2_i32_37 : i32 to vector<8x1xi32>
    %118 = arith.andi %103, %117 : vector<8x1xi32>
    %c0_i32_38 = arith.constant 0 : i32
    %119 = vector.broadcast %c0_i32_38 : i32 to vector<8x1xi32>
    %120 = arith.cmpi ne, %118, %119 : vector<8x1xi32>
    %121 = vector.shape_cast %120 : vector<8x1xi1> to vector<8x1xi1>
    %122 = vector.broadcast %121 : vector<8x1xi1> to vector<8x16xi1>
    %123 = arith.select %122, %116, %113 : vector<8x16xi1>, vector<8x16xf32>
    %124 = vector.extract_strided_slice %123 {offsets = [0, 4], sizes = [8, 12], strides = [1, 1]} : vector<8x16xf32> to vector<8x12xf32>
    %125 = vector.extract_strided_slice %123 {offsets = [0, 0], sizes = [8, 4], strides = [1, 1]} : vector<8x16xf32> to vector<8x4xf32>
    %126 = tpu.concatenate %124, %125 in 1 : vector<8x12xf32>, vector<8x4xf32> -> vector<8x16xf32>
    %c4_i32_39 = arith.constant 4 : i32
    %127 = vector.broadcast %c4_i32_39 : i32 to vector<8x1xi32>
    %128 = arith.andi %103, %127 : vector<8x1xi32>
    %c0_i32_40 = arith.constant 0 : i32
    %129 = vector.broadcast %c0_i32_40 : i32 to vector<8x1xi32>
    %130 = arith.cmpi ne, %128, %129 : vector<8x1xi32>
    %131 = vector.shape_cast %130 : vector<8x1xi1> to vector<8x1xi1>
    %132 = vector.broadcast %131 : vector<8x1xi1> to vector<8x16xi1>
    %133 = arith.select %132, %126, %123 : vector<8x16xi1>, vector<8x16xf32>
    %134 = vector.extract_strided_slice %133 {offsets = [0, 0], sizes = [8, 8], strides = [1, 1]} : vector<8x16xf32> to vector<8x8xf32>
    %135 = arith.addf %91, %134 : vector<8x8xf32>
    %cst_41 = arith.constant dense<0xFF800000> : vector<8xf32>
    %136 = vector.multi_reduction <maximumf>, %135, %cst_41 [1] : vector<8x8xf32> to vector<8xf32>
    %137 = vector.shape_cast %136 : vector<8xf32> to vector<8x1xf32>
    %138 = vector.broadcast %137 : vector<8x1xf32> to vector<8x8xf32>
    %139 = arith.subf %135, %138 : vector<8x8xf32>
    %140 = math.exp %139 : vector<8x8xf32>
    %cst_42 = arith.constant dense<0.000000e+00> : vector<8xf32>
    %141 = vector.multi_reduction <add>, %140, %cst_42 [1] : vector<8x8xf32> to vector<8xf32>
    %142 = vector.shape_cast %141 : vector<8xf32> to vector<8x1xf32>
    %143 = tpu.reciprocal %142 : vector<8x1xf32> -> vector<8x1xf32>
    %144 = vector.broadcast %143 : vector<8x1xf32> to vector<8x8xf32>
    %145 = arith.mulf %140, %144 : vector<8x8xf32>
    %146 = vector.extract_strided_slice %18 {offsets = [0, 16], sizes = [8, 16], strides = [1, 1]} : vector<8x64xf32> to vector<8x16xf32>
    %cst_43 = arith.constant dense<0.000000e+00> : vector<8x16xf32>
    %147 = tpu.matmul %145, %146, %cst_43 {dimension_numbers = #tpu.dot_dimension_numbers<[1], [0], [0], [1], [0, 0, 1, 1], [], []>} : vector<8x8xf32>, vector<8x16xf32>, vector<8x16xf32> -> vector<8x16xf32>
    %c0_44 = arith.constant 0 : index
    %c16 = arith.constant 16 : index
    %148 = vector.load %arg10[%c0_44, %c16] : memref<8x64xf32, #tpu.memory_space<vmem>>, vector<8x16xf32>
    tpu.vector_store %arg10[%c0_44, %c16], %147 {strides = array<i32>} : memref<8x64xf32, #tpu.memory_space<vmem>>, vector<8x16xf32>,
    %149 = vector.extract_strided_slice %26 {offsets = [0, 32], sizes = [8, 16], strides = [1, 1]} : vector<8x64xf32> to vector<8x16xf32>
    %150 = vector.extract_strided_slice %17 {offsets = [0, 32], sizes = [8, 16], strides = [1, 1]} : vector<8x64xf32> to vector<8x16xf32>
    %cst_45 = arith.constant dense<0.000000e+00> : vector<8x8xf32>
    %151 = tpu.matmul %149, %150, %cst_45 {dimension_numbers = #tpu.dot_dimension_numbers<[1], [1], [0], [0], [0, 0, 1, 0], [], []>} : vector<8x16xf32>, vector<8x16xf32>, vector<8x8xf32> -> vector<8x8xf32>
    %152 = vector.extract_strided_slice %28 {offsets = [0, 32], sizes = [8, 16], strides = [1, 1]} : vector<8x64xf32> to vector<8x16xf32>
    %153 = vector.extract_strided_slice %22 {offsets = [0, 32], sizes = [8, 16], strides = [1, 1]} : vector<8x64xf32> to vector<8x16xf32>
    %cst_46 = arith.constant dense<0.000000e+00> : vector<8x8xf32>
    %154 = tpu.matmul %152, %153, %cst_46 {dimension_numbers = #tpu.dot_dimension_numbers<[1], [1], [0], [0], [0, 0, 1, 0], [], []>} : vector<8x16xf32>, vector<8x16xf32>, vector<8x8xf32> -> vector<8x8xf32>
    %155 = vector.extract_strided_slice %154 {offsets = [1, 0], sizes = [7, 8], strides = [1, 1]} : vector<8x8xf32> to vector<7x8xf32>
    %cst_47 = arith.constant 0.000000e+00 : f32
    %156 = vector.broadcast %cst_47 : f32 to vector<1x8xf32>
    %157 = tpu.concatenate %155, %156 in 0 : vector<7x8xf32>, vector<1x8xf32> -> vector<8x8xf32>
    %cst_48 = arith.constant 0.000000e+00 : f32
    %158 = vector.broadcast %cst_48 : f32 to vector<8x1xf32>
    %159 = vector.extract_strided_slice %157 {offsets = [0, 0], sizes = [8, 7], strides = [1, 1]} : vector<8x8xf32> to vector<8x7xf32>
    %160 = tpu.concatenate %154, %158, %159 in 1 : vector<8x8xf32>, vector<8x1xf32>, vector<8x7xf32> -> vector<8x16xf32>
    %161 = tpu.iota {dimensions = array<i32: 0>} : vector<8x1xi32>
    %c7_i32_49 = arith.constant 7 : i32
    %162 = vector.broadcast %c7_i32_49 : i32 to vector<8x1xi32>
    %163 = arith.subi %162, %161 : vector<8x1xi32>
    %164 = vector.extract_strided_slice %160 {offsets = [0, 1], sizes = [8, 15], strides = [1, 1]} : vector<8x16xf32> to vector<8x15xf32>
    %165 = vector.extract_strided_slice %160 {offsets = [0, 0], sizes = [8, 1], strides = [1, 1]} : vector<8x16xf32> to vector<8x1xf32>
    %166 = tpu.concatenate %164, %165 in 1 : vector<8x15xf32>, vector<8x1xf32> -> vector<8x16xf32>
    %c1_i32_50 = arith.constant 1 : i32
    %167 = vector.broadcast %c1_i32_50 : i32 to vector<8x1xi32>
    %168 = arith.andi %163, %167 : vector<8x1xi32>
    %c0_i32_51 = arith.constant 0 : i32
    %169 = vector.broadcast %c0_i32_51 : i32 to vector<8x1xi32>
    %170 = arith.cmpi ne, %168, %169 : vector<8x1xi32>
    %171 = vector.shape_cast %170 : vector<8x1xi1> to vector<8x1xi1>
    %172 = vector.broadcast %171 : vector<8x1xi1> to vector<8x16xi1>
    %173 = arith.select %172, %166, %160 : vector<8x16xi1>, vector<8x16xf32>
    %174 = vector.extract_strided_slice %173 {offsets = [0, 2], sizes = [8, 14], strides = [1, 1]} : vector<8x16xf32> to vector<8x14xf32>
    %175 = vector.extract_strided_slice %173 {offsets = [0, 0], sizes = [8, 2], strides = [1, 1]} : vector<8x16xf32> to vector<8x2xf32>
    %176 = tpu.concatenate %174, %175 in 1 : vector<8x14xf32>, vector<8x2xf32> -> vector<8x16xf32>
    %c2_i32_52 = arith.constant 2 : i32
    %177 = vector.broadcast %c2_i32_52 : i32 to vector<8x1xi32>
    %178 = arith.andi %163, %177 : vector<8x1xi32>
    %c0_i32_53 = arith.constant 0 : i32
    %179 = vector.broadcast %c0_i32_53 : i32 to vector<8x1xi32>
    %180 = arith.cmpi ne, %178, %179 : vector<8x1xi32>
    %181 = vector.shape_cast %180 : vector<8x1xi1> to vector<8x1xi1>
    %182 = vector.broadcast %181 : vector<8x1xi1> to vector<8x16xi1>
    %183 = arith.select %182, %176, %173 : vector<8x16xi1>, vector<8x16xf32>
    %184 = vector.extract_strided_slice %183 {offsets = [0, 4], sizes = [8, 12], strides = [1, 1]} : vector<8x16xf32> to vector<8x12xf32>
    %185 = vector.extract_strided_slice %183 {offsets = [0, 0], sizes = [8, 4], strides = [1, 1]} : vector<8x16xf32> to vector<8x4xf32>
    %186 = tpu.concatenate %184, %185 in 1 : vector<8x12xf32>, vector<8x4xf32> -> vector<8x16xf32>
    %c4_i32_54 = arith.constant 4 : i32
    %187 = vector.broadcast %c4_i32_54 : i32 to vector<8x1xi32>
    %188 = arith.andi %163, %187 : vector<8x1xi32>
    %c0_i32_55 = arith.constant 0 : i32
    %189 = vector.broadcast %c0_i32_55 : i32 to vector<8x1xi32>
    %190 = arith.cmpi ne, %188, %189 : vector<8x1xi32>
    %191 = vector.shape_cast %190 : vector<8x1xi1> to vector<8x1xi1>
    %192 = vector.broadcast %191 : vector<8x1xi1> to vector<8x16xi1>
    %193 = arith.select %192, %186, %183 : vector<8x16xi1>, vector<8x16xf32>
    %194 = vector.extract_strided_slice %193 {offsets = [0, 0], sizes = [8, 8], strides = [1, 1]} : vector<8x16xf32> to vector<8x8xf32>
    %195 = arith.addf %151, %194 : vector<8x8xf32>
    %cst_56 = arith.constant dense<0xFF800000> : vector<8xf32>
    %196 = vector.multi_reduction <maximumf>, %195, %cst_56 [1] : vector<8x8xf32> to vector<8xf32>
    %197 = vector.shape_cast %196 : vector<8xf32> to vector<8x1xf32>
    %198 = vector.broadcast %197 : vector<8x1xf32> to vector<8x8xf32>
    %199 = arith.subf %195, %198 : vector<8x8xf32>
    %200 = math.exp %199 : vector<8x8xf32>
    %cst_57 = arith.constant dense<0.000000e+00> : vector<8xf32>
    %201 = vector.multi_reduction <add>, %200, %cst_57 [1] : vector<8x8xf32> to vector<8xf32>
    %202 = vector.shape_cast %201 : vector<8xf32> to vector<8x1xf32>
    %203 = tpu.reciprocal %202 : vector<8x1xf32> -> vector<8x1xf32>
    %204 = vector.broadcast %203 : vector<8x1xf32> to vector<8x8xf32>
    %205 = arith.mulf %200, %204 : vector<8x8xf32>
    %206 = vector.extract_strided_slice %18 {offsets = [0, 32], sizes = [8, 16], strides = [1, 1]} : vector<8x64xf32> to vector<8x16xf32>
    %cst_58 = arith.constant dense<0.000000e+00> : vector<8x16xf32>
    %207 = tpu.matmul %205, %206, %cst_58 {dimension_numbers = #tpu.dot_dimension_numbers<[1], [0], [0], [1], [0, 0, 1, 1], [], []>} : vector<8x8xf32>, vector<8x16xf32>, vector<8x16xf32> -> vector<8x16xf32>
    %c0_59 = arith.constant 0 : index
    %c32 = arith.constant 32 : index
    %208 = vector.load %arg10[%c0_59, %c32] : memref<8x64xf32, #tpu.memory_space<vmem>>, vector<8x16xf32>
    tpu.vector_store %arg10[%c0_59, %c32], %207 {strides = array<i32>} : memref<8x64xf32, #tpu.memory_space<vmem>>, vector<8x16xf32>,
    %209 = vector.extract_strided_slice %26 {offsets = [0, 48], sizes = [8, 16], strides = [1, 1]} : vector<8x64xf32> to vector<8x16xf32>
    %210 = vector.extract_strided_slice %17 {offsets = [0, 48], sizes = [8, 16], strides = [1, 1]} : vector<8x64xf32> to vector<8x16xf32>
    %cst_60 = arith.constant dense<0.000000e+00> : vector<8x8xf32>
    %211 = tpu.matmul %209, %210, %cst_60 {dimension_numbers = #tpu.dot_dimension_numbers<[1], [1], [0], [0], [0, 0, 1, 0], [], []>} : vector<8x16xf32>, vector<8x16xf32>, vector<8x8xf32> -> vector<8x8xf32>
    %212 = vector.extract_strided_slice %28 {offsets = [0, 48], sizes = [8, 16], strides = [1, 1]} : vector<8x64xf32> to vector<8x16xf32>
    %213 = vector.extract_strided_slice %22 {offsets = [0, 48], sizes = [8, 16], strides = [1, 1]} : vector<8x64xf32> to vector<8x16xf32>
    %cst_61 = arith.constant dense<0.000000e+00> : vector<8x8xf32>
    %214 = tpu.matmul %212, %213, %cst_61 {dimension_numbers = #tpu.dot_dimension_numbers<[1], [1], [0], [0], [0, 0, 1, 0], [], []>} : vector<8x16xf32>, vector<8x16xf32>, vector<8x8xf32> -> vector<8x8xf32>
    %215 = vector.extract_strided_slice %214 {offsets = [1, 0], sizes = [7, 8], strides = [1, 1]} : vector<8x8xf32> to vector<7x8xf32>
    %cst_62 = arith.constant 0.000000e+00 : f32
    %216 = vector.broadcast %cst_62 : f32 to vector<1x8xf32>
    %217 = tpu.concatenate %215, %216 in 0 : vector<7x8xf32>, vector<1x8xf32> -> vector<8x8xf32>
    %cst_63 = arith.constant 0.000000e+00 : f32
    %218 = vector.broadcast %cst_63 : f32 to vector<8x1xf32>
    %219 = vector.extract_strided_slice %217 {offsets = [0, 0], sizes = [8, 7], strides = [1, 1]} : vector<8x8xf32> to vector<8x7xf32>
    %220 = tpu.concatenate %214, %218, %219 in 1 : vector<8x8xf32>, vector<8x1xf32>, vector<8x7xf32> -> vector<8x16xf32>
    %221 = tpu.iota {dimensions = array<i32: 0>} : vector<8x1xi32>
    %c7_i32_64 = arith.constant 7 : i32
    %222 = vector.broadcast %c7_i32_64 : i32 to vector<8x1xi32>
    %223 = arith.subi %222, %221 : vector<8x1xi32>
    %224 = vector.extract_strided_slice %220 {offsets = [0, 1], sizes = [8, 15], strides = [1, 1]} : vector<8x16xf32> to vector<8x15xf32>
    %225 = vector.extract_strided_slice %220 {offsets = [0, 0], sizes = [8, 1], strides = [1, 1]} : vector<8x16xf32> to vector<8x1xf32>
    %226 = tpu.concatenate %224, %225 in 1 : vector<8x15xf32>, vector<8x1xf32> -> vector<8x16xf32>
    %c1_i32_65 = arith.constant 1 : i32
    %227 = vector.broadcast %c1_i32_65 : i32 to vector<8x1xi32>
    %228 = arith.andi %223, %227 : vector<8x1xi32>
    %c0_i32_66 = arith.constant 0 : i32
    %229 = vector.broadcast %c0_i32_66 : i32 to vector<8x1xi32>
    %230 = arith.cmpi ne, %228, %229 : vector<8x1xi32>
    %231 = vector.shape_cast %230 : vector<8x1xi1> to vector<8x1xi1>
    %232 = vector.broadcast %231 : vector<8x1xi1> to vector<8x16xi1>
    %233 = arith.select %232, %226, %220 : vector<8x16xi1>, vector<8x16xf32>
    %234 = vector.extract_strided_slice %233 {offsets = [0, 2], sizes = [8, 14], strides = [1, 1]} : vector<8x16xf32> to vector<8x14xf32>
    %235 = vector.extract_strided_slice %233 {offsets = [0, 0], sizes = [8, 2], strides = [1, 1]} : vector<8x16xf32> to vector<8x2xf32>
    %236 = tpu.concatenate %234, %235 in 1 : vector<8x14xf32>, vector<8x2xf32> -> vector<8x16xf32>
    %c2_i32_67 = arith.constant 2 : i32
    %237 = vector.broadcast %c2_i32_67 : i32 to vector<8x1xi32>
    %238 = arith.andi %223, %237 : vector<8x1xi32>
    %c0_i32_68 = arith.constant 0 : i32
    %239 = vector.broadcast %c0_i32_68 : i32 to vector<8x1xi32>
    %240 = arith.cmpi ne, %238, %239 : vector<8x1xi32>
    %241 = vector.shape_cast %240 : vector<8x1xi1> to vector<8x1xi1>
    %242 = vector.broadcast %241 : vector<8x1xi1> to vector<8x16xi1>
    %243 = arith.select %242, %236, %233 : vector<8x16xi1>, vector<8x16xf32>
    %244 = vector.extract_strided_slice %243 {offsets = [0, 4], sizes = [8, 12], strides = [1, 1]} : vector<8x16xf32> to vector<8x12xf32>
    %245 = vector.extract_strided_slice %243 {offsets = [0, 0], sizes = [8, 4], strides = [1, 1]} : vector<8x16xf32> to vector<8x4xf32>
    %246 = tpu.concatenate %244, %245 in 1 : vector<8x12xf32>, vector<8x4xf32> -> vector<8x16xf32>
    %c4_i32_69 = arith.constant 4 : i32
    %247 = vector.broadcast %c4_i32_69 : i32 to vector<8x1xi32>
    %248 = arith.andi %223, %247 : vector<8x1xi32>
    %c0_i32_70 = arith.constant 0 : i32
    %249 = vector.broadcast %c0_i32_70 : i32 to vector<8x1xi32>
    %250 = arith.cmpi ne, %248, %249 : vector<8x1xi32>
    %251 = vector.shape_cast %250 : vector<8x1xi1> to vector<8x1xi1>
    %252 = vector.broadcast %251 : vector<8x1xi1> to vector<8x16xi1>
    %253 = arith.select %252, %246, %243 : vector<8x16xi1>, vector<8x16xf32>
    %254 = vector.extract_strided_slice %253 {offsets = [0, 0], sizes = [8, 8], strides = [1, 1]} : vector<8x16xf32> to vector<8x8xf32>
    %255 = arith.addf %211, %254 : vector<8x8xf32>
    %cst_71 = arith.constant dense<0xFF800000> : vector<8xf32>
    %256 = vector.multi_reduction <maximumf>, %255, %cst_71 [1] : vector<8x8xf32> to vector<8xf32>
    %257 = vector.shape_cast %256 : vector<8xf32> to vector<8x1xf32>
    %258 = vector.broadcast %257 : vector<8x1xf32> to vector<8x8xf32>
    %259 = arith.subf %255, %258 : vector<8x8xf32>
    %260 = math.exp %259 : vector<8x8xf32>
    %cst_72 = arith.constant dense<0.000000e+00> : vector<8xf32>
    %261 = vector.multi_reduction <add>, %260, %cst_72 [1] : vector<8x8xf32> to vector<8xf32>
    %262 = vector.shape_cast %261 : vector<8xf32> to vector<8x1xf32>
    %263 = tpu.reciprocal %262 : vector<8x1xf32> -> vector<8x1xf32>
    %264 = vector.broadcast %263 : vector<8x1xf32> to vector<8x8xf32>
    %265 = arith.mulf %260, %264 : vector<8x8xf32>
    %266 = vector.extract_strided_slice %18 {offsets = [0, 48], sizes = [8, 16], strides = [1, 1]} : vector<8x64xf32> to vector<8x16xf32>
    %cst_73 = arith.constant dense<0.000000e+00> : vector<8x16xf32>
    %267 = tpu.matmul %265, %266, %cst_73 {dimension_numbers = #tpu.dot_dimension_numbers<[1], [0], [0], [1], [0, 0, 1, 1], [], []>} : vector<8x8xf32>, vector<8x16xf32>, vector<8x16xf32> -> vector<8x16xf32>
    %c0_74 = arith.constant 0 : index
    %c48 = arith.constant 48 : index
    %268 = vector.load %arg10[%c0_74, %c48] : memref<8x64xf32, #tpu.memory_space<vmem>>, vector<8x16xf32>
    tpu.vector_store %arg10[%c0_74, %c48], %267 {strides = array<i32>} : memref<8x64xf32, #tpu.memory_space<vmem>>, vector<8x16xf32>,
    %c0_75 = arith.constant 0 : index
    %c0_76 = arith.constant 0 : index
    %269 = vector.load %arg10[%c0_75, %c0_76] : memref<8x64xf32, #tpu.memory_space<vmem>>, vector<8x64xf32>
    %c0_77 = arith.constant 0 : index
    %c0_78 = arith.constant 0 : index
    %270 = vector.load %arg7[%c0_77, %c0_78] : memref<64x64xf32, #tpu.memory_space<vmem>>, vector<64x64xf32>
    %cst_79 = arith.constant dense<0.000000e+00> : vector<8x64xf32>
    %271 = tpu.matmul %269, %270, %cst_79 {dimension_numbers = #tpu.dot_dimension_numbers<[1], [0], [0], [1], [0, 0, 1, 1], [], []>} : vector<8x64xf32>, vector<64x64xf32>, vector<8x64xf32> -> vector<8x64xf32>
    %272 = vector.broadcast %4 : vector<1x64xf32> to vector<8x64xf32>
    %273 = arith.addf %271, %272 : vector<8x64xf32>
    %c0_80 = arith.constant 0 : index
    %c0_81 = arith.constant 0 : index
    %c0_82 = arith.constant 0 : index
    %274 = vector.load %arg9[%c0_80, %c0_81, %c0_82] : memref<1x8x64xf32, #tpu.memory_space<vmem>>, vector<1x8x64xf32>
    %275 = vector.shape_cast %274 : vector<1x8x64xf32> to vector<8x64xf32>
    %276 = vector.shape_cast %273 : vector<8x64xf32> to vector<1x8x64xf32>
    tpu.vector_store %arg9[%c0_80, %c0_81, %c0_82], %276 {strides = array<i32>} : memref<1x8x64xf32, #tpu.memory_space<vmem>>, vector<1x8x64xf32>,
    return
  }
  func.func @transform_0(%arg0: i32) -> (i32, i32, i32) {
    %c0_i32 = arith.constant 0 : i32
    %c0_i32_0 = arith.constant 0 : i32
    %c0_i32_1 = arith.constant 0 : i32
    return %arg0, %c0_i32, %c0_i32_0 : i32, i32, i32
  }
  func.func @transform_1(%arg0: i32) -> (i32, i32, i32) {
    %c0_i32 = arith.constant 0 : i32
    %c0_i32_0 = arith.constant 0 : i32
    %c0_i32_1 = arith.constant 0 : i32
    return %arg0, %c0_i32, %c0_i32_0 : i32, i32, i32
  }
  func.func @transform_2(%arg0: i32) -> (i32, i32, i32) {
    %c0_i32 = arith.constant 0 : i32
    %c0_i32_0 = arith.constant 0 : i32
    %c0_i32_1 = arith.constant 0 : i32
    return %arg0, %c0_i32, %c0_i32_0 : i32, i32, i32
  }
  func.func @transform_3(%arg0: i32) -> (i32, i32, i32) {
    %c0_i32 = arith.constant 0 : i32
    %c0_i32_0 = arith.constant 0 : i32
    %c0_i32_1 = arith.constant 0 : i32
    return %arg0, %c0_i32, %c0_i32_0 : i32, i32, i32
  }
  func.func @transform_4(%arg0: i32) -> (i32, i32) {
    %c0_i32 = arith.constant 0 : i32
    %c0_i32_0 = arith.constant 0 : i32
    %c0_i32_1 = arith.constant 0 : i32
    return %c0_i32, %c0_i32_0 : i32, i32
  }
  func.func @transform_5(%arg0: i32) -> (i32, i32) {
    %c0_i32 = arith.constant 0 : i32
    %c0_i32_0 = arith.constant 0 : i32
    %c0_i32_1 = arith.constant 0 : i32
    return %c0_i32, %c0_i32_0 : i32, i32
  }
  func.func @transform_6(%arg0: i32) -> (i32, i32) {
    %c0_i32 = arith.constant 0 : i32
    %c0_i32_0 = arith.constant 0 : i32
    %c0_i32_1 = arith.constant 0 : i32
    return %c0_i32, %c0_i32_0 : i32, i32
  }
  func.func @transform_7(%arg0: i32) -> (i32, i32) {
    %c0_i32 = arith.constant 0 : i32
    %c0_i32_0 = arith.constant 0 : i32
    %c0_i32_1 = arith.constant 0 : i32
    return %c0_i32, %c0_i32_0 : i32, i32
  }
  func.func @transform_8(%arg0: i32) -> (i32, i32, i32) {
    %c0_i32 = arith.constant 0 : i32
    %c0_i32_0 = arith.constant 0 : i32
    %c0_i32_1 = arith.constant 0 : i32
    return %arg0, %c0_i32, %c0_i32_0 : i32, i32, i32
  }
}

module attributes {stable_mosaic.version = 11 : i64} {
  func.func @fused_rel_mha_kernel(%arg0: i32, %arg1: memref<1x8x64xf32, #tpu.memory_space<vmem>>, %arg2: memref<1x8x64xf32, #tpu.memory_space<vmem>>, %arg3: memref<1x8x64xf32, #tpu.memory_space<vmem>>, %arg4: memref<1x8x64xf32, #tpu.memory_space<vmem>>, %arg5: memref<64x64xf32, #tpu.memory_space<vmem>>, %arg6: memref<64x64xf32, #tpu.memory_space<vmem>>, %arg7: memref<64x64xf32, #tpu.memory_space<vmem>>, %arg8: memref<8x64xf32, #tpu.memory_space<vmem>>, %arg9: memref<1x8x64xf32, #tpu.memory_space<vmem>>, %arg10: memref<8x64xf32, #tpu.memory_space<vmem>>) attributes {dimension_semantics = [#tpu.dimension_semantics<parallel>], iteration_bounds = array<i64: 2>, scalar_prefetch = 0 : i64, scratch_operands = 1 : i64, tpu.core_type = #tpu.core_type<tc>, window_params = [{transform_indices = @transform_0, window_bounds = array<i64: 1, 8, 64>}, {transform_indices = @transform_1, window_bounds = array<i64: 1, 8, 64>}, {transform_indices = @transform_2, window_bounds = array<i64: 1, 8, 64>}, {transform_indices = @transform_3, window_bounds = array<i64: 1, 8, 64>}, {pipeline_mode = #tpu.pipeline_mode<synchronous>, transform_indices = @transform_4, window_bounds = array<i64: 64, 64>}, {pipeline_mode = #tpu.pipeline_mode<synchronous>, transform_indices = @transform_5, window_bounds = array<i64: 64, 64>}, {pipeline_mode = #tpu.pipeline_mode<synchronous>, transform_indices = @transform_6, window_bounds = array<i64: 64, 64>}, {pipeline_mode = #tpu.pipeline_mode<synchronous>, transform_indices = @transform_7, window_bounds = array<i64: 8, 64>}, {transform_indices = @transform_8, window_bounds = array<i64: 1, 8, 64>}]} {
    %c0 = arith.constant 0 : index
    %c0_0 = arith.constant 0 : index
    %0 = vector.load %arg8[%c0, %c0_0] : memref<8x64xf32, #tpu.memory_space<vmem>>, vector<8x64xf32>
    %1 = vector.extract_strided_slice %0 {offsets = [0, 0], sizes = [1, 64], strides = [1, 1]} : vector<8x64xf32> to vector<1x64xf32>
    %2 = vector.extract_strided_slice %0 {offsets = [1, 0], sizes = [1, 64], strides = [1, 1]} : vector<8x64xf32> to vector<1x64xf32>
    %3 = vector.extract_strided_slice %0 {offsets = [2, 0], sizes = [1, 64], strides = [1, 1]} : vector<8x64xf32> to vector<1x64xf32>
    %4 = vector.extract_strided_slice %0 {offsets = [3, 0], sizes = [1, 64], strides = [1, 1]} : vector<8x64xf32> to vector<1x64xf32>
    %c0_1 = arith.constant 0 : index
    %c0_2 = arith.constant 0 : index
    %c0_3 = arith.constant 0 : index
    %5 = vector.load %arg1[%c0_1, %c0_2, %c0_3] : memref<1x8x64xf32, #tpu.memory_space<vmem>>, vector<1x8x64xf32>
    %6 = vector.shape_cast %5 : vector<1x8x64xf32> to vector<8x64xf32>
    %c0_4 = arith.constant 0 : index
    %c0_5 = arith.constant 0 : index
    %c0_6 = arith.constant 0 : index
    %7 = vector.load %arg2[%c0_4, %c0_5, %c0_6] : memref<1x8x64xf32, #tpu.memory_space<vmem>>, vector<1x8x64xf32>
    %8 = vector.shape_cast %7 : vector<1x8x64xf32> to vector<8x64xf32>
    %c0_7 = arith.constant 0 : index
    %c0_8 = arith.constant 0 : index
    %c0_9 = arith.constant 0 : index
    %9 = vector.load %arg3[%c0_7, %c0_8, %c0_9] : memref<1x8x64xf32, #tpu.memory_space<vmem>>, vector<1x8x64xf32>
    %10 = vector.shape_cast %9 : vector<1x8x64xf32> to vector<8x64xf32>
    %11 = tpu.concatenate %6, %8, %10 in 0 : vector<8x64xf32>, vector<8x64xf32>, vector<8x64xf32> -> vector<24x64xf32>
    %c0_10 = arith.constant 0 : index
    %c0_11 = arith.constant 0 : index
    %12 = vector.load %arg5[%c0_10, %c0_11] : memref<64x64xf32, #tpu.memory_space<vmem>>, vector<64x64xf32>
    %cst = arith.constant dense<0.000000e+00> : vector<24x64xf32>
    %13 = tpu.matmul %11, %12, %cst {dimension_numbers = #tpu.dot_dimension_numbers<[1], [0], [0], [1], [0, 0, 1, 1], [], []>} : vector<24x64xf32>, vector<64x64xf32>, vector<24x64xf32> -> vector<24x64xf32>
    %14 = vector.broadcast %1 : vector<1x64xf32> to vector<24x64xf32>
    %15 = arith.addf %13, %14 : vector<24x64xf32>
    %16 = vector.extract_strided_slice %15 {offsets = [0, 0], sizes = [8, 64], strides = [1, 1]} : vector<24x64xf32> to vector<8x64xf32>
    %17 = vector.extract_strided_slice %15 {offsets = [8, 0], sizes = [8, 64], strides = [1, 1]} : vector<24x64xf32> to vector<8x64xf32>
    %18 = vector.extract_strided_slice %15 {offsets = [16, 0], sizes = [8, 64], strides = [1, 1]} : vector<24x64xf32> to vector<8x64xf32>
    %c0_12 = arith.constant 0 : index
    %c0_13 = arith.constant 0 : index
    %c0_14 = arith.constant 0 : index
    %19 = vector.load %arg4[%c0_12, %c0_13, %c0_14] : memref<1x8x64xf32, #tpu.memory_space<vmem>>, vector<1x8x64xf32>
    %20 = vector.shape_cast %19 : vector<1x8x64xf32> to vector<8x64xf32>
    %c0_15 = arith.constant 0 : index
    %c0_16 = arith.constant 0 : index
    %21 = vector.load %arg6[%c0_15, %c0_16] : memref<64x64xf32, #tpu.memory_space<vmem>>, vector<64x64xf32>
    %cst_17 = arith.constant dense<0.000000e+00> : vector<8x64xf32>
    %22 = tpu.matmul %20, %21, %cst_17 {dimension_numbers = #tpu.dot_dimension_numbers<[1], [0], [0], [1], [0, 0, 1, 1], [], []>} : vector<8x64xf32>, vector<64x64xf32>, vector<8x64xf32> -> vector<8x64xf32>
    %cst_18 = arith.constant 1.250000e-01 : f32
    %23 = vector.broadcast %cst_18 : f32 to vector<8x64xf32>
    %24 = arith.mulf %16, %23 : vector<8x64xf32>
    %25 = vector.broadcast %2 : vector<1x64xf32> to vector<8x64xf32>
    %26 = arith.addf %24, %25 : vector<8x64xf32>
    %27 = vector.broadcast %3 : vector<1x64xf32> to vector<8x64xf32>
    %28 = arith.addf %24, %27 : vector<8x64xf32>
    %29 = vector.extract_strided_slice %26 {offsets = [0, 0], sizes = [8, 16], strides = [1, 1]} : vector<8x64xf32> to vector<8x16xf32>
    %30 = vector.extract_strided_slice %17 {offsets = [0, 0], sizes = [8, 16], strides = [1, 1]} : vector<8x64xf32> to vector<8x16xf32>
    %cst_19 = arith.constant dense<0.000000e+00> : vector<8x8xf32>
    %31 = tpu.matmul %29, %30, %cst_19 {dimension_numbers = #tpu.dot_dimension_numbers<[1], [1], [0], [0], [0, 0, 1, 0], [], []>} : vector<8x16xf32>, vector<8x16xf32>, vector<8x8xf32> -> vector<8x8xf32>
    %32 = vector.extract_strided_slice %28 {offsets = [0, 0], sizes = [8, 16], strides = [1, 1]} : vector<8x64xf32> to vector<8x16xf32>
    %33 = vector.extract_strided_slice %22 {offsets = [0, 0], sizes = [8, 16], strides = [1, 1]} : vector<8x64xf32> to vector<8x16xf32>
    %cst_20 = arith.constant dense<0.000000e+00> : vector<8x8xf32>
    %34 = tpu.matmul %32, %33, %cst_20 {dimension_numbers = #tpu.dot_dimension_numbers<[1], [1], [0], [0], [0, 0, 1, 0], [], []>} : vector<8x16xf32>, vector<8x16xf32>, vector<8x8xf32> -> vector<8x8xf32>
    %35 = vector.extract_strided_slice %34 {offsets = [1, 0], sizes = [7, 8], strides = [1, 1]} : vector<8x8xf32> to vector<7x8xf32>
    %cst_21 = arith.constant 0.000000e+00 : f32
    %36 = vector.broadcast %cst_21 : f32 to vector<1x8xf32>
    %37 = tpu.concatenate %35, %36 in 0 : vector<7x8xf32>, vector<1x8xf32> -> vector<8x8xf32>
    %cst_22 = arith.constant 0.000000e+00 : f32
    %38 = vector.broadcast %cst_22 : f32 to vector<8x1xf32>
    %39 = vector.extract_strided_slice %37 {offsets = [0, 0], sizes = [8, 7], strides = [1, 1]} : vector<8x8xf32> to vector<8x7xf32>
    %40 = tpu.concatenate %34, %38, %39 in 1 : vector<8x8xf32>, vector<8x1xf32>, vector<8x7xf32> -> vector<8x16xf32>
    %41 = tpu.iota {dimensions = array<i32: 0>} : vector<8x1xi32>
    %c7_i32 = arith.constant 7 : i32
    %42 = vector.broadcast %c7_i32 : i32 to vector<8x1xi32>
    %43 = arith.subi %42, %41 : vector<8x1xi32>
    %44 = vector.extract_strided_slice %40 {offsets = [0, 1], sizes = [8, 15], strides = [1, 1]} : vector<8x16xf32> to vector<8x15xf32>
    %45 = vector.extract_strided_slice %40 {offsets = [0, 0], sizes = [8, 1], strides = [1, 1]} : vector<8x16xf32> to vector<8x1xf32>
    %46 = tpu.concatenate %44, %45 in 1 : vector<8x15xf32>, vector<8x1xf32> -> vector<8x16xf32>
    %c1_i32 = arith.constant 1 : i32
    %47 = vector.broadcast %c1_i32 : i32 to vector<8x1xi32>
    %48 = arith.andi %43, %47 : vector<8x1xi32>
    %c0_i32 = arith.constant 0 : i32
    %49 = vector.broadcast %c0_i32 : i32 to vector<8x1xi32>
    %50 = arith.cmpi ne, %48, %49 : vector<8x1xi32>
    %51 = vector.shape_cast %50 : vector<8x1xi1> to vector<8x1xi1>
    %52 = vector.broadcast %51 : vector<8x1xi1> to vector<8x16xi1>
    %53 = arith.select %52, %46, %40 : vector<8x16xi1>, vector<8x16xf32>
    %54 = vector.extract_strided_slice %53 {offsets = [0, 2], sizes = [8, 14], strides = [1, 1]} : vector<8x16xf32> to vector<8x14xf32>
    %55 = vector.extract_strided_slice %53 {offsets = [0, 0], sizes = [8, 2], strides = [1, 1]} : vector<8x16xf32> to vector<8x2xf32>
    %56 = tpu.concatenate %54, %55 in 1 : vector<8x14xf32>, vector<8x2xf32> -> vector<8x16xf32>
    %c2_i32 = arith.constant 2 : i32
    %57 = vector.broadcast %c2_i32 : i32 to vector<8x1xi32>
    %58 = arith.andi %43, %57 : vector<8x1xi32>
    %c0_i32_23 = arith.constant 0 : i32
    %59 = vector.broadcast %c0_i32_23 : i32 to vector<8x1xi32>
    %60 = arith.cmpi ne, %58, %59 : vector<8x1xi32>
    %61 = vector.shape_cast %60 : vector<8x1xi1> to vector<8x1xi1>
    %62 = vector.broadcast %61 : vector<8x1xi1> to vector<8x16xi1>
    %63 = arith.select %62, %56, %53 : vector<8x16xi1>, vector<8x16xf32>
    %64 = vector.extract_strided_slice %63 {offsets = [0, 4], sizes = [8, 12], strides = [1, 1]} : vector<8x16xf32> to vector<8x12xf32>
    %65 = vector.extract_strided_slice %63 {offsets = [0, 0], sizes = [8, 4], strides = [1, 1]} : vector<8x16xf32> to vector<8x4xf32>
    %66 = tpu.concatenate %64, %65 in 1 : vector<8x12xf32>, vector<8x4xf32> -> vector<8x16xf32>
    %c4_i32 = arith.constant 4 : i32
    %67 = vector.broadcast %c4_i32 : i32 to vector<8x1xi32>
    %68 = arith.andi %43, %67 : vector<8x1xi32>
    %c0_i32_24 = arith.constant 0 : i32
    %69 = vector.broadcast %c0_i32_24 : i32 to vector<8x1xi32>
    %70 = arith.cmpi ne, %68, %69 : vector<8x1xi32>
    %71 = vector.shape_cast %70 : vector<8x1xi1> to vector<8x1xi1>
    %72 = vector.broadcast %71 : vector<8x1xi1> to vector<8x16xi1>
    %73 = arith.select %72, %66, %63 : vector<8x16xi1>, vector<8x16xf32>
    %74 = vector.extract_strided_slice %73 {offsets = [0, 0], sizes = [8, 8], strides = [1, 1]} : vector<8x16xf32> to vector<8x8xf32>
    %75 = arith.addf %31, %74 : vector<8x8xf32>
    %cst_25 = arith.constant dense<0xFF800000> : vector<8xf32>
    %76 = vector.multi_reduction <maximumf>, %75, %cst_25 [1] : vector<8x8xf32> to vector<8xf32>
    %77 = vector.shape_cast %76 : vector<8xf32> to vector<8x1xf32>
    %78 = vector.broadcast %77 : vector<8x1xf32> to vector<8x8xf32>
    %79 = arith.subf %75, %78 : vector<8x8xf32>
    %80 = math.exp %79 : vector<8x8xf32>
    %cst_26 = arith.constant dense<0.000000e+00> : vector<8xf32>
    %81 = vector.multi_reduction <add>, %80, %cst_26 [1] : vector<8x8xf32> to vector<8xf32>
    %82 = vector.shape_cast %81 : vector<8xf32> to vector<8x1xf32>
    %83 = tpu.reciprocal %82 : vector<8x1xf32> -> vector<8x1xf32>
    %84 = vector.broadcast %83 : vector<8x1xf32> to vector<8x8xf32>
    %85 = arith.mulf %80, %84 : vector<8x8xf32>
    %86 = vector.extract_strided_slice %18 {offsets = [0, 0], sizes = [8, 16], strides = [1, 1]} : vector<8x64xf32> to vector<8x16xf32>
    %cst_27 = arith.constant dense<0.000000e+00> : vector<8x16xf32>
    %87 = tpu.matmul %85, %86, %cst_27 {dimension_numbers = #tpu.dot_dimension_numbers<[1], [0], [0], [1], [0, 0, 1, 1], [], []>} : vector<8x8xf32>, vector<8x16xf32>, vector<8x16xf32> -> vector<8x16xf32>
    %c0_28 = arith.constant 0 : index
    %c0_29 = arith.constant 0 : index
    %88 = vector.load %arg10[%c0_28, %c0_29] : memref<8x64xf32, #tpu.memory_space<vmem>>, vector<8x16xf32>
    tpu.vector_store %arg10[%c0_28, %c0_29], %87 {strides = array<i32>} : memref<8x64xf32, #tpu.memory_space<vmem>>, vector<8x16xf32>,
    %89 = vector.extract_strided_slice %26 {offsets = [0, 16], sizes = [8, 16], strides = [1, 1]} : vector<8x64xf32> to vector<8x16xf32>
    %90 = vector.extract_strided_slice %17 {offsets = [0, 16], sizes = [8, 16], strides = [1, 1]} : vector<8x64xf32> to vector<8x16xf32>
    %cst_30 = arith.constant dense<0.000000e+00> : vector<8x8xf32>
    %91 = tpu.matmul %89, %90, %cst_30 {dimension_numbers = #tpu.dot_dimension_numbers<[1], [1], [0], [0], [0, 0, 1, 0], [], []>} : vector<8x16xf32>, vector<8x16xf32>, vector<8x8xf32> -> vector<8x8xf32>
    %92 = vector.extract_strided_slice %28 {offsets = [0, 16], sizes = [8, 16], strides = [1, 1]} : vector<8x64xf32> to vector<8x16xf32>
    %93 = vector.extract_strided_slice %22 {offsets = [0, 16], sizes = [8, 16], strides = [1, 1]} : vector<8x64xf32> to vector<8x16xf32>
    %cst_31 = arith.constant dense<0.000000e+00> : vector<8x8xf32>
    %94 = tpu.matmul %92, %93, %cst_31 {dimension_numbers = #tpu.dot_dimension_numbers<[1], [1], [0], [0], [0, 0, 1, 0], [], []>} : vector<8x16xf32>, vector<8x16xf32>, vector<8x8xf32> -> vector<8x8xf32>
    %95 = vector.extract_strided_slice %94 {offsets = [1, 0], sizes = [7, 8], strides = [1, 1]} : vector<8x8xf32> to vector<7x8xf32>
    %cst_32 = arith.constant 0.000000e+00 : f32
    %96 = vector.broadcast %cst_32 : f32 to vector<1x8xf32>
    %97 = tpu.concatenate %95, %96 in 0 : vector<7x8xf32>, vector<1x8xf32> -> vector<8x8xf32>
    %cst_33 = arith.constant 0.000000e+00 : f32
    %98 = vector.broadcast %cst_33 : f32 to vector<8x1xf32>
    %99 = vector.extract_strided_slice %97 {offsets = [0, 0], sizes = [8, 7], strides = [1, 1]} : vector<8x8xf32> to vector<8x7xf32>
    %100 = tpu.concatenate %94, %98, %99 in 1 : vector<8x8xf32>, vector<8x1xf32>, vector<8x7xf32> -> vector<8x16xf32>
    %101 = tpu.iota {dimensions = array<i32: 0>} : vector<8x1xi32>
    %c7_i32_34 = arith.constant 7 : i32
    %102 = vector.broadcast %c7_i32_34 : i32 to vector<8x1xi32>
    %103 = arith.subi %102, %101 : vector<8x1xi32>
    %104 = vector.extract_strided_slice %100 {offsets = [0, 1], sizes = [8, 15], strides = [1, 1]} : vector<8x16xf32> to vector<8x15xf32>
    %105 = vector.extract_strided_slice %100 {offsets = [0, 0], sizes = [8, 1], strides = [1, 1]} : vector<8x16xf32> to vector<8x1xf32>
    %106 = tpu.concatenate %104, %105 in 1 : vector<8x15xf32>, vector<8x1xf32> -> vector<8x16xf32>
    %c1_i32_35 = arith.constant 1 : i32
    %107 = vector.broadcast %c1_i32_35 : i32 to vector<8x1xi32>
    %108 = arith.andi %103, %107 : vector<8x1xi32>
    %c0_i32_36 = arith.constant 0 : i32
    %109 = vector.broadcast %c0_i32_36 : i32 to vector<8x1xi32>
    %110 = arith.cmpi ne, %108, %109 : vector<8x1xi32>
    %111 = vector.shape_cast %110 : vector<8x1xi1> to vector<8x1xi1>
    %112 = vector.broadcast %111 : vector<8x1xi1> to vector<8x16xi1>
    %113 = arith.select %112, %106, %100 : vector<8x16xi1>, vector<8x16xf32>
    %114 = vector.extract_strided_slice %113 {offsets = [0, 2], sizes = [8, 14], strides = [1, 1]} : vector<8x16xf32> to vector<8x14xf32>
    %115 = vector.extract_strided_slice %113 {offsets = [0, 0], sizes = [8, 2], strides = [1, 1]} : vector<8x16xf32> to vector<8x2xf32>
    %116 = tpu.concatenate %114, %115 in 1 : vector<8x14xf32>, vector<8x2xf32> -> vector<8x16xf32>
    %c2_i32_37 = arith.constant 2 : i32
    %117 = vector.broadcast %c2_i32_37 : i32 to vector<8x1xi32>
    %118 = arith.andi %103, %117 : vector<8x1xi32>
    %c0_i32_38 = arith.constant 0 : i32
    %119 = vector.broadcast %c0_i32_38 : i32 to vector<8x1xi32>
    %120 = arith.cmpi ne, %118, %119 : vector<8x1xi32>
    %121 = vector.shape_cast %120 : vector<8x1xi1> to vector<8x1xi1>
    %122 = vector.broadcast %121 : vector<8x1xi1> to vector<8x16xi1>
    %123 = arith.select %122, %116, %113 : vector<8x16xi1>, vector<8x16xf32>
    %124 = vector.extract_strided_slice %123 {offsets = [0, 4], sizes = [8, 12], strides = [1, 1]} : vector<8x16xf32> to vector<8x12xf32>
    %125 = vector.extract_strided_slice %123 {offsets = [0, 0], sizes = [8, 4], strides = [1, 1]} : vector<8x16xf32> to vector<8x4xf32>
    %126 = tpu.concatenate %124, %125 in 1 : vector<8x12xf32>, vector<8x4xf32> -> vector<8x16xf32>
    %c4_i32_39 = arith.constant 4 : i32
    %127 = vector.broadcast %c4_i32_39 : i32 to vector<8x1xi32>
    %128 = arith.andi %103, %127 : vector<8x1xi32>
    %c0_i32_40 = arith.constant 0 : i32
    %129 = vector.broadcast %c0_i32_40 : i32 to vector<8x1xi32>
    %130 = arith.cmpi ne, %128, %129 : vector<8x1xi32>
    %131 = vector.shape_cast %130 : vector<8x1xi1> to vector<8x1xi1>
    %132 = vector.broadcast %131 : vector<8x1xi1> to vector<8x16xi1>
    %133 = arith.select %132, %126, %123 : vector<8x16xi1>, vector<8x16xf32>
    %134 = vector.extract_strided_slice %133 {offsets = [0, 0], sizes = [8, 8], strides = [1, 1]} : vector<8x16xf32> to vector<8x8xf32>
    %135 = arith.addf %91, %134 : vector<8x8xf32>
    %cst_41 = arith.constant dense<0xFF800000> : vector<8xf32>
    %136 = vector.multi_reduction <maximumf>, %135, %cst_41 [1] : vector<8x8xf32> to vector<8xf32>
    %137 = vector.shape_cast %136 : vector<8xf32> to vector<8x1xf32>
    %138 = vector.broadcast %137 : vector<8x1xf32> to vector<8x8xf32>
    %139 = arith.subf %135, %138 : vector<8x8xf32>
    %140 = math.exp %139 : vector<8x8xf32>
    %cst_42 = arith.constant dense<0.000000e+00> : vector<8xf32>
    %141 = vector.multi_reduction <add>, %140, %cst_42 [1] : vector<8x8xf32> to vector<8xf32>
    %142 = vector.shape_cast %141 : vector<8xf32> to vector<8x1xf32>
    %143 = tpu.reciprocal %142 : vector<8x1xf32> -> vector<8x1xf32>
    %144 = vector.broadcast %143 : vector<8x1xf32> to vector<8x8xf32>
    %145 = arith.mulf %140, %144 : vector<8x8xf32>
    %146 = vector.extract_strided_slice %18 {offsets = [0, 16], sizes = [8, 16], strides = [1, 1]} : vector<8x64xf32> to vector<8x16xf32>
    %cst_43 = arith.constant dense<0.000000e+00> : vector<8x16xf32>
    %147 = tpu.matmul %145, %146, %cst_43 {dimension_numbers = #tpu.dot_dimension_numbers<[1], [0], [0], [1], [0, 0, 1, 1], [], []>} : vector<8x8xf32>, vector<8x16xf32>, vector<8x16xf32> -> vector<8x16xf32>
    %c0_44 = arith.constant 0 : index
    %c16 = arith.constant 16 : index
    %148 = vector.load %arg10[%c0_44, %c16] : memref<8x64xf32, #tpu.memory_space<vmem>>, vector<8x16xf32>
    tpu.vector_store %arg10[%c0_44, %c16], %147 {strides = array<i32>} : memref<8x64xf32, #tpu.memory_space<vmem>>, vector<8x16xf32>,
    %149 = vector.extract_strided_slice %26 {offsets = [0, 32], sizes = [8, 16], strides = [1, 1]} : vector<8x64xf32> to vector<8x16xf32>
    %150 = vector.extract_strided_slice %17 {offsets = [0, 32], sizes = [8, 16], strides = [1, 1]} : vector<8x64xf32> to vector<8x16xf32>
    %cst_45 = arith.constant dense<0.000000e+00> : vector<8x8xf32>
    %151 = tpu.matmul %149, %150, %cst_45 {dimension_numbers = #tpu.dot_dimension_numbers<[1], [1], [0], [0], [0, 0, 1, 0], [], []>} : vector<8x16xf32>, vector<8x16xf32>, vector<8x8xf32> -> vector<8x8xf32>
    %152 = vector.extract_strided_slice %28 {offsets = [0, 32], sizes = [8, 16], strides = [1, 1]} : vector<8x64xf32> to vector<8x16xf32>
    %153 = vector.extract_strided_slice %22 {offsets = [0, 32], sizes = [8, 16], strides = [1, 1]} : vector<8x64xf32> to vector<8x16xf32>
    %cst_46 = arith.constant dense<0.000000e+00> : vector<8x8xf32>
    %154 = tpu.matmul %152, %153, %cst_46 {dimension_numbers = #tpu.dot_dimension_numbers<[1], [1], [0], [0], [0, 0, 1, 0], [], []>} : vector<8x16xf32>, vector<8x16xf32>, vector<8x8xf32> -> vector<8x8xf32>
    %155 = vector.extract_strided_slice %154 {offsets = [1, 0], sizes = [7, 8], strides = [1, 1]} : vector<8x8xf32> to vector<7x8xf32>
    %cst_47 = arith.constant 0.000000e+00 : f32
    %156 = vector.broadcast %cst_47 : f32 to vector<1x8xf32>
    %157 = tpu.concatenate %155, %156 in 0 : vector<7x8xf32>, vector<1x8xf32> -> vector<8x8xf32>
    %cst_48 = arith.constant 0.000000e+00 : f32
    %158 = vector.broadcast %cst_48 : f32 to vector<8x1xf32>
    %159 = vector.extract_strided_slice %157 {offsets = [0, 0], sizes = [8, 7], strides = [1, 1]} : vector<8x8xf32> to vector<8x7xf32>
    %160 = tpu.concatenate %154, %158, %159 in 1 : vector<8x8xf32>, vector<8x1xf32>, vector<8x7xf32> -> vector<8x16xf32>
    %161 = tpu.iota {dimensions = array<i32: 0>} : vector<8x1xi32>
    %c7_i32_49 = arith.constant 7 : i32
    %162 = vector.broadcast %c7_i32_49 : i32 to vector<8x1xi32>
    %163 = arith.subi %162, %161 : vector<8x1xi32>
    %164 = vector.extract_strided_slice %160 {offsets = [0, 1], sizes = [8, 15], strides = [1, 1]} : vector<8x16xf32> to vector<8x15xf32>
    %165 = vector.extract_strided_slice %160 {offsets = [0, 0], sizes = [8, 1], strides = [1, 1]} : vector<8x16xf32> to vector<8x1xf32>
    %166 = tpu.concatenate %164, %165 in 1 : vector<8x15xf32>, vector<8x1xf32> -> vector<8x16xf32>
    %c1_i32_50 = arith.constant 1 : i32
    %167 = vector.broadcast %c1_i32_50 : i32 to vector<8x1xi32>
    %168 = arith.andi %163, %167 : vector<8x1xi32>
    %c0_i32_51 = arith.constant 0 : i32
    %169 = vector.broadcast %c0_i32_51 : i32 to vector<8x1xi32>
    %170 = arith.cmpi ne, %168, %169 : vector<8x1xi32>
    %171 = vector.shape_cast %170 : vector<8x1xi1> to vector<8x1xi1>
    %172 = vector.broadcast %171 : vector<8x1xi1> to vector<8x16xi1>
    %173 = arith.select %172, %166, %160 : vector<8x16xi1>, vector<8x16xf32>
    %174 = vector.extract_strided_slice %173 {offsets = [0, 2], sizes = [8, 14], strides = [1, 1]} : vector<8x16xf32> to vector<8x14xf32>
    %175 = vector.extract_strided_slice %173 {offsets = [0, 0], sizes = [8, 2], strides = [1, 1]} : vector<8x16xf32> to vector<8x2xf32>
    %176 = tpu.concatenate %174, %175 in 1 : vector<8x14xf32>, vector<8x2xf32> -> vector<8x16xf32>
    %c2_i32_52 = arith.constant 2 : i32
    %177 = vector.broadcast %c2_i32_52 : i32 to vector<8x1xi32>
    %178 = arith.andi %163, %177 : vector<8x1xi32>
    %c0_i32_53 = arith.constant 0 : i32
    %179 = vector.broadcast %c0_i32_53 : i32 to vector<8x1xi32>
    %180 = arith.cmpi ne, %178, %179 : vector<8x1xi32>
    %181 = vector.shape_cast %180 : vector<8x1xi1> to vector<8x1xi1>
    %182 = vector.broadcast %181 : vector<8x1xi1> to vector<8x16xi1>
    %183 = arith.select %182, %176, %173 : vector<8x16xi1>, vector<8x16xf32>
    %184 = vector.extract_strided_slice %183 {offsets = [0, 4], sizes = [8, 12], strides = [1, 1]} : vector<8x16xf32> to vector<8x12xf32>
    %185 = vector.extract_strided_slice %183 {offsets = [0, 0], sizes = [8, 4], strides = [1, 1]} : vector<8x16xf32> to vector<8x4xf32>
    %186 = tpu.concatenate %184, %185 in 1 : vector<8x12xf32>, vector<8x4xf32> -> vector<8x16xf32>
    %c4_i32_54 = arith.constant 4 : i32
    %187 = vector.broadcast %c4_i32_54 : i32 to vector<8x1xi32>
    %188 = arith.andi %163, %187 : vector<8x1xi32>
    %c0_i32_55 = arith.constant 0 : i32
    %189 = vector.broadcast %c0_i32_55 : i32 to vector<8x1xi32>
    %190 = arith.cmpi ne, %188, %189 : vector<8x1xi32>
    %191 = vector.shape_cast %190 : vector<8x1xi1> to vector<8x1xi1>
    %192 = vector.broadcast %191 : vector<8x1xi1> to vector<8x16xi1>
    %193 = arith.select %192, %186, %183 : vector<8x16xi1>, vector<8x16xf32>
    %194 = vector.extract_strided_slice %193 {offsets = [0, 0], sizes = [8, 8], strides = [1, 1]} : vector<8x16xf32> to vector<8x8xf32>
    %195 = arith.addf %151, %194 : vector<8x8xf32>
    %cst_56 = arith.constant dense<0xFF800000> : vector<8xf32>
    %196 = vector.multi_reduction <maximumf>, %195, %cst_56 [1] : vector<8x8xf32> to vector<8xf32>
    %197 = vector.shape_cast %196 : vector<8xf32> to vector<8x1xf32>
    %198 = vector.broadcast %197 : vector<8x1xf32> to vector<8x8xf32>
    %199 = arith.subf %195, %198 : vector<8x8xf32>
    %200 = math.exp %199 : vector<8x8xf32>
    %cst_57 = arith.constant dense<0.000000e+00> : vector<8xf32>
    %201 = vector.multi_reduction <add>, %200, %cst_57 [1] : vector<8x8xf32> to vector<8xf32>
    %202 = vector.shape_cast %201 : vector<8xf32> to vector<8x1xf32>
    %203 = tpu.reciprocal %202 : vector<8x1xf32> -> vector<8x1xf32>
    %204 = vector.broadcast %203 : vector<8x1xf32> to vector<8x8xf32>
    %205 = arith.mulf %200, %204 : vector<8x8xf32>
    %206 = vector.extract_strided_slice %18 {offsets = [0, 32], sizes = [8, 16], strides = [1, 1]} : vector<8x64xf32> to vector<8x16xf32>
    %cst_58 = arith.constant dense<0.000000e+00> : vector<8x16xf32>
    %207 = tpu.matmul %205, %206, %cst_58 {dimension_numbers = #tpu.dot_dimension_numbers<[1], [0], [0], [1], [0, 0, 1, 1], [], []>} : vector<8x8xf32>, vector<8x16xf32>, vector<8x16xf32> -> vector<8x16xf32>
    %c0_59 = arith.constant 0 : index
    %c32 = arith.constant 32 : index
    %208 = vector.load %arg10[%c0_59, %c32] : memref<8x64xf32, #tpu.memory_space<vmem>>, vector<8x16xf32>
    tpu.vector_store %arg10[%c0_59, %c32], %207 {strides = array<i32>} : memref<8x64xf32, #tpu.memory_space<vmem>>, vector<8x16xf32>,
    %209 = vector.extract_strided_slice %26 {offsets = [0, 48], sizes = [8, 16], strides = [1, 1]} : vector<8x64xf32> to vector<8x16xf32>
    %210 = vector.extract_strided_slice %17 {offsets = [0, 48], sizes = [8, 16], strides = [1, 1]} : vector<8x64xf32> to vector<8x16xf32>
    %cst_60 = arith.constant dense<0.000000e+00> : vector<8x8xf32>
    %211 = tpu.matmul %209, %210, %cst_60 {dimension_numbers = #tpu.dot_dimension_numbers<[1], [1], [0], [0], [0, 0, 1, 0], [], []>} : vector<8x16xf32>, vector<8x16xf32>, vector<8x8xf32> -> vector<8x8xf32>
    %212 = vector.extract_strided_slice %28 {offsets = [0, 48], sizes = [8, 16], strides = [1, 1]} : vector<8x64xf32> to vector<8x16xf32>
    %213 = vector.extract_strided_slice %22 {offsets = [0, 48], sizes = [8, 16], strides = [1, 1]} : vector<8x64xf32> to vector<8x16xf32>
    %cst_61 = arith.constant dense<0.000000e+00> : vector<8x8xf32>
    %214 = tpu.matmul %212, %213, %cst_61 {dimension_numbers = #tpu.dot_dimension_numbers<[1], [1], [0], [0], [0, 0, 1, 0], [], []>} : vector<8x16xf32>, vector<8x16xf32>, vector<8x8xf32> -> vector<8x8xf32>
    %215 = vector.extract_strided_slice %214 {offsets = [1, 0], sizes = [7, 8], strides = [1, 1]} : vector<8x8xf32> to vector<7x8xf32>
    %cst_62 = arith.constant 0.000000e+00 : f32
    %216 = vector.broadcast %cst_62 : f32 to vector<1x8xf32>
    %217 = tpu.concatenate %215, %216 in 0 : vector<7x8xf32>, vector<1x8xf32> -> vector<8x8xf32>
    %cst_63 = arith.constant 0.000000e+00 : f32
    %218 = vector.broadcast %cst_63 : f32 to vector<8x1xf32>
    %219 = vector.extract_strided_slice %217 {offsets = [0, 0], sizes = [8, 7], strides = [1, 1]} : vector<8x8xf32> to vector<8x7xf32>
    %220 = tpu.concatenate %214, %218, %219 in 1 : vector<8x8xf32>, vector<8x1xf32>, vector<8x7xf32> -> vector<8x16xf32>
    %221 = tpu.iota {dimensions = array<i32: 0>} : vector<8x1xi32>
    %c7_i32_64 = arith.constant 7 : i32
    %222 = vector.broadcast %c7_i32_64 : i32 to vector<8x1xi32>
    %223 = arith.subi %222, %221 : vector<8x1xi32>
    %224 = vector.extract_strided_slice %220 {offsets = [0, 1], sizes = [8, 15], strides = [1, 1]} : vector<8x16xf32> to vector<8x15xf32>
    %225 = vector.extract_strided_slice %220 {offsets = [0, 0], sizes = [8, 1], strides = [1, 1]} : vector<8x16xf32> to vector<8x1xf32>
    %226 = tpu.concatenate %224, %225 in 1 : vector<8x15xf32>, vector<8x1xf32> -> vector<8x16xf32>
    %c1_i32_65 = arith.constant 1 : i32
    %227 = vector.broadcast %c1_i32_65 : i32 to vector<8x1xi32>
    %228 = arith.andi %223, %227 : vector<8x1xi32>
    %c0_i32_66 = arith.constant 0 : i32
    %229 = vector.broadcast %c0_i32_66 : i32 to vector<8x1xi32>
    %230 = arith.cmpi ne, %228, %229 : vector<8x1xi32>
    %231 = vector.shape_cast %230 : vector<8x1xi1> to vector<8x1xi1>
    %232 = vector.broadcast %231 : vector<8x1xi1> to vector<8x16xi1>
    %233 = arith.select %232, %226, %220 : vector<8x16xi1>, vector<8x16xf32>
    %234 = vector.extract_strided_slice %233 {offsets = [0, 2], sizes = [8, 14], strides = [1, 1]} : vector<8x16xf32> to vector<8x14xf32>
    %235 = vector.extract_strided_slice %233 {offsets = [0, 0], sizes = [8, 2], strides = [1, 1]} : vector<8x16xf32> to vector<8x2xf32>
    %236 = tpu.concatenate %234, %235 in 1 : vector<8x14xf32>, vector<8x2xf32> -> vector<8x16xf32>
    %c2_i32_67 = arith.constant 2 : i32
    %237 = vector.broadcast %c2_i32_67 : i32 to vector<8x1xi32>
    %238 = arith.andi %223, %237 : vector<8x1xi32>
    %c0_i32_68 = arith.constant 0 : i32
    %239 = vector.broadcast %c0_i32_68 : i32 to vector<8x1xi32>
    %240 = arith.cmpi ne, %238, %239 : vector<8x1xi32>
    %241 = vector.shape_cast %240 : vector<8x1xi1> to vector<8x1xi1>
    %242 = vector.broadcast %241 : vector<8x1xi1> to vector<8x16xi1>
    %243 = arith.select %242, %236, %233 : vector<8x16xi1>, vector<8x16xf32>
    %244 = vector.extract_strided_slice %243 {offsets = [0, 4], sizes = [8, 12], strides = [1, 1]} : vector<8x16xf32> to vector<8x12xf32>
    %245 = vector.extract_strided_slice %243 {offsets = [0, 0], sizes = [8, 4], strides = [1, 1]} : vector<8x16xf32> to vector<8x4xf32>
    %246 = tpu.concatenate %244, %245 in 1 : vector<8x12xf32>, vector<8x4xf32> -> vector<8x16xf32>
    %c4_i32_69 = arith.constant 4 : i32
    %247 = vector.broadcast %c4_i32_69 : i32 to vector<8x1xi32>
    %248 = arith.andi %223, %247 : vector<8x1xi32>
    %c0_i32_70 = arith.constant 0 : i32
    %249 = vector.broadcast %c0_i32_70 : i32 to vector<8x1xi32>
    %250 = arith.cmpi ne, %248, %249 : vector<8x1xi32>
    %251 = vector.shape_cast %250 : vector<8x1xi1> to vector<8x1xi1>
    %252 = vector.broadcast %251 : vector<8x1xi1> to vector<8x16xi1>
    %253 = arith.select %252, %246, %243 : vector<8x16xi1>, vector<8x16xf32>
    %254 = vector.extract_strided_slice %253 {offsets = [0, 0], sizes = [8, 8], strides = [1, 1]} : vector<8x16xf32> to vector<8x8xf32>
    %255 = arith.addf %211, %254 : vector<8x8xf32>
    %cst_71 = arith.constant dense<0xFF800000> : vector<8xf32>
    %256 = vector.multi_reduction <maximumf>, %255, %cst_71 [1] : vector<8x8xf32> to vector<8xf32>
    %257 = vector.shape_cast %256 : vector<8xf32> to vector<8x1xf32>
    %258 = vector.broadcast %257 : vector<8x1xf32> to vector<8x8xf32>
    %259 = arith.subf %255, %258 : vector<8x8xf32>
    %260 = math.exp %259 : vector<8x8xf32>
    %cst_72 = arith.constant dense<0.000000e+00> : vector<8xf32>
    %261 = vector.multi_reduction <add>, %260, %cst_72 [1] : vector<8x8xf32> to vector<8xf32>
    %262 = vector.shape_cast %261 : vector<8xf32> to vector<8x1xf32>
    %263 = tpu.reciprocal %262 : vector<8x1xf32> -> vector<8x1xf32>
    %264 = vector.broadcast %263 : vector<8x1xf32> to vector<8x8xf32>
    %265 = arith.mulf %260, %264 : vector<8x8xf32>
    %266 = vector.extract_strided_slice %18 {offsets = [0, 48], sizes = [8, 16], strides = [1, 1]} : vector<8x64xf32> to vector<8x16xf32>
    %cst_73 = arith.constant dense<0.000000e+00> : vector<8x16xf32>
    %267 = tpu.matmul %265, %266, %cst_73 {dimension_numbers = #tpu.dot_dimension_numbers<[1], [0], [0], [1], [0, 0, 1, 1], [], []>} : vector<8x8xf32>, vector<8x16xf32>, vector<8x16xf32> -> vector<8x16xf32>
    %c0_74 = arith.constant 0 : index
    %c48 = arith.constant 48 : index
    %268 = vector.load %arg10[%c0_74, %c48] : memref<8x64xf32, #tpu.memory_space<vmem>>, vector<8x16xf32>
    tpu.vector_store %arg10[%c0_74, %c48], %267 {strides = array<i32>} : memref<8x64xf32, #tpu.memory_space<vmem>>, vector<8x16xf32>,
    %c0_75 = arith.constant 0 : index
    %c0_76 = arith.constant 0 : index
    %269 = vector.load %arg10[%c0_75, %c0_76] : memref<8x64xf32, #tpu.memory_space<vmem>>, vector<8x64xf32>
    %c0_77 = arith.constant 0 : index
    %c0_78 = arith.constant 0 : index
    %270 = vector.load %arg7[%c0_77, %c0_78] : memref<64x64xf32, #tpu.memory_space<vmem>>, vector<64x64xf32>
    %cst_79 = arith.constant dense<0.000000e+00> : vector<8x64xf32>
    %271 = tpu.matmul %269, %270, %cst_79 {dimension_numbers = #tpu.dot_dimension_numbers<[1], [0], [0], [1], [0, 0, 1, 1], [], []>} : vector<8x64xf32>, vector<64x64xf32>, vector<8x64xf32> -> vector<8x64xf32>
    %272 = vector.broadcast %4 : vector<1x64xf32> to vector<8x64xf32>
    %273 = arith.addf %271, %272 : vector<8x64xf32>
    %c0_80 = arith.constant 0 : index
    %c0_81 = arith.constant 0 : index
    %c0_82 = arith.constant 0 : index
    %274 = vector.load %arg9[%c0_80, %c0_81, %c0_82] : memref<1x8x64xf32, #tpu.memory_space<vmem>>, vector<1x8x64xf32>
    %275 = vector.shape_cast %274 : vector<1x8x64xf32> to vector<8x64xf32>
    %276 = vector.shape_cast %273 : vector<8x64xf32> to vector<1x8x64xf32>
    tpu.vector_store %arg9[%c0_80, %c0_81, %c0_82], %276 {strides = array<i32>} : memref<1x8x64xf32, #tpu.memory_space<vmem>>, vector<1x8x64xf32>,
    return
  }
  func.func @transform_0(%arg0: i32) -> (i32, i32, i32) {
    %c0_i32 = arith.constant 0 : i32
    %c0_i32_0 = arith.constant 0 : i32
    %c0_i32_1 = arith.constant 0 : i32
    return %arg0, %c0_i32, %c0_i32_0 : i32, i32, i32
  }
  func.func @transform_1(%arg0: i32) -> (i32, i32, i32) {
    %c0_i32 = arith.constant 0 : i32
    %c0_i32_0 = arith.constant 0 : i32
    %c0_i32_1 = arith.constant 0 : i32
    return %arg0, %c0_i32, %c0_i32_0 : i32, i32, i32
  }
  func.func @transform_2(%arg0: i32) -> (i32, i32, i32) {
    %c0_i32 = arith.constant 0 : i32
    %c0_i32_0 = arith.constant 0 : i32
    %c0_i32_1 = arith.constant 0 : i32
    return %arg0, %c0_i32, %c0_i32_0 : i32, i32, i32
  }
  func.func @transform_3(%arg0: i32) -> (i32, i32, i32) {
    %c0_i32 = arith.constant 0 : i32
    %c0_i32_0 = arith.constant 0 : i32
    %c0_i32_1 = arith.constant 0 : i32
    return %arg0, %c0_i32, %c0_i32_0 : i32, i32, i32
  }
  func.func @transform_4(%arg0: i32) -> (i32, i32) {
    %c0_i32 = arith.constant 0 : i32
    %c0_i32_0 = arith.constant 0 : i32
    %c0_i32_1 = arith.constant 0 : i32
    return %c0_i32, %c0_i32_0 : i32, i32
  }
  func.func @transform_5(%arg0: i32) -> (i32, i32) {
    %c0_i32 = arith.constant 0 : i32
    %c0_i32_0 = arith.constant 0 : i32
    %c0_i32_1 = arith.constant 0 : i32
    return %c0_i32, %c0_i32_0 : i32, i32
  }
  func.func @transform_6(%arg0: i32) -> (i32, i32) {
    %c0_i32 = arith.constant 0 : i32
    %c0_i32_0 = arith.constant 0 : i32
    %c0_i32_1 = arith.constant 0 : i32
    return %c0_i32, %c0_i32_0 : i32, i32
  }
  func.func @transform_7(%arg0: i32) -> (i32, i32) {
    %c0_i32 = arith.constant 0 : i32
    %c0_i32_0 = arith.constant 0 : i32
    %c0_i32_1 = arith.constant 0 : i32
    return %c0_i32, %c0_i32_0 : i32, i32
  }
  func.func @transform_8(%arg0: i32) -> (i32, i32, i32) {
    %c0_i32 = arith.constant 0 : i32
    %c0_i32_0 = arith.constant 0 : i32
    %c0_i32_1 = arith.constant 0 : i32
    return %arg0, %c0_i32, %c0_i32_0 : i32, i32, i32
  }
}

</mosaic_0001>

<llo_original>
// kernel: tpu_custom_call.1
$region0: #{tpu_custom_call.1}
  #allocation0 [shape = 'u32[]', space=smem, size = 0x4, offset = 0x4, fixed_abs, tag = 'smem constant byte address 0x4 - core index']
  #allocation1 [shape = 'u32[144,128]{1,0:T(1,128)}', space=vmem, size = 0x12000, scoped, tag = 'internal scratch']
  #allocation2 [shape = 'f32[8,64]{1,0:T(8,128)}', space=vmem, size = 0x1000, scoped, tag = 'scratch operand']
  %s0 = inlined_call_operand.hbm [shape: f32[2,8,64], index: 0, kind: input, shape index: {}]
  %s1 = inlined_call_operand.hbm [shape: f32[2,8,64], index: 1, kind: input, shape index: {}]
  %s2 = inlined_call_operand.hbm [shape: f32[2,8,64], index: 2, kind: input, shape index: {}]
  %s3 = inlined_call_operand.hbm [shape: f32[2,8,64], index: 3, kind: input, shape index: {}]
  %s4 = inlined_call_operand.hbm [shape: f32[64,64], index: 4, kind: input, shape index: {}]
  %s5 = inlined_call_operand.hbm [shape: f32[64,64], index: 5, kind: input, shape index: {}]
  %s6 = inlined_call_operand.hbm [shape: f32[64,64], index: 6, kind: input, shape index: {}]
  %s7 = inlined_call_operand.vmem [shape: f32[8,64], index: 7, kind: input, shape index: {}]
  %s8 = inlined_call_operand.hbm [shape: f32[2,8,64], index: 8, kind: output, shape index: {}]
  %s9 = sld [smem:[#allocation0]]
  $region93: #{tpu_custom_call.1} parent=0
    _
  %s11 = ssub.s32 1, %s9
  %s12 = scalar_select 0, %s11, %s9
  $region1: #{tpu_custom_call.1} parent=0
    #allocation3 [shape = 'u8[8192]{0}', space=vmem, size = 0x2000, scoped, tag = 'input window, operand 0']
    #allocation4 [shape = 's32[2]{0}', space=sflag, size = 0x8, scoped, tag = 'scoped memory for tpu_custom_call.1']
    #allocation5 [shape = 's32[2]{0}', space=sflag, size = 0x8, scoped, tag = 'scoped memory for tpu_custom_call.1']
    #allocation6 [shape = 'u8[8192]{0}', space=vmem, size = 0x2000, scoped, tag = 'input window, operand 1']
    #allocation7 [shape = 's32[2]{0}', space=sflag, size = 0x8, scoped, tag = 'scoped memory for tpu_custom_call.1']
    #allocation8 [shape = 'u8[8192]{0}', space=vmem, size = 0x2000, scoped, tag = 'input window, operand 2']
    #allocation9 [shape = 'u8[8192]{0}', space=vmem, size = 0x2000, scoped, tag = 'input window, operand 3']
    #allocation10 [shape = 's32[2]{0}', space=sflag, size = 0x8, scoped, tag = 'scoped memory for tpu_custom_call.1']
    #allocation11 [shape = 'u8[32768]{0}', space=vmem, size = 0x8000, scoped, tag = 'input window, operand 4, single buffered']
    #allocation12 [shape = 'u8[32768]{0}', space=vmem, size = 0x8000, scoped, tag = 'input window, operand 5, single buffered']
    #allocation13 [shape = 's32[1]{0}', space=sflag, size = 0x4, scoped, tag = 'scoped memory for tpu_custom_call.1']
    #allocation14 [shape = 'u8[32768]{0}', space=vmem, size = 0x8000, scoped, tag = 'input window, operand 6, single buffered']
    #allocation15 [shape = 'u8[8192]{0}', space=vmem, size = 0x2000, scoped, tag = 'output window, operand 0']
    %13 = vsyncpa [#allocation4], 0
    %s14 = scalar_lea.sflag [#allocation4], 1
    %15 = vsyncpa %s14, 0
    %16 = vsyncpa [#allocation7], 0
    %s17 = scalar_lea.sflag [#allocation7], 1
    %18 = vsyncpa %s17, 0
    %19 = vsyncpa [#allocation10], 0
    %s20 = scalar_lea.sflag [#allocation10], 1
    %21 = vsyncpa %s20, 0
    %22 = vsyncpa [#allocation13], 0
    %23 = vsyncpa [#allocation5], 0
    %s24 = scalar_lea.sflag [#allocation5], 1
    %25 = vsyncpa %s24, 0
    loop: start=0, step=1, limit=4
    $region2: #{tpu_custom_call.1} parent=1 // loop_pre_header
      _
    $region3: #{tpu_custom_call.1} parent=1 // loop_header
      %s27 = sphi 0, %s31
      %p28 = scmp.ge.s32.totalorder %s27, 4
      %s37 = sphi 0, %s39
      %s40 = sphi 0, %s37
      %s41 = sphi 0, %s40
      %s57 = sphi 0, %s41
      %s63 = sphi 0, %s65
      %s66 = sphi 0, %s63
      %s67 = sphi 0, %s66
      %s83 = sphi 0, %s67
      %s89 = sphi 0, %s91
      %s92 = sphi 0, %s89
      %s93 = sphi 0, %s92
      %s109 = sphi 0, %s93
      %s115 = sphi 0, %s117
      %s118 = sphi 0, %s115
      %s119 = sphi 0, %s118
      %s135 = sphi 0, %s119
      %s139 = sphi 0, %s139
      %s141 = sphi 0, %s139
      %s142 = sphi 0, %s141
      %s156 = sphi 0, %s142
      %s160 = sphi 0, %s160
      %s162 = sphi 0, %s160
      %s163 = sphi 0, %s162
      %s177 = sphi 0, %s163
      %s181 = sphi 0, %s181
      %s183 = sphi 0, %s181
      %s184 = sphi 0, %s183
      %s198 = sphi 0, %s184
      %s202 = sphi 0, %s202
      %s204 = sphi 0, %s202
      %s205 = sphi 0, %s204
      %s219 = sphi 0, %s205
      %s225 = sphi 0, %s227
      %s228 = sphi 0, %s225
      %s229 = sphi 0, %s228
      %s245 = sphi 0, %s229
    $region4: #{tpu_custom_call.1} parent=1 // loop_header_branch
      %30 = sbr.rel (%p28) target = $region8
    $region5: #{tpu_custom_call.1} parent=1 // loop_body
      %s32 = ssub.s32 %s27, 1
      %s33 = ssub.s32 %s27, 2
      %s34 = sadd.s32 %s27, 1
      %s35 = ssub.s32 %s27, %s34
      %p36 = scmp.eq.s32.totalorder %s35, 0
      %s38 = sadd.s32 %s37, 1
      %s39 = scalar_select %p36, %s37, %s38
      %p42 = pneg %p36
      %p43 = scmp.eq.s32.totalorder %s27, 1
      %p44 = por %p42, %p43
      %p45 = scmp.ne.s32.totalorder %s37, %s40
      %p46 = scmp.eq.s32.totalorder %s27, 0
      %p47 = por %p45, %p46
      %p48 = scmp.ne.s32.totalorder %s37, %s40
      %p49 = scmp.eq.s32.totalorder %s32, 1
      %p50 = por %p48, %p49
      %p51 = scmp.ne.s32.totalorder %s40, %s41
      %p52 = scmp.eq.s32.totalorder %s32, 0
      %p53 = por %p51, %p52
      %p54 = scmp.ne.s32.totalorder %s40, %s41
      %p55 = scmp.eq.s32.totalorder %s33, 1
      %p56 = por %p54, %p55
      %p58 = scmp.ne.s32.totalorder %s41, %s57
      %p59 = scmp.eq.s32.totalorder %s33, 0
      %p60 = por %p58, %p59
      %s61 = ssub.s32 %s27, %s34
      %p62 = scmp.eq.s32.totalorder %s61, 0
      %s64 = sadd.s32 %s63, 1
      %s65 = scalar_select %p62, %s63, %s64
      %p68 = pneg %p62
      %p69 = scmp.eq.s32.totalorder %s27, 1
      %p70 = por %p68, %p69
      %p71 = scmp.ne.s32.totalorder %s63, %s66
      %p72 = scmp.eq.s32.totalorder %s27, 0
      %p73 = por %p71, %p72
      %p74 = scmp.ne.s32.totalorder %s63, %s66
      %p75 = scmp.eq.s32.totalorder %s32, 1
      %p76 = por %p74, %p75
      %p77 = scmp.ne.s32.totalorder %s66, %s67
      %p78 = scmp.eq.s32.totalorder %s32, 0
      %p79 = por %p77, %p78
      %p80 = scmp.ne.s32.totalorder %s66, %s67
      %p81 = scmp.eq.s32.totalorder %s33, 1
      %p82 = por %p80, %p81
      %p84 = scmp.ne.s32.totalorder %s67, %s83
      %p85 = scmp.eq.s32.totalorder %s33, 0
      %p86 = por %p84, %p85
      %s87 = ssub.s32 %s27, %s34
      %p88 = scmp.eq.s32.totalorder %s87, 0
      %s90 = sadd.s32 %s89, 1
      %s91 = scalar_select %p88, %s89, %s90
      %p94 = pneg %p88
      %p95 = scmp.eq.s32.totalorder %s27, 1
      %p96 = por %p94, %p95
      %p97 = scmp.ne.s32.totalorder %s89, %s92
      %p98 = scmp.eq.s32.totalorder %s27, 0
      %p99 = por %p97, %p98
      %p100 = scmp.ne.s32.totalorder %s89, %s92
      %p101 = scmp.eq.s32.totalorder %s32, 1
      %p102 = por %p100, %p101
      %p103 = scmp.ne.s32.totalorder %s92, %s93
      %p104 = scmp.eq.s32.totalorder %s32, 0
      %p105 = por %p103, %p104
      %p106 = scmp.ne.s32.totalorder %s92, %s93
      %p107 = scmp.eq.s32.totalorder %s33, 1
      %p108 = por %p106, %p107
      %p110 = scmp.ne.s32.totalorder %s93, %s109
      %p111 = scmp.eq.s32.totalorder %s33, 0
      %p112 = por %p110, %p111
      %s113 = ssub.s32 %s27, %s34
      %p114 = scmp.eq.s32.totalorder %s113, 0
      %s116 = sadd.s32 %s115, 1
      %s117 = scalar_select %p114, %s115, %s116
      %p120 = pneg %p114
      %p121 = scmp.eq.s32.totalorder %s27, 1
      %p122 = por %p120, %p121
      %p123 = scmp.ne.s32.totalorder %s115, %s118
      %p124 = scmp.eq.s32.totalorder %s27, 0
      %p125 = por %p123, %p124
      %p126 = scmp.ne.s32.totalorder %s115, %s118
      %p127 = scmp.eq.s32.totalorder %s32, 1
      %p128 = por %p126, %p127
      %p129 = scmp.ne.s32.totalorder %s118, %s119
      %p130 = scmp.eq.s32.totalorder %s32, 0
      %p131 = por %p129, %p130
      %p132 = scmp.ne.s32.totalorder %s118, %s119
      %p133 = scmp.eq.s32.totalorder %s33, 1
      %p134 = por %p132, %p133
      %p136 = scmp.ne.s32.totalorder %s119, %s135
      %p137 = scmp.eq.s32.totalorder %s33, 0
      %p138 = por %p136, %p137
      %s140 = sadd.s32 %s139, 1
      %p143 = scmp.eq.s32.totalorder %s27, 1
      %p144 = scmp.ne.s32.totalorder %s139, %s141
      %p145 = scmp.eq.s32.totalorder %s27, 0
      %p146 = por %p144, %p145
      %p147 = scmp.ne.s32.totalorder %s139, %s141
      %p148 = scmp.eq.s32.totalorder %s32, 1
      %p149 = por %p147, %p148
      %p150 = scmp.ne.s32.totalorder %s141, %s142
      %p151 = scmp.eq.s32.totalorder %s32, 0
      %p152 = por %p150, %p151
      %p153 = scmp.ne.s32.totalorder %s141, %s142
      %p154 = scmp.eq.s32.totalorder %s33, 1
      %p155 = por %p153, %p154
      %p157 = scmp.ne.s32.totalorder %s142, %s156
      %p158 = scmp.eq.s32.totalorder %s33, 0
      %p159 = por %p157, %p158
      %s161 = sadd.s32 %s160, 1
      %p164 = scmp.eq.s32.totalorder %s27, 1
      %p165 = scmp.ne.s32.totalorder %s160, %s162
      %p166 = scmp.eq.s32.totalorder %s27, 0
      %p167 = por %p165, %p166
      %p168 = scmp.ne.s32.totalorder %s160, %s162
      %p169 = scmp.eq.s32.totalorder %s32, 1
      %p170 = por %p168, %p169
      %p171 = scmp.ne.s32.totalorder %s162, %s163
      %p172 = scmp.eq.s32.totalorder %s32, 0
      %p173 = por %p171, %p172
      %p174 = scmp.ne.s32.totalorder %s162, %s163
      %p175 = scmp.eq.s32.totalorder %s33, 1
      %p176 = por %p174, %p175
      %p178 = scmp.ne.s32.totalorder %s163, %s177
      %p179 = scmp.eq.s32.totalorder %s33, 0
      %p180 = por %p178, %p179
      %s182 = sadd.s32 %s181, 1
      %p185 = scmp.eq.s32.totalorder %s27, 1
      %p186 = scmp.ne.s32.totalorder %s181, %s183
      %p187 = scmp.eq.s32.totalorder %s27, 0
      %p188 = por %p186, %p187
      %p189 = scmp.ne.s32.totalorder %s181, %s183
      %p190 = scmp.eq.s32.totalorder %s32, 1
      %p191 = por %p189, %p190
      %p192 = scmp.ne.s32.totalorder %s183, %s184
      %p193 = scmp.eq.s32.totalorder %s32, 0
      %p194 = por %p192, %p193
      %p195 = scmp.ne.s32.totalorder %s183, %s184
      %p196 = scmp.eq.s32.totalorder %s33, 1
      %p197 = por %p195, %p196
      %p199 = scmp.ne.s32.totalorder %s184, %s198
      %p200 = scmp.eq.s32.totalorder %s33, 0
      %p201 = por %p199, %p200
      %s203 = sadd.s32 %s202, 1
      %p206 = scmp.eq.s32.totalorder %s27, 1
      %p207 = scmp.ne.s32.totalorder %s202, %s204
      %p208 = scmp.eq.s32.totalorder %s27, 0
      %p209 = por %p207, %p208
      %p210 = scmp.ne.s32.totalorder %s202, %s204
      %p211 = scmp.eq.s32.totalorder %s32, 1
      %p212 = por %p210, %p211
      %p213 = scmp.ne.s32.totalorder %s204, %s205
      %p214 = scmp.eq.s32.totalorder %s32, 0
      %p215 = por %p213, %p214
      %p216 = scmp.ne.s32.totalorder %s204, %s205
      %p217 = scmp.eq.s32.totalorder %s33, 1
      %p218 = por %p216, %p217
      %p220 = scmp.ne.s32.totalorder %s205, %s219
      %p221 = scmp.eq.s32.totalorder %s33, 0
      %p222 = por %p220, %p221
      %s223 = ssub.s32 %s27, %s34
      %p224 = scmp.eq.s32.totalorder %s223, 0
      %s226 = sadd.s32 %s225, 1
      %s227 = scalar_select %p224, %s225, %s226
      %p230 = pneg %p224
      %p231 = scmp.eq.s32.totalorder %s27, 1
      %p232 = por %p230, %p231
      %p233 = scmp.ne.s32.totalorder %s225, %s228
      %p234 = scmp.eq.s32.totalorder %s27, 0
      %p235 = por %p233, %p234
      %p236 = scmp.ne.s32.totalorder %s225, %s228
      %p237 = scmp.eq.s32.totalorder %s32, 1
      %p238 = por %p236, %p237
      %p239 = scmp.ne.s32.totalorder %s228, %s229
      %p240 = scmp.eq.s32.totalorder %s32, 0
      %p241 = por %p239, %p240
      %p242 = scmp.ne.s32.totalorder %s228, %s229
      %p243 = scmp.eq.s32.totalorder %s33, 1
      %p244 = por %p242, %p243
      %p246 = scmp.ne.s32.totalorder %s229, %s245
      %p247 = scmp.eq.s32.totalorder %s33, 0
      %p248 = por %p246, %p247
      %p249 = scmp.le.s32.totalorder 1, %s27
      %p250 = scmp.lt.s32.totalorder %s27, 3
      %p251 = pnand %p249, %p250
      %p252 = pneg %p251
      // Predicated region
      $region9: #{tpu_custom_call.1} parent=5 // pred_check
        _
      $region10: #{tpu_custom_call.1} parent=5 // pred_check_branch
        %254 = sbr.rel (%p251) target = $region12
      $region11: #{tpu_custom_call.1} parent=5 // pred_region
        %s255 = ssub.s32 %s27, 1
        // Predicated region
        $region13: #{tpu_custom_call.1} parent=11 // pred_check
          %p256 = pneg %p152
        $region14: #{tpu_custom_call.1} parent=11 // pred_check_branch
          %258 = sbr.rel (%p256) target = $region16
        $region15: #{tpu_custom_call.1} parent=11 // pred_region
          %s260 = ssub.s32 1024, 1024
          %261 = vsyncadd [#allocation10], %s260
          %s262 = sshll.u32 [#allocation11], 4
          %s263 = int_to_ptr.vmem [resolvable:$true] %s262
          %268 = dma.hbm_to_vmem [thread:$0]  %s4, 1024, %s263, [#allocation10], 128, 128, 8
        $region16: #{tpu_custom_call.1} parent=11 // pred_fallthru
          _
        // Predicated region
        $region17: #{tpu_custom_call.1} parent=11 // pred_check
          %p269 = pneg %p173
        $region18: #{tpu_custom_call.1} parent=11 // pred_check_branch
          %271 = sbr.rel (%p269) target = $region20
        $region19: #{tpu_custom_call.1} parent=11 // pred_region
          %s273 = ssub.s32 1024, 1024
          %274 = vsyncadd [#allocation13], %s273
          %s275 = sshll.u32 [#allocation12], 4
          %s276 = int_to_ptr.vmem [resolvable:$true] %s275
          %281 = dma.hbm_to_vmem [thread:$0]  %s5, 1024, %s276, [#allocation13], 128, 128, 8
        $region20: #{tpu_custom_call.1} parent=11 // pred_fallthru
          _
        // Predicated region
        $region21: #{tpu_custom_call.1} parent=11 // pred_check
          %p282 = pneg %p194
        $region22: #{tpu_custom_call.1} parent=11 // pred_check_branch
          %284 = sbr.rel (%p282) target = $region24
        $region23: #{tpu_custom_call.1} parent=11 // pred_region
          %s286 = ssub.s32 1024, 1024
          %287 = vsyncadd [#allocation13], %s286
          %s288 = sshll.u32 [#allocation14], 4
          %s289 = int_to_ptr.vmem [resolvable:$true] %s288
          %294 = dma.hbm_to_vmem [thread:$0]  %s6, 1024, %s289, [#allocation13], 128, 128, 8
        $region24: #{tpu_custom_call.1} parent=11 // pred_fallthru
          _
        // Predicated region
        $region25: #{tpu_custom_call.1} parent=11 // pred_check
          %p295 = pneg %p215
        $region26: #{tpu_custom_call.1} parent=11 // pred_check_branch
          %297 = sbr.rel (%p295) target = $region28
        $region27: #{tpu_custom_call.1} parent=11 // pred_region
          _
        $region28: #{tpu_custom_call.1} parent=11 // pred_fallthru
          _
      $region12: #{tpu_custom_call.1} parent=5 // pred_fallthru
        _
      %p298 = scmp.lt.s32.totalorder %s27, 2
      // Predicated region
      $region29: #{tpu_custom_call.1} parent=5 // pred_check
        %p299 = pneg %p298
      $region30: #{tpu_custom_call.1} parent=5 // pred_check_branch
        %301 = sbr.rel (%p299) target = $region32
      $region31: #{tpu_custom_call.1} parent=5 // pred_region
        // Predicated region
        $region33: #{tpu_custom_call.1} parent=31 // pred_check
          %p302 = pneg %p47
        $region34: #{tpu_custom_call.1} parent=31 // pred_check_branch
          %304 = sbr.rel (%p302) target = $region36
        $region35: #{tpu_custom_call.1} parent=31 // pred_region
          %s305 = sand.u32 %s37, 1
          %s306 = scalar_lea.sflag [#allocation4], %s305
          %s307 = sand.u32 %s37, 1
          %s308 = smul.addr %s307, 8
          %s309 = scalar_lea.vmem [#allocation3], %s308
          %s311 = ssub.s32 128, 128
          %312 = vsyncadd %s306, %s311
          %s313 = smul.addr %s27, 128
          %s314 = scalar_lea.hbm %s0, %s313
          %s316 = sshll.u32 %s309, 4
          %s317 = int_to_ptr.vmem [resolvable:$true] %s316
          %319 = dma.hbm_to_vmem [thread:$0]  %s314, 128, %s317, %s306
        $region36: #{tpu_custom_call.1} parent=31 // pred_fallthru
          _
        // Predicated region
        $region37: #{tpu_custom_call.1} parent=31 // pred_check
          %p320 = pneg %p73
        $region38: #{tpu_custom_call.1} parent=31 // pred_check_branch
          %322 = sbr.rel (%p320) target = $region40
        $region39: #{tpu_custom_call.1} parent=31 // pred_region
          %s323 = sand.u32 %s27, 1
          %s324 = scalar_lea.sflag [#allocation7], %s323
          %s325 = sand.u32 %s63, 1
          %s326 = smul.addr %s325, 8
          %s327 = scalar_lea.vmem [#allocation6], %s326
          %s329 = ssub.s32 128, 128
          %330 = vsyncadd %s324, %s329
          %s331 = smul.addr %s27, 128
          %s332 = scalar_lea.hbm %s1, %s331
          %s334 = sshll.u32 %s327, 4
          %s335 = int_to_ptr.vmem [resolvable:$true] %s334
          %337 = dma.hbm_to_vmem [thread:$0]  %s332, 128, %s335, %s324
        $region40: #{tpu_custom_call.1} parent=31 // pred_fallthru
          _
        // Predicated region
        $region41: #{tpu_custom_call.1} parent=31 // pred_check
          %p338 = pneg %p99
        $region42: #{tpu_custom_call.1} parent=31 // pred_check_branch
          %340 = sbr.rel (%p338) target = $region44
        $region43: #{tpu_custom_call.1} parent=31 // pred_region
          %s341 = sand.u32 %s27, 1
          %s342 = scalar_lea.sflag [#allocation7], %s341
          %s343 = sand.u32 %s89, 1
          %s344 = smul.addr %s343, 8
          %s345 = scalar_lea.vmem [#allocation8], %s344
          %s347 = ssub.s32 128, 128
          %348 = vsyncadd %s342, %s347
          %s349 = smul.addr %s27, 128
          %s350 = scalar_lea.hbm %s2, %s349
          %s352 = sshll.u32 %s345, 4
          %s353 = int_to_ptr.vmem [resolvable:$true] %s352
          %355 = dma.hbm_to_vmem [thread:$0]  %s350, 128, %s353, %s342
        $region44: #{tpu_custom_call.1} parent=31 // pred_fallthru
          _
        // Predicated region
        $region45: #{tpu_custom_call.1} parent=31 // pred_check
          %p356 = pneg %p125
        $region46: #{tpu_custom_call.1} parent=31 // pred_check_branch
          %358 = sbr.rel (%p356) target = $region48
        $region47: #{tpu_custom_call.1} parent=31 // pred_region
          %s359 = sand.u32 %s27, 1
          %s360 = scalar_lea.sflag [#allocation10], %s359
          %s361 = sand.u32 %s115, 1
          %s362 = smul.addr %s361, 8
          %s363 = scalar_lea.vmem [#allocation9], %s362
          %s365 = ssub.s32 128, 128
          %366 = vsyncadd %s360, %s365
          %s367 = smul.addr %s27, 128
          %s368 = scalar_lea.hbm %s3, %s367
          %s370 = sshll.u32 %s363, 4
          %s371 = int_to_ptr.vmem [resolvable:$true] %s370
          %373 = dma.hbm_to_vmem [thread:$0]  %s368, 128, %s371, %s360
        $region48: #{tpu_custom_call.1} parent=31 // pred_fallthru
          _
      $region32: #{tpu_custom_call.1} parent=5 // pred_fallthru
        _
      %p374 = scmp.le.s32.totalorder 1, %s27
      %p375 = scmp.lt.s32.totalorder %s27, 3
      %p376 = pnand %p374, %p375
      %p377 = pneg %p376
      // Predicated region
      $region49: #{tpu_custom_call.1} parent=5 // pred_check
        _
      $region50: #{tpu_custom_call.1} parent=5 // pred_check_branch
        %379 = sbr.rel (%p376) target = $region52
      $region51: #{tpu_custom_call.1} parent=5 // pred_region
        %s380 = ssub.s32 %s27, 1
        %s381 = sand.u32 %s40, 1
        %s382 = scalar_lea.sflag [#allocation4], %s381
        %s383 = sand.u32 %s40, 1
        %s384 = smul.addr %s383, 8
        %s385 = scalar_lea.vmem [#allocation3], %s384
        // Predicated region
        $region53: #{tpu_custom_call.1} parent=51 // pred_check
          %p386 = pneg %p53
        $region54: #{tpu_custom_call.1} parent=51 // pred_check_branch
          %388 = sbr.rel (%p386) target = $region56
        $region55: #{tpu_custom_call.1} parent=51 // pred_region
          %389 = dma.done %s382, 128
        $region56: #{tpu_custom_call.1} parent=51 // pred_fallthru
          _
        %s390 = sand.u32 %s32, 1
        %s391 = scalar_lea.sflag [#allocation7], %s390
        %s392 = sand.u32 %s66, 1
        %s393 = smul.addr %s392, 8
        %s394 = scalar_lea.vmem [#allocation6], %s393
        // Predicated region
        $region57: #{tpu_custom_call.1} parent=51 // pred_check
          %p395 = pneg %p79
        $region58: #{tpu_custom_call.1} parent=51 // pred_check_branch
          %397 = sbr.rel (%p395) target = $region60
        $region59: #{tpu_custom_call.1} parent=51 // pred_region
          %398 = dma.done %s391, 128
        $region60: #{tpu_custom_call.1} parent=51 // pred_fallthru
          _
        %s399 = sand.u32 %s32, 1
        %s400 = scalar_lea.sflag [#allocation7], %s399
        %s401 = sand.u32 %s92, 1
        %s402 = smul.addr %s401, 8
        %s403 = scalar_lea.vmem [#allocation8], %s402
        // Predicated region
        $region61: #{tpu_custom_call.1} parent=51 // pred_check
          %p404 = pneg %p105
        $region62: #{tpu_custom_call.1} parent=51 // pred_check_branch
          %406 = sbr.rel (%p404) target = $region64
        $region63: #{tpu_custom_call.1} parent=51 // pred_region
          %407 = dma.done %s400, 128
        $region64: #{tpu_custom_call.1} parent=51 // pred_fallthru
          _
        %s408 = sand.u32 %s32, 1
        %s409 = scalar_lea.sflag [#allocation10], %s408
        %s410 = sand.u32 %s118, 1
        %s411 = smul.addr %s410, 8
        %s412 = scalar_lea.vmem [#allocation9], %s411
        // Predicated region
        $region65: #{tpu_custom_call.1} parent=51 // pred_check
          %p413 = pneg %p131
        $region66: #{tpu_custom_call.1} parent=51 // pred_check_branch
          %415 = sbr.rel (%p413) target = $region68
        $region67: #{tpu_custom_call.1} parent=51 // pred_region
          %416 = dma.done %s409, 128
        $region68: #{tpu_custom_call.1} parent=51 // pred_fallthru
          _
        // Predicated region
        $region69: #{tpu_custom_call.1} parent=51 // pred_check
          %p417 = pneg %p152
        $region70: #{tpu_custom_call.1} parent=51 // pred_check_branch
          %419 = sbr.rel (%p417) target = $region72
        $region71: #{tpu_custom_call.1} parent=51 // pred_region
          %420 = dma.done [#allocation10], 1024
        $region72: #{tpu_custom_call.1} parent=51 // pred_fallthru
          _
        // Predicated region
        $region73: #{tpu_custom_call.1} parent=51 // pred_check
          %p421 = pneg %p173
        $region74: #{tpu_custom_call.1} parent=51 // pred_check_branch
          %423 = sbr.rel (%p421) target = $region76
        $region75: #{tpu_custom_call.1} parent=51 // pred_region
          %424 = dma.done [#allocation13], 1024
        $region76: #{tpu_custom_call.1} parent=51 // pred_fallthru
          _
        // Predicated region
        $region77: #{tpu_custom_call.1} parent=51 // pred_check
          %p425 = pneg %p194
        $region78: #{tpu_custom_call.1} parent=51 // pred_check_branch
          %427 = sbr.rel (%p425) target = $region80
        $region79: #{tpu_custom_call.1} parent=51 // pred_region
          %428 = dma.done [#allocation13], 1024
        $region80: #{tpu_custom_call.1} parent=51 // pred_fallthru
          _
        %s429 = sand.u32 %s40, 1
        %s430 = scalar_lea.sflag [#allocation4], %s429
        %s431 = sand.u32 %s40, 1
        %s432 = smul.addr %s431, 8
        %s433 = scalar_lea.vmem [#allocation3], %s432
        %p434 = pneg %p53
        %p435 = pneg %p50
        %s436 = sand.u32 %s32, 1
        %s437 = scalar_lea.sflag [#allocation7], %s436
        %s438 = sand.u32 %s66, 1
        %s439 = smul.addr %s438, 8
        %s440 = scalar_lea.vmem [#allocation6], %s439
        %p441 = pneg %p79
        %p442 = pneg %p76
        %s443 = sand.u32 %s32, 1
        %s444 = scalar_lea.sflag [#allocation7], %s443
        %s445 = sand.u32 %s92, 1
        %s446 = smul.addr %s445, 8
        %s447 = scalar_lea.vmem [#allocation8], %s446
        %p448 = pneg %p105
        %p449 = pneg %p102
        %s450 = sand.u32 %s32, 1
        %s451 = scalar_lea.sflag [#allocation10], %s450
        %s452 = sand.u32 %s118, 1
        %s453 = smul.addr %s452, 8
        %s454 = scalar_lea.vmem [#allocation9], %s453
        %p455 = pneg %p131
        %p456 = pneg %p128
        %p457 = pneg %p152
        %p458 = pneg %p149
        %p459 = pneg %p173
        %p460 = pneg %p170
        %p461 = pneg %p194
        %p462 = pneg %p191
        %p463 = pneg %p215
        %p464 = pneg %p212
        %p465 = pneg %p241
        %p466 = pneg %p238
        %s467 = sand.u32 %s228, 1
        %s468 = scalar_lea.sflag [#allocation5], %s467
        %s469 = sand.u32 %s228, 1
        %s470 = smul.addr %s469, 8
        %s471 = scalar_lea.vmem [#allocation15], %s470
        %v472 = vld [vmem:[%s7] sm:$0xff]
        %v473 = vld [vmem:[%s385] sm:$0xff]
        %v474 = vld [vmem:[%s394] sm:$0xff]
        %v475 = vld [vmem:[%s403] sm:$0xff]
        %v476 = vld [vmem:[#allocation11] sm:$0xff]
        %v477 = vld [vmem:[#allocation11 + $0x8] sm:$0xff]
        %v478 = vld [vmem:[#allocation11 + $0x10] sm:$0xff]
        %v479 = vld [vmem:[#allocation11 + $0x18] sm:$0xff]
        %v480 = vld [vmem:[#allocation11 + $0x20] sm:$0xff]
        %v481 = vld [vmem:[#allocation11 + $0x28] sm:$0xff]
        %v482 = vld [vmem:[#allocation11 + $0x30] sm:$0xff]
        %v483 = vld [vmem:[#allocation11 + $0x38] sm:$0xff]
        %v484 = vlaneseq
        %v485 = vshrl.u32 %v484, 7
        %v486 = vsub.s32 0, %v485
        %v487 = vrot.slane %v472, %v486
        %vm488 = vcmask 523264
        %v490 = vsel %vm488, %v473, 0
        %v493 = vsel %vm488, %v474, 0
        %v496 = vsel %vm488, %v475, 0
        %498 = vmatprep.subr.mxu0 0.0
        %499 = vmatpush1.msra.mxu0 %v476
        %500 = vmatprep.subr.mxu0 0.0
        %501 = vmatpush1.msra.mxu0 %v477
        %502 = vmatprep.subr.mxu0 0.0
        %503 = vmatpush1.msra.mxu0 %v478
        %504 = vmatprep.subr.mxu0 0.0
        %505 = vmatpush1.msra.mxu0 %v479
        %506 = vmatprep.subr.mxu0 0.0
        %507 = vmatpush1.msra.mxu0 %v480
        %508 = vmatprep.subr.mxu0 0.0
        %509 = vmatpush1.msra.mxu0 %v481
        %510 = vmatprep.subr.mxu0 0.0
        %511 = vmatpush1.msra.mxu0 %v482
        %512 = vmatprep.subr.mxu0 0.0
        %513 = vmatpush1.msra.mxu0 %v483
        %514 = vmatprep.subr.mxu0 0.0
        %515 = vmatpush1.msra.mxu0 0.0
        %516 = vmatprep.subr.mxu0 0.0
        %517 = vmatpush1.msra.mxu0 0.0
        %518 = vmatprep.subr.mxu0 0.0
        %519 = vmatpush1.msra.mxu0 0.0
        %520 = vmatprep.subr.mxu0 0.0
        %521 = vmatpush1.msra.mxu0 0.0
        %522 = vmatprep.subr.mxu0 0.0
        %523 = vmatpush1.msra.mxu0 0.0
        %524 = vmatprep.subr.mxu0 0.0
        %525 = vmatpush1.msra.mxu0 0.0
        %526 = vmatprep.subr.mxu0 0.0
        %527 = vmatpush1.msra.mxu0 0.0
        %528 = vmatprep.subr.mxu0 0.0
        %529 = vmatpush1.msra.mxu0 0.0
        %530 = vmatprep.subr.mxu0 0.0
        %531 = vmatpush1.msra.mxu0 0.0
        %532 = vmatprep.subr.mxu0 0.0
        %533 = vmatpush1.msra.mxu0 0.0
        %534 = vmatprep.subr.mxu0 0.0
        %535 = vmatpush1.msra.mxu0 0.0
        %536 = vmatprep.subr.mxu0 0.0
        %537 = vmatpush1.msra.mxu0 0.0
        %538 = vmatprep.subr.mxu0 0.0
        %539 = vmatpush1.msra.mxu0 0.0
        %540 = vmatprep.subr.mxu0 0.0
        %541 = vmatpush1.msra.mxu0 0.0
        %542 = vmatprep.subr.mxu0 0.0
        %543 = vmatpush1.msra.mxu0 0.0
        %544 = vmatprep.subr.mxu0 0.0
        %545 = vmatpush1.msra.mxu0 0.0
        %546 = vmatprep.subr.mxu0 0.0
        %547 = vmatpush1.msra.mxu0 0.0
        %548 = vmatprep.subr.mxu0 0.0
        %549 = vmatpush1.msra.mxu0 0.0
        %550 = vmatprep.subr.mxu0 0.0
        %551 = vmatpush1.msra.mxu0 0.0
        %552 = vmatprep.subr.mxu0 0.0
        %553 = vmatpush1.msra.mxu0 0.0
        %554 = vmatprep.subr.mxu0 0.0
        %555 = vmatpush1.msra.mxu0 0.0
        %556 = vmatprep.subr.mxu0 0.0
        %557 = vmatpush1.msra.mxu0 0.0
        %558 = vmatprep.subr.mxu0 0.0
        %559 = vmatpush1.msra.mxu0 0.0
        %560 = vmatprep.subr.mxu0 0.0
        %561 = vmatpush1.msra.mxu0 0.0
        %562 = vmatprep.mubr.f32.mxu0 0.0
        %563 = vmatmul.mubr.f32.gmra.mrb[0].mxu0 %v490
        %v564 = vpop.f32.mrb[0].mxu0
        %v565 = vadd.f32 %v487, %v564
        %v566 = vpop.f32.mrb[0].mxu0
        %567 = vmatprep.mubr.f32.mxu0 0.0
        %568 = vmatmul.mubr.f32.gmra.mrb[0].mxu0 %v493
        %v569 = vpop.f32.mrb[0].mxu0
        %v570 = vadd.f32 %v487, %v569
        %v571 = vpop.f32.mrb[0].mxu0
        %572 = vmatprep.mubr.f32.mxu0 0.0
        %573 = vmatmul.mubr.f32.gmra.mrb[0].mxu0 %v496
        %v574 = vpop.f32.mrb[0].mxu0
        %v575 = vadd.f32 %v487, %v574
        %v576 = vpop.f32.mrb[0].mxu0
        %577 = vdwg.mxu0
        %v578 = vld [vmem:[%s412] sm:$0xff]
        %v579 = vld [vmem:[#allocation12] sm:$0xff]
        %v580 = vld [vmem:[#allocation12 + $0x8] sm:$0xff]
        %v581 = vld [vmem:[#allocation12 + $0x10] sm:$0xff]
        %v582 = vld [vmem:[#allocation12 + $0x18] sm:$0xff]
        %v583 = vld [vmem:[#allocation12 + $0x20] sm:$0xff]
        %v584 = vld [vmem:[#allocation12 + $0x28] sm:$0xff]
        %v585 = vld [vmem:[#allocation12 + $0x30] sm:$0xff]
        %v586 = vld [vmem:[#allocation12 + $0x38] sm:$0xff]
        %v588 = vsel %vm488, %v578, 0
        %590 = vmatprep.subr.mxu0 0.0
        %591 = vmatpush1.msra.mxu0 %v579
        %592 = vmatprep.subr.mxu0 0.0
        %593 = vmatpush1.msra.mxu0 %v580
        %594 = vmatprep.subr.mxu0 0.0
        %595 = vmatpush1.msra.mxu0 %v581
        %596 = vmatprep.subr.mxu0 0.0
        %597 = vmatpush1.msra.mxu0 %v582
        %598 = vmatprep.subr.mxu0 0.0
        %599 = vmatpush1.msra.mxu0 %v583
        %600 = vmatprep.subr.mxu0 0.0
        %601 = vmatpush1.msra.mxu0 %v584
        %602 = vmatprep.subr.mxu0 0.0
        %603 = vmatpush1.msra.mxu0 %v585
        %604 = vmatprep.subr.mxu0 0.0
        %605 = vmatpush1.msra.mxu0 %v586
        %606 = vmatprep.subr.mxu0 0.0
        %607 = vmatpush1.msra.mxu0 0.0
        %608 = vmatprep.subr.mxu0 0.0
        %609 = vmatpush1.msra.mxu0 0.0
        %610 = vmatprep.subr.mxu0 0.0
        %611 = vmatpush1.msra.mxu0 0.0
        %612 = vmatprep.subr.mxu0 0.0
        %613 = vmatpush1.msra.mxu0 0.0
        %614 = vmatprep.subr.mxu0 0.0
        %615 = vmatpush1.msra.mxu0 0.0
        %616 = vmatprep.subr.mxu0 0.0
        %617 = vmatpush1.msra.mxu0 0.0
        %618 = vmatprep.subr.mxu0 0.0
        %619 = vmatpush1.msra.mxu0 0.0
        %620 = vmatprep.subr.mxu0 0.0
        %621 = vmatpush1.msra.mxu0 0.0
        %622 = vmatprep.subr.mxu0 0.0
        %623 = vmatpush1.msra.mxu0 0.0
        %624 = vmatprep.subr.mxu0 0.0
        %625 = vmatpush1.msra.mxu0 0.0
        %626 = vmatprep.subr.mxu0 0.0
        %627 = vmatpush1.msra.mxu0 0.0
        %628 = vmatprep.subr.mxu0 0.0
        %629 = vmatpush1.msra.mxu0 0.0
        %630 = vmatprep.subr.mxu0 0.0
        %631 = vmatpush1.msra.mxu0 0.0
        %632 = vmatprep.subr.mxu0 0.0
        %633 = vmatpush1.msra.mxu0 0.0
        %634 = vmatprep.subr.mxu0 0.0
        %635 = vmatpush1.msra.mxu0 0.0
        %636 = vmatprep.subr.mxu0 0.0
        %637 = vmatpush1.msra.mxu0 0.0
        %638 = vmatprep.subr.mxu0 0.0
        %639 = vmatpush1.msra.mxu0 0.0
        %640 = vmatprep.subr.mxu0 0.0
        %641 = vmatpush1.msra.mxu0 0.0
        %642 = vmatprep.subr.mxu0 0.0
        %643 = vmatpush1.msra.mxu0 0.0
        %644 = vmatprep.subr.mxu0 0.0
        %645 = vmatpush1.msra.mxu0 0.0
        %646 = vmatprep.subr.mxu0 0.0
        %647 = vmatpush1.msra.mxu0 0.0
        %648 = vmatprep.subr.mxu0 0.0
        %649 = vmatpush1.msra.mxu0 0.0
        %650 = vmatprep.subr.mxu0 0.0
        %651 = vmatpush1.msra.mxu0 0.0
        %652 = vmatprep.subr.mxu0 0.0
        %653 = vmatpush1.msra.mxu0 0.0
        %654 = vmatprep.mubr.f32.mxu0 0.0
        %655 = vmatmul.mubr.f32.gmra.mrb[0].mxu0 %v588
        %v656 = vpop.f32.mrb[0].mxu0
        %v657 = vadd.f32 0.0, %v656
        %v658 = vpop.f32.mrb[0].mxu0
        %659 = vdwg.mxu0
        %v660 = vmul.f32 %v565, 0.125
        %v661 = vlaneseq
        %v662 = vshrl.u32 %v661, 7
        %v663 = vsub.s32 1, %v662
        %v664 = vrot.slane %v472, %v663
        %v665 = vadd.f32 %v660, %v664
        %v666 = vlaneseq
        %v667 = vshrl.u32 %v666, 7
        %v668 = vsub.s32 2, %v667
        %v669 = vrot.slane %v472, %v668
        %v670 = vadd.f32 %v660, %v669
        %vm671 = vcmask 130048
        %v673 = vsel %vm671, %v670, 0
        %v676 = vsel %vm671, %v657, 0
        %678 = vmatprep.subr.mxu0 0.0
        %679 = vmatpush1.xpose.msra.mxu0 %v676
        %680 = vmatprep.subr.mxu0 0.0
        %681 = vmatpush1.xpose.msra.mxu0 0.0
        %682 = vmatprep.subr.mxu0 0.0
        %683 = vmatpush1.xpose.msra.mxu0 0.0
        %684 = vmatprep.subr.mxu0 0.0
        %685 = vmatpush1.xpose.msra.mxu0 0.0
        %686 = vmatprep.subr.mxu0 0.0
        %687 = vmatpush1.xpose.msra.mxu0 0.0
        %688 = vmatprep.subr.mxu0 0.0
        %689 = vmatpush1.xpose.msra.mxu0 0.0
        %690 = vmatprep.subr.mxu0 0.0
        %691 = vmatpush1.xpose.msra.mxu0 0.0
        %692 = vmatprep.subr.mxu0 0.0
        %693 = vmatpush1.xpose.msra.mxu0 0.0
        %694 = vmatprep.subr.mxu0 0.0
        %695 = vmatpush1.xpose.msra.mxu0 0.0
        %696 = vmatprep.subr.mxu0 0.0
        %697 = vmatpush1.xpose.msra.mxu0 0.0
        %698 = vmatprep.subr.mxu0 0.0
        %699 = vmatpush1.xpose.msra.mxu0 0.0
        %700 = vmatprep.subr.mxu0 0.0
        %701 = vmatpush1.xpose.msra.mxu0 0.0
        %702 = vmatprep.subr.mxu0 0.0
        %703 = vmatpush1.xpose.msra.mxu0 0.0
        %704 = vmatprep.subr.mxu0 0.0
        %705 = vmatpush1.xpose.msra.mxu0 0.0
        %706 = vmatprep.subr.mxu0 0.0
        %707 = vmatpush1.xpose.msra.mxu0 0.0
        %708 = vmatprep.subr.mxu0 0.0
        %709 = vmatpush1.xpose.msra.mxu0 0.0
        %710 = vmatprep.subr.mxu0 0.0
        %711 = vmatpush1.xpose.msra.mxu0 0.0
        %712 = vmatprep.subr.mxu0 0.0
        %713 = vmatpush1.xpose.msra.mxu0 0.0
        %714 = vmatprep.subr.mxu0 0.0
        %715 = vmatpush1.xpose.msra.mxu0 0.0
        %716 = vmatprep.subr.mxu0 0.0
        %717 = vmatpush1.xpose.msra.mxu0 0.0
        %718 = vmatprep.subr.mxu0 0.0
        %719 = vmatpush1.xpose.msra.mxu0 0.0
        %720 = vmatprep.subr.mxu0 0.0
        %721 = vmatpush1.xpose.msra.mxu0 0.0
        %722 = vmatprep.subr.mxu0 0.0
        %723 = vmatpush1.xpose.msra.mxu0 0.0
        %724 = vmatprep.subr.mxu0 0.0
        %725 = vmatpush1.xpose.msra.mxu0 0.0
        %726 = vmatprep.subr.mxu0 0.0
        %727 = vmatpush1.xpose.msra.mxu0 0.0
        %728 = vmatprep.subr.mxu0 0.0
        %729 = vmatpush1.xpose.msra.mxu0 0.0
        %730 = vmatprep.subr.mxu0 0.0
        %731 = vmatpush1.xpose.msra.mxu0 0.0
        %732 = vmatprep.subr.mxu0 0.0
        %733 = vmatpush1.xpose.msra.mxu0 0.0
        %734 = vmatprep.subr.mxu0 0.0
        %735 = vmatpush1.xpose.msra.mxu0 0.0
        %736 = vmatprep.subr.mxu0 0.0
        %737 = vmatpush1.xpose.msra.mxu0 0.0
        %738 = vmatprep.subr.mxu0 0.0
        %739 = vmatpush1.xpose.msra.mxu0 0.0
        %740 = vmatprep.subr.mxu0 0.0
        %741 = vmatpush1.xpose.msra.mxu0 0.0
        %742 = vmatprep.mubr.f32.mxu0 0.0
        %743 = vmatmul.mubr.f32.gmra.mrb[0].mxu0 %v673
        %v744 = vpop.f32.mrb[0].mxu0
        %v745 = vadd.f32 0.0, %v744
        %v746 = vpop.f32.mrb[0].mxu0
        %747 = vdwg.mxu0
        %v749 = vrot.slane %v745, 1
        %vm751 = vcmask 1046528
        %v752 = vsel %vm751, %v749, 0.0
        %754 = vrot.lane.b32.xlu0 %v752, 9
        %v755 = vpop.permute.xlu0 %754
        %vm757 = vcmask 64512
        %v758 = vsel %vm757, %v745, 0.0
        %vm759 = vcmask 72704
        %v760 = vsel %vm759, %v758, %v755
        %v761 = vlaneseq
        %v762 = vshrl.u32 %v761, 7
        %v763 = vsub.s32 7, %v762
        %765 = vrot.lane.b32.xlu0 %v760, 127
        %v766 = vpop.permute.xlu0 %765
        %768 = vrot.lane.b32.xlu0 %v760, 15
        %v769 = vpop.permute.xlu0 %768
        %vm771 = vcmask 121856
        %v772 = vsel %vm771, %v766, %v769
        %v773 = vand.u32 %v763, 1
        %vm774 = vcmp.ne.s32.totalorder %v773, 0
        %v775 = vsel %vm774, 1, 0
        %vm776 = vcmp.eq.s32.totalorder %v775, 1
        %v777 = vsel %vm776, %v772, %v760
        %779 = vrot.lane.b32.xlu0 %v777, 126
        %v780 = vpop.permute.xlu0 %779
        %782 = vrot.lane.b32.xlu0 %v777, 14
        %v783 = vpop.permute.xlu0 %782
        %vm785 = vcmask 113664
        %v786 = vsel %vm785, %v780, %v783
        %v787 = vand.u32 %v763, 2
        %vm788 = vcmp.ne.s32.totalorder %v787, 0
        %v789 = vsel %vm788, 1, 0
        %vm790 = vcmp.eq.s32.totalorder %v789, 1
        %v791 = vsel %vm790, %v786, %v777
        %793 = vrot.lane.b32.xlu0 %v791, 124
        %v794 = vpop.permute.xlu0 %793
        %796 = vrot.lane.b32.xlu0 %v791, 12
        %v797 = vpop.permute.xlu0 %796
        %vm799 = vcmask 97280
        %v800 = vsel %vm799, %v794, %v797
        %v801 = vand.u32 %v763, 4
        %vm802 = vcmp.ne.s32.totalorder %v801, 0
        %v803 = vsel %vm802, 1, 0
        %vm804 = vcmp.eq.s32.totalorder %v803, 1
        %v805 = vsel %vm804, %v800, %v791
        %v807 = vsel %vm671, %v665, 0
        %v810 = vsel %vm671, %v570, 0
        %812 = vmatprep.subr.mxu0 0.0
        %813 = vmatpush1.xpose.msra.mxu0 %v810
        %814 = vmatprep.subr.mxu0 0.0
        %815 = vmatpush1.xpose.msra.mxu0 0.0
        %816 = vmatprep.subr.mxu0 0.0
        %817 = vmatpush1.xpose.msra.mxu0 0.0
        %818 = vmatprep.subr.mxu0 0.0
        %819 = vmatpush1.xpose.msra.mxu0 0.0
        %820 = vmatprep.subr.mxu0 0.0
        %821 = vmatpush1.xpose.msra.mxu0 0.0
        %822 = vmatprep.subr.mxu0 0.0
        %823 = vmatpush1.xpose.msra.mxu0 0.0
        %824 = vmatprep.subr.mxu0 0.0
        %825 = vmatpush1.xpose.msra.mxu0 0.0
        %826 = vmatprep.subr.mxu0 0.0
        %827 = vmatpush1.xpose.msra.mxu0 0.0
        %828 = vmatprep.subr.mxu0 0.0
        %829 = vmatpush1.xpose.msra.mxu0 0.0
        %830 = vmatprep.subr.mxu0 0.0
        %831 = vmatpush1.xpose.msra.mxu0 0.0
        %832 = vmatprep.subr.mxu0 0.0
        %833 = vmatpush1.xpose.msra.mxu0 0.0
        %834 = vmatprep.subr.mxu0 0.0
        %835 = vmatpush1.xpose.msra.mxu0 0.0
        %836 = vmatprep.subr.mxu0 0.0
        %837 = vmatpush1.xpose.msra.mxu0 0.0
        %838 = vmatprep.subr.mxu0 0.0
        %839 = vmatpush1.xpose.msra.mxu0 0.0
        %840 = vmatprep.subr.mxu0 0.0
        %841 = vmatpush1.xpose.msra.mxu0 0.0
        %842 = vmatprep.subr.mxu0 0.0
        %843 = vmatpush1.xpose.msra.mxu0 0.0
        %844 = vmatprep.subr.mxu0 0.0
        %845 = vmatpush1.xpose.msra.mxu0 0.0
        %846 = vmatprep.subr.mxu0 0.0
        %847 = vmatpush1.xpose.msra.mxu0 0.0
        %848 = vmatprep.subr.mxu0 0.0
        %849 = vmatpush1.xpose.msra.mxu0 0.0
        %850 = vmatprep.subr.mxu0 0.0
        %851 = vmatpush1.xpose.msra.mxu0 0.0
        %852 = vmatprep.subr.mxu0 0.0
        %853 = vmatpush1.xpose.msra.mxu0 0.0
        %854 = vmatprep.subr.mxu0 0.0
        %855 = vmatpush1.xpose.msra.mxu0 0.0
        %856 = vmatprep.subr.mxu0 0.0
        %857 = vmatpush1.xpose.msra.mxu0 0.0
        %858 = vmatprep.subr.mxu0 0.0
        %859 = vmatpush1.xpose.msra.mxu0 0.0
        %860 = vmatprep.subr.mxu0 0.0
        %861 = vmatpush1.xpose.msra.mxu0 0.0
        %862 = vmatprep.subr.mxu0 0.0
        %863 = vmatpush1.xpose.msra.mxu0 0.0
        %864 = vmatprep.subr.mxu0 0.0
        %865 = vmatpush1.xpose.msra.mxu0 0.0
        %866 = vmatprep.subr.mxu0 0.0
        %867 = vmatpush1.xpose.msra.mxu0 0.0
        %868 = vmatprep.subr.mxu0 0.0
        %869 = vmatpush1.xpose.msra.mxu0 0.0
        %870 = vmatprep.subr.mxu0 0.0
        %871 = vmatpush1.xpose.msra.mxu0 0.0
        %872 = vmatprep.subr.mxu0 0.0
        %873 = vmatpush1.xpose.msra.mxu0 0.0
        %874 = vmatprep.subr.mxu0 0.0
        %875 = vmatpush1.xpose.msra.mxu0 0.0
        %876 = vmatprep.mubr.f32.mxu0 0.0
        %877 = vmatmul.mubr.f32.gmra.mrb[0].mxu0 %v807
        %v878 = vpop.f32.mrb[0].mxu0
        %v879 = vadd.f32 %v805, %v878
        %v880 = vpop.f32.mrb[0].mxu0
        %881 = vdwg.mxu0
        %v882 = vsel %vm757, %v879, -inf
        %883 = vmax.xlane.f32.xlu0 %v882
        %v884 = vpop.xlane.xlu0 %883
        %v885 = vsub.f32 %v879, %v884
        %v886 = vmul.f32 %v885, 1.442695
        %v887 = vpow.pop %v886
        %v888 = vsel %vm757, %v887, 0.0
        %889 = vadd.xlane.f32.xlu0 %v888
        %v890 = vpop.xlane.xlu0 %889
        %v891 = vrcp.pop %v890
        %v892 = vmul.f32 %v887, %v891
        %v894 = vsel %vm757, %v892, 0
        %896 = vmatprep.subr.mxu0 0.0
        %897 = vmatpush1.msra.mxu0 %v575
        %898 = vmatprep.subr.mxu0 0.0
        %899 = vmatpush1.msra.mxu0 0.0
        %900 = vmatprep.subr.mxu0 0.0
        %901 = vmatpush1.msra.mxu0 0.0
        %902 = vmatprep.subr.mxu0 0.0
        %903 = vmatpush1.msra.mxu0 0.0
        %904 = vmatprep.subr.mxu0 0.0
        %905 = vmatpush1.msra.mxu0 0.0
        %906 = vmatprep.subr.mxu0 0.0
        %907 = vmatpush1.msra.mxu0 0.0
        %908 = vmatprep.subr.mxu0 0.0
        %909 = vmatpush1.msra.mxu0 0.0
        %910 = vmatprep.subr.mxu0 0.0
        %911 = vmatpush1.msra.mxu0 0.0
        %912 = vmatprep.subr.mxu0 0.0
        %913 = vmatpush1.msra.mxu0 0.0
        %914 = vmatprep.subr.mxu0 0.0
        %915 = vmatpush1.msra.mxu0 0.0
        %916 = vmatprep.subr.mxu0 0.0
        %917 = vmatpush1.msra.mxu0 0.0
        %918 = vmatprep.subr.mxu0 0.0
        %919 = vmatpush1.msra.mxu0 0.0
        %920 = vmatprep.subr.mxu0 0.0
        %921 = vmatpush1.msra.mxu0 0.0
        %922 = vmatprep.subr.mxu0 0.0
        %923 = vmatpush1.msra.mxu0 0.0
        %924 = vmatprep.subr.mxu0 0.0
        %925 = vmatpush1.msra.mxu0 0.0
        %926 = vmatprep.subr.mxu0 0.0
        %927 = vmatpush1.msra.mxu0 0.0
        %928 = vmatprep.subr.mxu0 0.0
        %929 = vmatpush1.msra.mxu0 0.0
        %930 = vmatprep.subr.mxu0 0.0
        %931 = vmatpush1.msra.mxu0 0.0
        %932 = vmatprep.subr.mxu0 0.0
        %933 = vmatpush1.msra.mxu0 0.0
        %934 = vmatprep.subr.mxu0 0.0
        %935 = vmatpush1.msra.mxu0 0.0
        %936 = vmatprep.subr.mxu0 0.0
        %937 = vmatpush1.msra.mxu0 0.0
        %938 = vmatprep.subr.mxu0 0.0
        %939 = vmatpush1.msra.mxu0 0.0
        %940 = vmatprep.subr.mxu0 0.0
        %941 = vmatpush1.msra.mxu0 0.0
        %942 = vmatprep.subr.mxu0 0.0
        %943 = vmatpush1.msra.mxu0 0.0
        %944 = vmatprep.subr.mxu0 0.0
        %945 = vmatpush1.msra.mxu0 0.0
        %946 = vmatprep.subr.mxu0 0.0
        %947 = vmatpush1.msra.mxu0 0.0
        %948 = vmatprep.subr.mxu0 0.0
        %949 = vmatpush1.msra.mxu0 0.0
        %950 = vmatprep.subr.mxu0 0.0
        %951 = vmatpush1.msra.mxu0 0.0
        %952 = vmatprep.subr.mxu0 0.0
        %953 = vmatpush1.msra.mxu0 0.0
        %954 = vmatprep.subr.mxu0 0.0
        %955 = vmatpush1.msra.mxu0 0.0
        %956 = vmatprep.subr.mxu0 0.0
        %957 = vmatpush1.msra.mxu0 0.0
        %958 = vmatprep.subr.mxu0 0.0
        %959 = vmatpush1.msra.mxu0 0.0
        %960 = vmatprep.mubr.f32.mxu0 0.0
        %961 = vmatmul.mubr.f32.gmra.mrb[0].mxu0 %v894
        %v962 = vpop.f32.mrb[0].mxu0
        %v963 = vadd.f32 0.0, %v962
        %v964 = vpop.f32.mrb[0].mxu0
        %965 = vdwg.mxu0
        %966 = vst.msk [vmem:[#allocation2] sm:$0xff] %vm671, %v963
        %967 = vrot.lane.b32.xlu0 %v670, 112
        %v968 = vpop.permute.xlu0 %967
        %969 = vrot.lane.b32.xlu0 %v657, 112
        %v970 = vpop.permute.xlu0 %969
        %v971 = vsel %vm671, %v968, 0
        %v973 = vsel %vm671, %v970, 0
        %975 = vmatprep.subr.mxu0 0.0
        %976 = vmatpush1.xpose.msra.mxu0 %v973
        %977 = vmatprep.subr.mxu0 0.0
        %978 = vmatpush1.xpose.msra.mxu0 0.0
        %979 = vmatprep.subr.mxu0 0.0
        %980 = vmatpush1.xpose.msra.mxu0 0.0
        %981 = vmatprep.subr.mxu0 0.0
        %982 = vmatpush1.xpose.msra.mxu0 0.0
        %983 = vmatprep.subr.mxu0 0.0
        %984 = vmatpush1.xpose.msra.mxu0 0.0
        %985 = vmatprep.subr.mxu0 0.0
        %986 = vmatpush1.xpose.msra.mxu0 0.0
        %987 = vmatprep.subr.mxu0 0.0
        %988 = vmatpush1.xpose.msra.mxu0 0.0
        %989 = vmatprep.subr.mxu0 0.0
        %990 = vmatpush1.xpose.msra.mxu0 0.0
        %991 = vmatprep.subr.mxu0 0.0
        %992 = vmatpush1.xpose.msra.mxu0 0.0
        %993 = vmatprep.subr.mxu0 0.0
        %994 = vmatpush1.xpose.msra.mxu0 0.0
        %995 = vmatprep.subr.mxu0 0.0
        %996 = vmatpush1.xpose.msra.mxu0 0.0
        %997 = vmatprep.subr.mxu0 0.0
        %998 = vmatpush1.xpose.msra.mxu0 0.0
        %999 = vmatprep.subr.mxu0 0.0
        %1000 = vmatpush1.xpose.msra.mxu0 0.0
        %1001 = vmatprep.subr.mxu0 0.0
        %1002 = vmatpush1.xpose.msra.mxu0 0.0
        %1003 = vmatprep.subr.mxu0 0.0
        %1004 = vmatpush1.xpose.msra.mxu0 0.0
        %1005 = vmatprep.subr.mxu0 0.0
        %1006 = vmatpush1.xpose.msra.mxu0 0.0
        %1007 = vmatprep.subr.mxu0 0.0
        %1008 = vmatpush1.xpose.msra.mxu0 0.0
        %1009 = vmatprep.subr.mxu0 0.0
        %1010 = vmatpush1.xpose.msra.mxu0 0.0
        %1011 = vmatprep.subr.mxu0 0.0
        %1012 = vmatpush1.xpose.msra.mxu0 0.0
        %1013 = vmatprep.subr.mxu0 0.0
        %1014 = vmatpush1.xpose.msra.mxu0 0.0
        %1015 = vmatprep.subr.mxu0 0.0
        %1016 = vmatpush1.xpose.msra.mxu0 0.0
        %1017 = vmatprep.subr.mxu0 0.0
        %1018 = vmatpush1.xpose.msra.mxu0 0.0
        %1019 = vmatprep.subr.mxu0 0.0
        %1020 = vmatpush1.xpose.msra.mxu0 0.0
        %1021 = vmatprep.subr.mxu0 0.0
        %1022 = vmatpush1.xpose.msra.mxu0 0.0
        %1023 = vmatprep.subr.mxu0 0.0
        %1024 = vmatpush1.xpose.msra.mxu0 0.0
        %1025 = vmatprep.subr.mxu0 0.0
        %1026 = vmatpush1.xpose.msra.mxu0 0.0
        %1027 = vmatprep.subr.mxu0 0.0
        %1028 = vmatpush1.xpose.msra.mxu0 0.0
        %1029 = vmatprep.subr.mxu0 0.0
        %1030 = vmatpush1.xpose.msra.mxu0 0.0
        %1031 = vmatprep.subr.mxu0 0.0
        %1032 = vmatpush1.xpose.msra.mxu0 0.0
        %1033 = vmatprep.subr.mxu0 0.0
        %1034 = vmatpush1.xpose.msra.mxu0 0.0
        %1035 = vmatprep.subr.mxu0 0.0
        %1036 = vmatpush1.xpose.msra.mxu0 0.0
        %1037 = vmatprep.subr.mxu0 0.0
        %1038 = vmatpush1.xpose.msra.mxu0 0.0
        %1039 = vmatprep.mubr.f32.mxu0 0.0
        %1040 = vmatmul.mubr.f32.gmra.mrb[0].mxu0 %v971
        %v1041 = vpop.f32.mrb[0].mxu0
        %v1042 = vadd.f32 0.0, %v1041
        %v1043 = vpop.f32.mrb[0].mxu0
        %1044 = vdwg.mxu0
        %v1046 = vrot.slane %v1042, 1
        %v1048 = vsel %vm751, %v1046, 0.0
        %1050 = vrot.lane.b32.xlu0 %v1048, 9
        %v1051 = vpop.permute.xlu0 %1050
        %v1053 = vsel %vm757, %v1042, 0.0
        %v1054 = vsel %vm759, %v1053, %v1051
        %1056 = vrot.lane.b32.xlu0 %v1054, 127
        %v1057 = vpop.permute.xlu0 %1056
        %1059 = vrot.lane.b32.xlu0 %v1054, 15
        %v1060 = vpop.permute.xlu0 %1059
        %v1062 = vsel %vm771, %v1057, %v1060
        %v1063 = vsel %vm776, %v1062, %v1054
        %1065 = vrot.lane.b32.xlu0 %v1063, 126
        %v1066 = vpop.permute.xlu0 %1065
        %1068 = vrot.lane.b32.xlu0 %v1063, 14
        %v1069 = vpop.permute.xlu0 %1068
        %v1071 = vsel %vm785, %v1066, %v1069
        %v1072 = vsel %vm790, %v1071, %v1063
        %1074 = vrot.lane.b32.xlu0 %v1072, 124
        %v1075 = vpop.permute.xlu0 %1074
        %1077 = vrot.lane.b32.xlu0 %v1072, 12
        %v1078 = vpop.permute.xlu0 %1077
        %v1080 = vsel %vm799, %v1075, %v1078
        %v1081 = vsel %vm804, %v1080, %v1072
        %1082 = vrot.lane.b32.xlu0 %v665, 112
        %v1083 = vpop.permute.xlu0 %1082
        %1084 = vrot.lane.b32.xlu0 %v570, 112
        %v1085 = vpop.permute.xlu0 %1084
        %v1086 = vsel %vm671, %v1083, 0
        %v1088 = vsel %vm671, %v1085, 0
        %1090 = vmatprep.subr.mxu0 0.0
        %1091 = vmatpush1.xpose.msra.mxu0 %v1088
        %1092 = vmatprep.subr.mxu0 0.0
        %1093 = vmatpush1.xpose.msra.mxu0 0.0
        %1094 = vmatprep.subr.mxu0 0.0
        %1095 = vmatpush1.xpose.msra.mxu0 0.0
        %1096 = vmatprep.subr.mxu0 0.0
        %1097 = vmatpush1.xpose.msra.mxu0 0.0
        %1098 = vmatprep.subr.mxu0 0.0
        %1099 = vmatpush1.xpose.msra.mxu0 0.0
        %1100 = vmatprep.subr.mxu0 0.0
        %1101 = vmatpush1.xpose.msra.mxu0 0.0
        %1102 = vmatprep.subr.mxu0 0.0
        %1103 = vmatpush1.xpose.msra.mxu0 0.0
        %1104 = vmatprep.subr.mxu0 0.0
        %1105 = vmatpush1.xpose.msra.mxu0 0.0
        %1106 = vmatprep.subr.mxu0 0.0
        %1107 = vmatpush1.xpose.msra.mxu0 0.0
        %1108 = vmatprep.subr.mxu0 0.0
        %1109 = vmatpush1.xpose.msra.mxu0 0.0
        %1110 = vmatprep.subr.mxu0 0.0
        %1111 = vmatpush1.xpose.msra.mxu0 0.0
        %1112 = vmatprep.subr.mxu0 0.0
        %1113 = vmatpush1.xpose.msra.mxu0 0.0
        %1114 = vmatprep.subr.mxu0 0.0
        %1115 = vmatpush1.xpose.msra.mxu0 0.0
        %1116 = vmatprep.subr.mxu0 0.0
        %1117 = vmatpush1.xpose.msra.mxu0 0.0
        %1118 = vmatprep.subr.mxu0 0.0
        %1119 = vmatpush1.xpose.msra.mxu0 0.0
        %1120 = vmatprep.subr.mxu0 0.0
        %1121 = vmatpush1.xpose.msra.mxu0 0.0
        %1122 = vmatprep.subr.mxu0 0.0
        %1123 = vmatpush1.xpose.msra.mxu0 0.0
        %1124 = vmatprep.subr.mxu0 0.0
        %1125 = vmatpush1.xpose.msra.mxu0 0.0
        %1126 = vmatprep.subr.mxu0 0.0
        %1127 = vmatpush1.xpose.msra.mxu0 0.0
        %1128 = vmatprep.subr.mxu0 0.0
        %1129 = vmatpush1.xpose.msra.mxu0 0.0
        %1130 = vmatprep.subr.mxu0 0.0
        %1131 = vmatpush1.xpose.msra.mxu0 0.0
        %1132 = vmatprep.subr.mxu0 0.0
        %1133 = vmatpush1.xpose.msra.mxu0 0.0
        %1134 = vmatprep.subr.mxu0 0.0
        %1135 = vmatpush1.xpose.msra.mxu0 0.0
        %1136 = vmatprep.subr.mxu0 0.0
        %1137 = vmatpush1.xpose.msra.mxu0 0.0
        %1138 = vmatprep.subr.mxu0 0.0
        %1139 = vmatpush1.xpose.msra.mxu0 0.0
        %1140 = vmatprep.subr.mxu0 0.0
        %1141 = vmatpush1.xpose.msra.mxu0 0.0
        %1142 = vmatprep.subr.mxu0 0.0
        %1143 = vmatpush1.xpose.msra.mxu0 0.0
        %1144 = vmatprep.subr.mxu0 0.0
        %1145 = vmatpush1.xpose.msra.mxu0 0.0
        %1146 = vmatprep.subr.mxu0 0.0
        %1147 = vmatpush1.xpose.msra.mxu0 0.0
        %1148 = vmatprep.subr.mxu0 0.0
        %1149 = vmatpush1.xpose.msra.mxu0 0.0
        %1150 = vmatprep.subr.mxu0 0.0
        %1151 = vmatpush1.xpose.msra.mxu0 0.0
        %1152 = vmatprep.subr.mxu0 0.0
        %1153 = vmatpush1.xpose.msra.mxu0 0.0
        %1154 = vmatprep.mubr.f32.mxu0 0.0
        %1155 = vmatmul.mubr.f32.gmra.mrb[0].mxu0 %v1086
        %v1156 = vpop.f32.mrb[0].mxu0
        %v1157 = vadd.f32 %v1081, %v1156
        %v1158 = vpop.f32.mrb[0].mxu0
        %1159 = vdwg.mxu0
        %v1160 = vsel %vm757, %v1157, -inf
        %1161 = vmax.xlane.f32.xlu0 %v1160
        %v1162 = vpop.xlane.xlu0 %1161
        %v1163 = vsub.f32 %v1157, %v1162
        %v1164 = vmul.f32 %v1163, 1.442695
        %v1165 = vpow.pop %v1164
        %v1166 = vsel %vm757, %v1165, 0.0
        %1167 = vadd.xlane.f32.xlu0 %v1166
        %v1168 = vpop.xlane.xlu0 %1167
        %v1169 = vrcp.pop %v1168
        %v1170 = vmul.f32 %v1165, %v1169
        %1172 = vrot.lane.b32.xlu0 %v575, 112
        %v1173 = vpop.permute.xlu0 %1172
        %v1176 = vsel %vm757, %v1170, 0
        %1178 = vmatprep.subr.mxu0 0.0
        %1179 = vmatpush1.msra.mxu0 %v1173
        %1180 = vmatprep.subr.mxu0 0.0
        %1181 = vmatpush1.msra.mxu0 0.0
        %1182 = vmatprep.subr.mxu0 0.0
        %1183 = vmatpush1.msra.mxu0 0.0
        %1184 = vmatprep.subr.mxu0 0.0
        %1185 = vmatpush1.msra.mxu0 0.0
        %1186 = vmatprep.subr.mxu0 0.0
        %1187 = vmatpush1.msra.mxu0 0.0
        %1188 = vmatprep.subr.mxu0 0.0
        %1189 = vmatpush1.msra.mxu0 0.0
        %1190 = vmatprep.subr.mxu0 0.0
        %1191 = vmatpush1.msra.mxu0 0.0
        %1192 = vmatprep.subr.mxu0 0.0
        %1193 = vmatpush1.msra.mxu0 0.0
        %1194 = vmatprep.subr.mxu0 0.0
        %1195 = vmatpush1.msra.mxu0 0.0
        %1196 = vmatprep.subr.mxu0 0.0
        %1197 = vmatpush1.msra.mxu0 0.0
        %1198 = vmatprep.subr.mxu0 0.0
        %1199 = vmatpush1.msra.mxu0 0.0
        %1200 = vmatprep.subr.mxu0 0.0
        %1201 = vmatpush1.msra.mxu0 0.0
        %1202 = vmatprep.subr.mxu0 0.0
        %1203 = vmatpush1.msra.mxu0 0.0
        %1204 = vmatprep.subr.mxu0 0.0
        %1205 = vmatpush1.msra.mxu0 0.0
        %1206 = vmatprep.subr.mxu0 0.0
        %1207 = vmatpush1.msra.mxu0 0.0
        %1208 = vmatprep.subr.mxu0 0.0
        %1209 = vmatpush1.msra.mxu0 0.0
        %1210 = vmatprep.subr.mxu0 0.0
        %1211 = vmatpush1.msra.mxu0 0.0
        %1212 = vmatprep.subr.mxu0 0.0
        %1213 = vmatpush1.msra.mxu0 0.0
        %1214 = vmatprep.subr.mxu0 0.0
        %1215 = vmatpush1.msra.mxu0 0.0
        %1216 = vmatprep.subr.mxu0 0.0
        %1217 = vmatpush1.msra.mxu0 0.0
        %1218 = vmatprep.subr.mxu0 0.0
        %1219 = vmatpush1.msra.mxu0 0.0
        %1220 = vmatprep.subr.mxu0 0.0
        %1221 = vmatpush1.msra.mxu0 0.0
        %1222 = vmatprep.subr.mxu0 0.0
        %1223 = vmatpush1.msra.mxu0 0.0
        %1224 = vmatprep.subr.mxu0 0.0
        %1225 = vmatpush1.msra.mxu0 0.0
        %1226 = vmatprep.subr.mxu0 0.0
        %1227 = vmatpush1.msra.mxu0 0.0
        %1228 = vmatprep.subr.mxu0 0.0
        %1229 = vmatpush1.msra.mxu0 0.0
        %1230 = vmatprep.subr.mxu0 0.0
        %1231 = vmatpush1.msra.mxu0 0.0
        %1232 = vmatprep.subr.mxu0 0.0
        %1233 = vmatpush1.msra.mxu0 0.0
        %1234 = vmatprep.subr.mxu0 0.0
        %1235 = vmatpush1.msra.mxu0 0.0
        %1236 = vmatprep.subr.mxu0 0.0
        %1237 = vmatpush1.msra.mxu0 0.0
        %1238 = vmatprep.subr.mxu0 0.0
        %1239 = vmatpush1.msra.mxu0 0.0
        %1240 = vmatprep.subr.mxu0 0.0
        %1241 = vmatpush1.msra.mxu0 0.0
        %1242 = vmatprep.mubr.f32.mxu0 0.0
        %1243 = vmatmul.mubr.f32.gmra.mrb[0].mxu0 %v1176
        %v1244 = vpop.f32.mrb[0].mxu0
        %v1245 = vadd.f32 0.0, %v1244
        %v1246 = vpop.f32.mrb[0].mxu0
        %1247 = vdwg.mxu0
        %1249 = vrot.lane.b32.xlu0 %v1245, 16
        %v1250 = vpop.permute.xlu0 %1249
        %vm1252 = vcmask 261248
        %1253 = vst.msk [vmem:[#allocation2] sm:$0xff] %vm1252, %v1250
        %1254 = vrot.lane.b32.xlu0 %v670, 96
        %v1255 = vpop.permute.xlu0 %1254
        %1256 = vrot.lane.b32.xlu0 %v657, 96
        %v1257 = vpop.permute.xlu0 %1256
        %v1258 = vsel %vm671, %v1255, 0
        %v1260 = vsel %vm671, %v1257, 0
        %1262 = vmatprep.subr.mxu0 0.0
        %1263 = vmatpush1.xpose.msra.mxu0 %v1260
        %1264 = vmatprep.subr.mxu0 0.0
        %1265 = vmatpush1.xpose.msra.mxu0 0.0
        %1266 = vmatprep.subr.mxu0 0.0
        %1267 = vmatpush1.xpose.msra.mxu0 0.0
        %1268 = vmatprep.subr.mxu0 0.0
        %1269 = vmatpush1.xpose.msra.mxu0 0.0
        %1270 = vmatprep.subr.mxu0 0.0
        %1271 = vmatpush1.xpose.msra.mxu0 0.0
        %1272 = vmatprep.subr.mxu0 0.0
        %1273 = vmatpush1.xpose.msra.mxu0 0.0
        %1274 = vmatprep.subr.mxu0 0.0
        %1275 = vmatpush1.xpose.msra.mxu0 0.0
        %1276 = vmatprep.subr.mxu0 0.0
        %1277 = vmatpush1.xpose.msra.mxu0 0.0
        %1278 = vmatprep.subr.mxu0 0.0
        %1279 = vmatpush1.xpose.msra.mxu0 0.0
        %1280 = vmatprep.subr.mxu0 0.0
        %1281 = vmatpush1.xpose.msra.mxu0 0.0
        %1282 = vmatprep.subr.mxu0 0.0
        %1283 = vmatpush1.xpose.msra.mxu0 0.0
        %1284 = vmatprep.subr.mxu0 0.0
        %1285 = vmatpush1.xpose.msra.mxu0 0.0
        %1286 = vmatprep.subr.mxu0 0.0
        %1287 = vmatpush1.xpose.msra.mxu0 0.0
        %1288 = vmatprep.subr.mxu0 0.0
        %1289 = vmatpush1.xpose.msra.mxu0 0.0
        %1290 = vmatprep.subr.mxu0 0.0
        %1291 = vmatpush1.xpose.msra.mxu0 0.0
        %1292 = vmatprep.subr.mxu0 0.0
        %1293 = vmatpush1.xpose.msra.mxu0 0.0
        %1294 = vmatprep.subr.mxu0 0.0
        %1295 = vmatpush1.xpose.msra.mxu0 0.0
        %1296 = vmatprep.subr.mxu0 0.0
        %1297 = vmatpush1.xpose.msra.mxu0 0.0
        %1298 = vmatprep.subr.mxu0 0.0
        %1299 = vmatpush1.xpose.msra.mxu0 0.0
        %1300 = vmatprep.subr.mxu0 0.0
        %1301 = vmatpush1.xpose.msra.mxu0 0.0
        %1302 = vmatprep.subr.mxu0 0.0
        %1303 = vmatpush1.xpose.msra.mxu0 0.0
        %1304 = vmatprep.subr.mxu0 0.0
        %1305 = vmatpush1.xpose.msra.mxu0 0.0
        %1306 = vmatprep.subr.mxu0 0.0
        %1307 = vmatpush1.xpose.msra.mxu0 0.0
        %1308 = vmatprep.subr.mxu0 0.0
        %1309 = vmatpush1.xpose.msra.mxu0 0.0
        %1310 = vmatprep.subr.mxu0 0.0
        %1311 = vmatpush1.xpose.msra.mxu0 0.0
        %1312 = vmatprep.subr.mxu0 0.0
        %1313 = vmatpush1.xpose.msra.mxu0 0.0
        %1314 = vmatprep.subr.mxu0 0.0
        %1315 = vmatpush1.xpose.msra.mxu0 0.0
        %1316 = vmatprep.subr.mxu0 0.0
        %1317 = vmatpush1.xpose.msra.mxu0 0.0
        %1318 = vmatprep.subr.mxu0 0.0
        %1319 = vmatpush1.xpose.msra.mxu0 0.0
        %1320 = vmatprep.subr.mxu0 0.0
        %1321 = vmatpush1.xpose.msra.mxu0 0.0
        %1322 = vmatprep.subr.mxu0 0.0
        %1323 = vmatpush1.xpose.msra.mxu0 0.0
        %1324 = vmatprep.subr.mxu0 0.0
        %1325 = vmatpush1.xpose.msra.mxu0 0.0
        %1326 = vmatprep.mubr.f32.mxu0 0.0
        %1327 = vmatmul.mubr.f32.gmra.mrb[0].mxu0 %v1258
        %v1328 = vpop.f32.mrb[0].mxu0
        %v1329 = vadd.f32 0.0, %v1328
        %v1330 = vpop.f32.mrb[0].mxu0
        %1331 = vdwg.mxu0
        %v1333 = vrot.slane %v1329, 1
        %v1335 = vsel %vm751, %v1333, 0.0
        %1337 = vrot.lane.b32.xlu0 %v1335, 9
        %v1338 = vpop.permute.xlu0 %1337
        %v1340 = vsel %vm757, %v1329, 0.0
        %v1341 = vsel %vm759, %v1340, %v1338
        %1343 = vrot.lane.b32.xlu0 %v1341, 127
        %v1344 = vpop.permute.xlu0 %1343
        %1346 = vrot.lane.b32.xlu0 %v1341, 15
        %v1347 = vpop.permute.xlu0 %1346
        %v1349 = vsel %vm771, %v1344, %v1347
        %v1350 = vsel %vm776, %v1349, %v1341
        %1352 = vrot.lane.b32.xlu0 %v1350, 126
        %v1353 = vpop.permute.xlu0 %1352
        %1355 = vrot.lane.b32.xlu0 %v1350, 14
        %v1356 = vpop.permute.xlu0 %1355
        %v1358 = vsel %vm785, %v1353, %v1356
        %v1359 = vsel %vm790, %v1358, %v1350
        %1361 = vrot.lane.b32.xlu0 %v1359, 124
        %v1362 = vpop.permute.xlu0 %1361
        %1364 = vrot.lane.b32.xlu0 %v1359, 12
        %v1365 = vpop.permute.xlu0 %1364
        %v1367 = vsel %vm799, %v1362, %v1365
        %v1368 = vsel %vm804, %v1367, %v1359
        %1369 = vrot.lane.b32.xlu0 %v665, 96
        %v1370 = vpop.permute.xlu0 %1369
        %1371 = vrot.lane.b32.xlu0 %v570, 96
        %v1372 = vpop.permute.xlu0 %1371
        %v1373 = vsel %vm671, %v1370, 0
        %v1375 = vsel %vm671, %v1372, 0
        %1377 = vmatprep.subr.mxu0 0.0
        %1378 = vmatpush1.xpose.msra.mxu0 %v1375
        %1379 = vmatprep.subr.mxu0 0.0
        %1380 = vmatpush1.xpose.msra.mxu0 0.0
        %1381 = vmatprep.subr.mxu0 0.0
        %1382 = vmatpush1.xpose.msra.mxu0 0.0
        %1383 = vmatprep.subr.mxu0 0.0
        %1384 = vmatpush1.xpose.msra.mxu0 0.0
        %1385 = vmatprep.subr.mxu0 0.0
        %1386 = vmatpush1.xpose.msra.mxu0 0.0
        %1387 = vmatprep.subr.mxu0 0.0
        %1388 = vmatpush1.xpose.msra.mxu0 0.0
        %1389 = vmatprep.subr.mxu0 0.0
        %1390 = vmatpush1.xpose.msra.mxu0 0.0
        %1391 = vmatprep.subr.mxu0 0.0
        %1392 = vmatpush1.xpose.msra.mxu0 0.0
        %1393 = vmatprep.subr.mxu0 0.0
        %1394 = vmatpush1.xpose.msra.mxu0 0.0
        %1395 = vmatprep.subr.mxu0 0.0
        %1396 = vmatpush1.xpose.msra.mxu0 0.0
        %1397 = vmatprep.subr.mxu0 0.0
        %1398 = vmatpush1.xpose.msra.mxu0 0.0
        %1399 = vmatprep.subr.mxu0 0.0
        %1400 = vmatpush1.xpose.msra.mxu0 0.0
        %1401 = vmatprep.subr.mxu0 0.0
        %1402 = vmatpush1.xpose.msra.mxu0 0.0
        %1403 = vmatprep.subr.mxu0 0.0
        %1404 = vmatpush1.xpose.msra.mxu0 0.0
        %1405 = vmatprep.subr.mxu0 0.0
        %1406 = vmatpush1.xpose.msra.mxu0 0.0
        %1407 = vmatprep.subr.mxu0 0.0
        %1408 = vmatpush1.xpose.msra.mxu0 0.0
        %1409 = vmatprep.subr.mxu0 0.0
        %1410 = vmatpush1.xpose.msra.mxu0 0.0
        %1411 = vmatprep.subr.mxu0 0.0
        %1412 = vmatpush1.xpose.msra.mxu0 0.0
        %1413 = vmatprep.subr.mxu0 0.0
        %1414 = vmatpush1.xpose.msra.mxu0 0.0
        %1415 = vmatprep.subr.mxu0 0.0
        %1416 = vmatpush1.xpose.msra.mxu0 0.0
        %1417 = vmatprep.subr.mxu0 0.0
        %1418 = vmatpush1.xpose.msra.mxu0 0.0
        %1419 = vmatprep.subr.mxu0 0.0
        %1420 = vmatpush1.xpose.msra.mxu0 0.0
        %1421 = vmatprep.subr.mxu0 0.0
        %1422 = vmatpush1.xpose.msra.mxu0 0.0
        %1423 = vmatprep.subr.mxu0 0.0
        %1424 = vmatpush1.xpose.msra.mxu0 0.0
        %1425 = vmatprep.subr.mxu0 0.0
        %1426 = vmatpush1.xpose.msra.mxu0 0.0
        %1427 = vmatprep.subr.mxu0 0.0
        %1428 = vmatpush1.xpose.msra.mxu0 0.0
        %1429 = vmatprep.subr.mxu0 0.0
        %1430 = vmatpush1.xpose.msra.mxu0 0.0
        %1431 = vmatprep.subr.mxu0 0.0
        %1432 = vmatpush1.xpose.msra.mxu0 0.0
        %1433 = vmatprep.subr.mxu0 0.0
        %1434 = vmatpush1.xpose.msra.mxu0 0.0
        %1435 = vmatprep.subr.mxu0 0.0
        %1436 = vmatpush1.xpose.msra.mxu0 0.0
        %1437 = vmatprep.subr.mxu0 0.0
        %1438 = vmatpush1.xpose.msra.mxu0 0.0
        %1439 = vmatprep.subr.mxu0 0.0
        %1440 = vmatpush1.xpose.msra.mxu0 0.0
        %1441 = vmatprep.mubr.f32.mxu0 0.0
        %1442 = vmatmul.mubr.f32.gmra.mrb[0].mxu0 %v1373
        %v1443 = vpop.f32.mrb[0].mxu0
        %v1444 = vadd.f32 %v1368, %v1443
        %v1445 = vpop.f32.mrb[0].mxu0
        %1446 = vdwg.mxu0
        %v1447 = vsel %vm757, %v1444, -inf
        %1448 = vmax.xlane.f32.xlu0 %v1447
        %v1449 = vpop.xlane.xlu0 %1448
        %v1450 = vsub.f32 %v1444, %v1449
        %v1451 = vmul.f32 %v1450, 1.442695
        %v1452 = vpow.pop %v1451
        %v1453 = vsel %vm757, %v1452, 0.0
        %1454 = vadd.xlane.f32.xlu0 %v1453
        %v1455 = vpop.xlane.xlu0 %1454
        %v1456 = vrcp.pop %v1455
        %v1457 = vmul.f32 %v1452, %v1456
        %1458 = vrot.lane.b32.xlu0 %v575, 96
        %v1459 = vpop.permute.xlu0 %1458
        %v1462 = vsel %vm757, %v1457, 0
        %1464 = vmatprep.subr.mxu0 0.0
        %1465 = vmatpush1.msra.mxu0 %v1459
        %1466 = vmatprep.subr.mxu0 0.0
        %1467 = vmatpush1.msra.mxu0 0.0
        %1468 = vmatprep.subr.mxu0 0.0
        %1469 = vmatpush1.msra.mxu0 0.0
        %1470 = vmatprep.subr.mxu0 0.0
        %1471 = vmatpush1.msra.mxu0 0.0
        %1472 = vmatprep.subr.mxu0 0.0
        %1473 = vmatpush1.msra.mxu0 0.0
        %1474 = vmatprep.subr.mxu0 0.0
        %1475 = vmatpush1.msra.mxu0 0.0
        %1476 = vmatprep.subr.mxu0 0.0
        %1477 = vmatpush1.msra.mxu0 0.0
        %1478 = vmatprep.subr.mxu0 0.0
        %1479 = vmatpush1.msra.mxu0 0.0
        %1480 = vmatprep.subr.mxu0 0.0
        %1481 = vmatpush1.msra.mxu0 0.0
        %1482 = vmatprep.subr.mxu0 0.0
        %1483 = vmatpush1.msra.mxu0 0.0
        %1484 = vmatprep.subr.mxu0 0.0
        %1485 = vmatpush1.msra.mxu0 0.0
        %1486 = vmatprep.subr.mxu0 0.0
        %1487 = vmatpush1.msra.mxu0 0.0
        %1488 = vmatprep.subr.mxu0 0.0
        %1489 = vmatpush1.msra.mxu0 0.0
        %1490 = vmatprep.subr.mxu0 0.0
        %1491 = vmatpush1.msra.mxu0 0.0
        %1492 = vmatprep.subr.mxu0 0.0
        %1493 = vmatpush1.msra.mxu0 0.0
        %1494 = vmatprep.subr.mxu0 0.0
        %1495 = vmatpush1.msra.mxu0 0.0
        %1496 = vmatprep.subr.mxu0 0.0
        %1497 = vmatpush1.msra.mxu0 0.0
        %1498 = vmatprep.subr.mxu0 0.0
        %1499 = vmatpush1.msra.mxu0 0.0
        %1500 = vmatprep.subr.mxu0 0.0
        %1501 = vmatpush1.msra.mxu0 0.0
        %1502 = vmatprep.subr.mxu0 0.0
        %1503 = vmatpush1.msra.mxu0 0.0
        %1504 = vmatprep.subr.mxu0 0.0
        %1505 = vmatpush1.msra.mxu0 0.0
        %1506 = vmatprep.subr.mxu0 0.0
        %1507 = vmatpush1.msra.mxu0 0.0
        %1508 = vmatprep.subr.mxu0 0.0
        %1509 = vmatpush1.msra.mxu0 0.0
        %1510 = vmatprep.subr.mxu0 0.0
        %1511 = vmatpush1.msra.mxu0 0.0
        %1512 = vmatprep.subr.mxu0 0.0
        %1513 = vmatpush1.msra.mxu0 0.0
        %1514 = vmatprep.subr.mxu0 0.0
        %1515 = vmatpush1.msra.mxu0 0.0
        %1516 = vmatprep.subr.mxu0 0.0
        %1517 = vmatpush1.msra.mxu0 0.0
        %1518 = vmatprep.subr.mxu0 0.0
        %1519 = vmatpush1.msra.mxu0 0.0
        %1520 = vmatprep.subr.mxu0 0.0
        %1521 = vmatpush1.msra.mxu0 0.0
        %1522 = vmatprep.subr.mxu0 0.0
        %1523 = vmatpush1.msra.mxu0 0.0
        %1524 = vmatprep.subr.mxu0 0.0
        %1525 = vmatpush1.msra.mxu0 0.0
        %1526 = vmatprep.subr.mxu0 0.0
        %1527 = vmatpush1.msra.mxu0 0.0
        %1528 = vmatprep.mubr.f32.mxu0 0.0
        %1529 = vmatmul.mubr.f32.gmra.mrb[0].mxu0 %v1462
        %v1530 = vpop.f32.mrb[0].mxu0
        %v1531 = vadd.f32 0.0, %v1530
        %v1532 = vpop.f32.mrb[0].mxu0
        %1533 = vdwg.mxu0
        %1535 = vrot.lane.b32.xlu0 %v1531, 32
        %v1536 = vpop.permute.xlu0 %1535
        %vm1538 = vcmask 392448
        %1539 = vst.msk [vmem:[#allocation2] sm:$0xff] %vm1538, %v1536
        %1540 = vrot.lane.b32.xlu0 %v670, 80
        %v1541 = vpop.permute.xlu0 %1540
        %1542 = vrot.lane.b32.xlu0 %v657, 80
        %v1543 = vpop.permute.xlu0 %1542
        %v1544 = vsel %vm671, %v1541, 0
        %v1546 = vsel %vm671, %v1543, 0
        %1548 = vmatprep.subr.mxu0 0.0
        %1549 = vmatpush1.xpose.msra.mxu0 %v1546
        %1550 = vmatprep.subr.mxu0 0.0
        %1551 = vmatpush1.xpose.msra.mxu0 0.0
        %1552 = vmatprep.subr.mxu0 0.0
        %1553 = vmatpush1.xpose.msra.mxu0 0.0
        %1554 = vmatprep.subr.mxu0 0.0
        %1555 = vmatpush1.xpose.msra.mxu0 0.0
        %1556 = vmatprep.subr.mxu0 0.0
        %1557 = vmatpush1.xpose.msra.mxu0 0.0
        %1558 = vmatprep.subr.mxu0 0.0
        %1559 = vmatpush1.xpose.msra.mxu0 0.0
        %1560 = vmatprep.subr.mxu0 0.0
        %1561 = vmatpush1.xpose.msra.mxu0 0.0
        %1562 = vmatprep.subr.mxu0 0.0
        %1563 = vmatpush1.xpose.msra.mxu0 0.0
        %1564 = vmatprep.subr.mxu0 0.0
        %1565 = vmatpush1.xpose.msra.mxu0 0.0
        %1566 = vmatprep.subr.mxu0 0.0
        %1567 = vmatpush1.xpose.msra.mxu0 0.0
        %1568 = vmatprep.subr.mxu0 0.0
        %1569 = vmatpush1.xpose.msra.mxu0 0.0
        %1570 = vmatprep.subr.mxu0 0.0
        %1571 = vmatpush1.xpose.msra.mxu0 0.0
        %1572 = vmatprep.subr.mxu0 0.0
        %1573 = vmatpush1.xpose.msra.mxu0 0.0
        %1574 = vmatprep.subr.mxu0 0.0
        %1575 = vmatpush1.xpose.msra.mxu0 0.0
        %1576 = vmatprep.subr.mxu0 0.0
        %1577 = vmatpush1.xpose.msra.mxu0 0.0
        %1578 = vmatprep.subr.mxu0 0.0
        %1579 = vmatpush1.xpose.msra.mxu0 0.0
        %1580 = vmatprep.subr.mxu0 0.0
        %1581 = vmatpush1.xpose.msra.mxu0 0.0
        %1582 = vmatprep.subr.mxu0 0.0
        %1583 = vmatpush1.xpose.msra.mxu0 0.0
        %1584 = vmatprep.subr.mxu0 0.0
        %1585 = vmatpush1.xpose.msra.mxu0 0.0
        %1586 = vmatprep.subr.mxu0 0.0
        %1587 = vmatpush1.xpose.msra.mxu0 0.0
        %1588 = vmatprep.subr.mxu0 0.0
        %1589 = vmatpush1.xpose.msra.mxu0 0.0
        %1590 = vmatprep.subr.mxu0 0.0
        %1591 = vmatpush1.xpose.msra.mxu0 0.0
        %1592 = vmatprep.subr.mxu0 0.0
        %1593 = vmatpush1.xpose.msra.mxu0 0.0
        %1594 = vmatprep.subr.mxu0 0.0
        %1595 = vmatpush1.xpose.msra.mxu0 0.0
        %1596 = vmatprep.subr.mxu0 0.0
        %1597 = vmatpush1.xpose.msra.mxu0 0.0
        %1598 = vmatprep.subr.mxu0 0.0
        %1599 = vmatpush1.xpose.msra.mxu0 0.0
        %1600 = vmatprep.subr.mxu0 0.0
        %1601 = vmatpush1.xpose.msra.mxu0 0.0
        %1602 = vmatprep.subr.mxu0 0.0
        %1603 = vmatpush1.xpose.msra.mxu0 0.0
        %1604 = vmatprep.subr.mxu0 0.0
        %1605 = vmatpush1.xpose.msra.mxu0 0.0
        %1606 = vmatprep.subr.mxu0 0.0
        %1607 = vmatpush1.xpose.msra.mxu0 0.0
        %1608 = vmatprep.subr.mxu0 0.0
        %1609 = vmatpush1.xpose.msra.mxu0 0.0
        %1610 = vmatprep.subr.mxu0 0.0
        %1611 = vmatpush1.xpose.msra.mxu0 0.0
        %1612 = vmatprep.mubr.f32.mxu0 0.0
        %1613 = vmatmul.mubr.f32.gmra.mrb[0].mxu0 %v1544
        %v1614 = vpop.f32.mrb[0].mxu0
        %v1615 = vadd.f32 0.0, %v1614
        %v1616 = vpop.f32.mrb[0].mxu0
        %1617 = vdwg.mxu0
        %v1619 = vrot.slane %v1615, 1
        %v1621 = vsel %vm751, %v1619, 0.0
        %1623 = vrot.lane.b32.xlu0 %v1621, 9
        %v1624 = vpop.permute.xlu0 %1623
        %v1626 = vsel %vm757, %v1615, 0.0
        %v1627 = vsel %vm759, %v1626, %v1624
        %1629 = vrot.lane.b32.xlu0 %v1627, 127
        %v1630 = vpop.permute.xlu0 %1629
        %1632 = vrot.lane.b32.xlu0 %v1627, 15
        %v1633 = vpop.permute.xlu0 %1632
        %v1635 = vsel %vm771, %v1630, %v1633
        %v1636 = vsel %vm776, %v1635, %v1627
        %1638 = vrot.lane.b32.xlu0 %v1636, 126
        %v1639 = vpop.permute.xlu0 %1638
        %1641 = vrot.lane.b32.xlu0 %v1636, 14
        %v1642 = vpop.permute.xlu0 %1641
        %v1644 = vsel %vm785, %v1639, %v1642
        %v1645 = vsel %vm790, %v1644, %v1636
        %1647 = vrot.lane.b32.xlu0 %v1645, 124
        %v1648 = vpop.permute.xlu0 %1647
        %1650 = vrot.lane.b32.xlu0 %v1645, 12
        %v1651 = vpop.permute.xlu0 %1650
        %v1653 = vsel %vm799, %v1648, %v1651
        %v1654 = vsel %vm804, %v1653, %v1645
        %1655 = vrot.lane.b32.xlu0 %v665, 80
        %v1656 = vpop.permute.xlu0 %1655
        %1657 = vrot.lane.b32.xlu0 %v570, 80
        %v1658 = vpop.permute.xlu0 %1657
        %v1659 = vsel %vm671, %v1656, 0
        %v1661 = vsel %vm671, %v1658, 0
        %1663 = vmatprep.subr.mxu0 0.0
        %1664 = vmatpush1.xpose.msra.mxu0 %v1661
        %1665 = vmatprep.subr.mxu0 0.0
        %1666 = vmatpush1.xpose.msra.mxu0 0.0
        %1667 = vmatprep.subr.mxu0 0.0
        %1668 = vmatpush1.xpose.msra.mxu0 0.0
        %1669 = vmatprep.subr.mxu0 0.0
        %1670 = vmatpush1.xpose.msra.mxu0 0.0
        %1671 = vmatprep.subr.mxu0 0.0
        %1672 = vmatpush1.xpose.msra.mxu0 0.0
        %1673 = vmatprep.subr.mxu0 0.0
        %1674 = vmatpush1.xpose.msra.mxu0 0.0
        %1675 = vmatprep.subr.mxu0 0.0
        %1676 = vmatpush1.xpose.msra.mxu0 0.0
        %1677 = vmatprep.subr.mxu0 0.0
        %1678 = vmatpush1.xpose.msra.mxu0 0.0
        %1679 = vmatprep.subr.mxu0 0.0
        %1680 = vmatpush1.xpose.msra.mxu0 0.0
        %1681 = vmatprep.subr.mxu0 0.0
        %1682 = vmatpush1.xpose.msra.mxu0 0.0
        %1683 = vmatprep.subr.mxu0 0.0
        %1684 = vmatpush1.xpose.msra.mxu0 0.0
        %1685 = vmatprep.subr.mxu0 0.0
        %1686 = vmatpush1.xpose.msra.mxu0 0.0
        %1687 = vmatprep.subr.mxu0 0.0
        %1688 = vmatpush1.xpose.msra.mxu0 0.0
        %1689 = vmatprep.subr.mxu0 0.0
        %1690 = vmatpush1.xpose.msra.mxu0 0.0
        %1691 = vmatprep.subr.mxu0 0.0
        %1692 = vmatpush1.xpose.msra.mxu0 0.0
        %1693 = vmatprep.subr.mxu0 0.0
        %1694 = vmatpush1.xpose.msra.mxu0 0.0
        %1695 = vmatprep.subr.mxu0 0.0
        %1696 = vmatpush1.xpose.msra.mxu0 0.0
        %1697 = vmatprep.subr.mxu0 0.0
        %1698 = vmatpush1.xpose.msra.mxu0 0.0
        %1699 = vmatprep.subr.mxu0 0.0
        %1700 = vmatpush1.xpose.msra.mxu0 0.0
        %1701 = vmatprep.subr.mxu0 0.0
        %1702 = vmatpush1.xpose.msra.mxu0 0.0
        %1703 = vmatprep.subr.mxu0 0.0
        %1704 = vmatpush1.xpose.msra.mxu0 0.0
        %1705 = vmatprep.subr.mxu0 0.0
        %1706 = vmatpush1.xpose.msra.mxu0 0.0
        %1707 = vmatprep.subr.mxu0 0.0
        %1708 = vmatpush1.xpose.msra.mxu0 0.0
        %1709 = vmatprep.subr.mxu0 0.0
        %1710 = vmatpush1.xpose.msra.mxu0 0.0
        %1711 = vmatprep.subr.mxu0 0.0
        %1712 = vmatpush1.xpose.msra.mxu0 0.0
        %1713 = vmatprep.subr.mxu0 0.0
        %1714 = vmatpush1.xpose.msra.mxu0 0.0
        %1715 = vmatprep.subr.mxu0 0.0
        %1716 = vmatpush1.xpose.msra.mxu0 0.0
        %1717 = vmatprep.subr.mxu0 0.0
        %1718 = vmatpush1.xpose.msra.mxu0 0.0
        %1719 = vmatprep.subr.mxu0 0.0
        %1720 = vmatpush1.xpose.msra.mxu0 0.0
        %1721 = vmatprep.subr.mxu0 0.0
        %1722 = vmatpush1.xpose.msra.mxu0 0.0
        %1723 = vmatprep.subr.mxu0 0.0
        %1724 = vmatpush1.xpose.msra.mxu0 0.0
        %1725 = vmatprep.subr.mxu0 0.0
        %1726 = vmatpush1.xpose.msra.mxu0 0.0
        %1727 = vmatprep.mubr.f32.mxu0 0.0
        %1728 = vmatmul.mubr.f32.gmra.mrb[0].mxu0 %v1659
        %v1729 = vpop.f32.mrb[0].mxu0
        %v1730 = vadd.f32 %v1654, %v1729
        %v1731 = vpop.f32.mrb[0].mxu0
        %1732 = vdwg.mxu0
        %v1733 = vsel %vm757, %v1730, -inf
        %1734 = vmax.xlane.f32.xlu0 %v1733
        %v1735 = vpop.xlane.xlu0 %1734
        %v1736 = vsub.f32 %v1730, %v1735
        %v1737 = vmul.f32 %v1736, 1.442695
        %v1738 = vpow.pop %v1737
        %v1739 = vsel %vm757, %v1738, 0.0
        %1740 = vadd.xlane.f32.xlu0 %v1739
        %v1741 = vpop.xlane.xlu0 %1740
        %v1742 = vrcp.pop %v1741
        %v1743 = vmul.f32 %v1738, %v1742
        %1744 = vrot.lane.b32.xlu0 %v575, 80
        %v1745 = vpop.permute.xlu0 %1744
        %v1748 = vsel %vm757, %v1743, 0
        %1750 = vmatprep.subr.mxu0 0.0
        %1751 = vmatpush1.msra.mxu0 %v1745
        %1752 = vmatprep.subr.mxu0 0.0
        %1753 = vmatpush1.msra.mxu0 0.0
        %1754 = vmatprep.subr.mxu0 0.0
        %1755 = vmatpush1.msra.mxu0 0.0
        %1756 = vmatprep.subr.mxu0 0.0
        %1757 = vmatpush1.msra.mxu0 0.0
        %1758 = vmatprep.subr.mxu0 0.0
        %1759 = vmatpush1.msra.mxu0 0.0
        %1760 = vmatprep.subr.mxu0 0.0
        %1761 = vmatpush1.msra.mxu0 0.0
        %1762 = vmatprep.subr.mxu0 0.0
        %1763 = vmatpush1.msra.mxu0 0.0
        %1764 = vmatprep.subr.mxu0 0.0
        %1765 = vmatpush1.msra.mxu0 0.0
        %1766 = vmatprep.subr.mxu0 0.0
        %1767 = vmatpush1.msra.mxu0 0.0
        %1768 = vmatprep.subr.mxu0 0.0
        %1769 = vmatpush1.msra.mxu0 0.0
        %1770 = vmatprep.subr.mxu0 0.0
        %1771 = vmatpush1.msra.mxu0 0.0
        %1772 = vmatprep.subr.mxu0 0.0
        %1773 = vmatpush1.msra.mxu0 0.0
        %1774 = vmatprep.subr.mxu0 0.0
        %1775 = vmatpush1.msra.mxu0 0.0
        %1776 = vmatprep.subr.mxu0 0.0
        %1777 = vmatpush1.msra.mxu0 0.0
        %1778 = vmatprep.subr.mxu0 0.0
        %1779 = vmatpush1.msra.mxu0 0.0
        %1780 = vmatprep.subr.mxu0 0.0
        %1781 = vmatpush1.msra.mxu0 0.0
        %1782 = vmatprep.subr.mxu0 0.0
        %1783 = vmatpush1.msra.mxu0 0.0
        %1784 = vmatprep.subr.mxu0 0.0
        %1785 = vmatpush1.msra.mxu0 0.0
        %1786 = vmatprep.subr.mxu0 0.0
        %1787 = vmatpush1.msra.mxu0 0.0
        %1788 = vmatprep.subr.mxu0 0.0
        %1789 = vmatpush1.msra.mxu0 0.0
        %1790 = vmatprep.subr.mxu0 0.0
        %1791 = vmatpush1.msra.mxu0 0.0
        %1792 = vmatprep.subr.mxu0 0.0
        %1793 = vmatpush1.msra.mxu0 0.0
        %1794 = vmatprep.subr.mxu0 0.0
        %1795 = vmatpush1.msra.mxu0 0.0
        %1796 = vmatprep.subr.mxu0 0.0
        %1797 = vmatpush1.msra.mxu0 0.0
        %1798 = vmatprep.subr.mxu0 0.0
        %1799 = vmatpush1.msra.mxu0 0.0
        %1800 = vmatprep.subr.mxu0 0.0
        %1801 = vmatpush1.msra.mxu0 0.0
        %1802 = vmatprep.subr.mxu0 0.0
        %1803 = vmatpush1.msra.mxu0 0.0
        %1804 = vmatprep.subr.mxu0 0.0
        %1805 = vmatpush1.msra.mxu0 0.0
        %1806 = vmatprep.subr.mxu0 0.0
        %1807 = vmatpush1.msra.mxu0 0.0
        %1808 = vmatprep.subr.mxu0 0.0
        %1809 = vmatpush1.msra.mxu0 0.0
        %1810 = vmatprep.subr.mxu0 0.0
        %1811 = vmatpush1.msra.mxu0 0.0
        %1812 = vmatprep.subr.mxu0 0.0
        %1813 = vmatpush1.msra.mxu0 0.0
        %1814 = vmatprep.mubr.f32.mxu0 0.0
        %1815 = vmatmul.mubr.f32.gmra.mrb[0].mxu0 %v1748
        %v1816 = vpop.f32.mrb[0].mxu0
        %v1817 = vadd.f32 0.0, %v1816
        %v1818 = vpop.f32.mrb[0].mxu0
        %1819 = vdwg.mxu0
        %1821 = vrot.lane.b32.xlu0 %v1817, 48
        %v1822 = vpop.permute.xlu0 %1821
        %vm1824 = vcmask 523648
        %1825 = vst.msk [vmem:[#allocation2] sm:$0xff] %vm1824, %v1822
        %v1826 = vld [vmem:[#allocation2] sm:$0xff]
        %v1827 = vld [vmem:[#allocation14] sm:$0xff]
        %v1828 = vld [vmem:[#allocation14 + $0x8] sm:$0xff]
        %v1829 = vld [vmem:[#allocation14 + $0x10] sm:$0xff]
        %v1830 = vld [vmem:[#allocation14 + $0x18] sm:$0xff]
        %v1831 = vld [vmem:[#allocation14 + $0x20] sm:$0xff]
        %v1832 = vld [vmem:[#allocation14 + $0x28] sm:$0xff]
        %v1833 = vld [vmem:[#allocation14 + $0x30] sm:$0xff]
        %v1834 = vld [vmem:[#allocation14 + $0x38] sm:$0xff]
        %v1835 = vlaneseq
        %v1836 = vshrl.u32 %v1835, 7
        %v1837 = vsub.s32 3, %v1836
        %v1838 = vrot.slane %v472, %v1837
        %v1840 = vsel %vm488, %v1826, 0
        %1842 = vmatprep.subr.mxu0 0.0
        %1843 = vmatpush1.msra.mxu0 %v1827
        %1844 = vmatprep.subr.mxu0 0.0
        %1845 = vmatpush1.msra.mxu0 %v1828
        %1846 = vmatprep.subr.mxu0 0.0
        %1847 = vmatpush1.msra.mxu0 %v1829
        %1848 = vmatprep.subr.mxu0 0.0
        %1849 = vmatpush1.msra.mxu0 %v1830
        %1850 = vmatprep.subr.mxu0 0.0
        %1851 = vmatpush1.msra.mxu0 %v1831
        %1852 = vmatprep.subr.mxu0 0.0
        %1853 = vmatpush1.msra.mxu0 %v1832
        %1854 = vmatprep.subr.mxu0 0.0
        %1855 = vmatpush1.msra.mxu0 %v1833
        %1856 = vmatprep.subr.mxu0 0.0
        %1857 = vmatpush1.msra.mxu0 %v1834
        %1858 = vmatprep.subr.mxu0 0.0
        %1859 = vmatpush1.msra.mxu0 0.0
        %1860 = vmatprep.subr.mxu0 0.0
        %1861 = vmatpush1.msra.mxu0 0.0
        %1862 = vmatprep.subr.mxu0 0.0
        %1863 = vmatpush1.msra.mxu0 0.0
        %1864 = vmatprep.subr.mxu0 0.0
        %1865 = vmatpush1.msra.mxu0 0.0
        %1866 = vmatprep.subr.mxu0 0.0
        %1867 = vmatpush1.msra.mxu0 0.0
        %1868 = vmatprep.subr.mxu0 0.0
        %1869 = vmatpush1.msra.mxu0 0.0
        %1870 = vmatprep.subr.mxu0 0.0
        %1871 = vmatpush1.msra.mxu0 0.0
        %1872 = vmatprep.subr.mxu0 0.0
        %1873 = vmatpush1.msra.mxu0 0.0
        %1874 = vmatprep.subr.mxu0 0.0
        %1875 = vmatpush1.msra.mxu0 0.0
        %1876 = vmatprep.subr.mxu0 0.0
        %1877 = vmatpush1.msra.mxu0 0.0
        %1878 = vmatprep.subr.mxu0 0.0
        %1879 = vmatpush1.msra.mxu0 0.0
        %1880 = vmatprep.subr.mxu0 0.0
        %1881 = vmatpush1.msra.mxu0 0.0
        %1882 = vmatprep.subr.mxu0 0.0
        %1883 = vmatpush1.msra.mxu0 0.0
        %1884 = vmatprep.subr.mxu0 0.0
        %1885 = vmatpush1.msra.mxu0 0.0
        %1886 = vmatprep.subr.mxu0 0.0
        %1887 = vmatpush1.msra.mxu0 0.0
        %1888 = vmatprep.subr.mxu0 0.0
        %1889 = vmatpush1.msra.mxu0 0.0
        %1890 = vmatprep.subr.mxu0 0.0
        %1891 = vmatpush1.msra.mxu0 0.0
        %1892 = vmatprep.subr.mxu0 0.0
        %1893 = vmatpush1.msra.mxu0 0.0
        %1894 = vmatprep.subr.mxu0 0.0
        %1895 = vmatpush1.msra.mxu0 0.0
        %1896 = vmatprep.subr.mxu0 0.0
        %1897 = vmatpush1.msra.mxu0 0.0
        %1898 = vmatprep.subr.mxu0 0.0
        %1899 = vmatpush1.msra.mxu0 0.0
        %1900 = vmatprep.subr.mxu0 0.0
        %1901 = vmatpush1.msra.mxu0 0.0
        %1902 = vmatprep.subr.mxu0 0.0
        %1903 = vmatpush1.msra.mxu0 0.0
        %1904 = vmatprep.subr.mxu0 0.0
        %1905 = vmatpush1.msra.mxu0 0.0
        %1906 = vmatprep.mubr.f32.mxu0 0.0
        %1907 = vmatmul.mubr.f32.gmra.mrb[0].mxu0 %v1840
        %v1908 = vpop.f32.mrb[0].mxu0
        %v1909 = vadd.f32 %v1838, %v1908
        %v1910 = vpop.f32.mrb[0].mxu0
        %1911 = vdwg.mxu0
        %1912 = vst.msk [vmem:[%s471] sm:$0xff] %vm488, %v1909
        %s1913 = sand.u32 %s228, 1
        %s1914 = scalar_lea.sflag [#allocation5], %s1913
        %s1915 = sand.u32 %s228, 1
        %s1916 = smul.addr %s1915, 8
        %s1917 = scalar_lea.vmem [#allocation15], %s1916
        // Predicated region
        $region81: #{tpu_custom_call.1} parent=51 // pred_check
          %p1918 = pneg %p238
        $region82: #{tpu_custom_call.1} parent=51 // pred_check_branch
          %1920 = sbr.rel (%p1918) target = $region84
        $region83: #{tpu_custom_call.1} parent=51 // pred_region
          %s1922 = ssub.s32 128, 128
          %1923 = vsyncadd %s1914, %s1922
          %s1924 = smul.addr %s32, 128
          %s1925 = scalar_lea.hbm %s8, %s1924
          %s1927 = sshll.u32 %s1917, 4
          %s1928 = int_to_ptr.vmem [resolvable:$true] %s1927
          %1930 = dma.vmem_to_hbm [thread:$0]  %s1928, 128, %s1925, %s1914
        $region84: #{tpu_custom_call.1} parent=51 // pred_fallthru
          _
      $region52: #{tpu_custom_call.1} parent=5 // pred_fallthru
        _
      %p1931 = scmp.le.s32.totalorder 2, %s27
      // Predicated region
      $region85: #{tpu_custom_call.1} parent=5 // pred_check
        %p1932 = pneg %p1931
      $region86: #{tpu_custom_call.1} parent=5 // pred_check_branch
        %1934 = sbr.rel (%p1932) target = $region88
      $region87: #{tpu_custom_call.1} parent=5 // pred_region
        %s1935 = ssub.s32 %s27, 2
        // Predicated region
        $region89: #{tpu_custom_call.1} parent=87 // pred_check
          %p1936 = pneg %p244
        $region90: #{tpu_custom_call.1} parent=87 // pred_check_branch
          %1938 = sbr.rel (%p1936) target = $region92
        $region91: #{tpu_custom_call.1} parent=87 // pred_region
          %s1939 = sand.u32 %s229, 1
          %s1940 = scalar_lea.sflag [#allocation5], %s1939
          %s1941 = sand.u32 %s229, 1
          %s1942 = smul.addr %s1941, 8
          %s1943 = scalar_lea.vmem [#allocation15], %s1942
          %1944 = dma.done %s1940, 128
        $region92: #{tpu_custom_call.1} parent=87 // pred_fallthru
          _
      $region88: #{tpu_custom_call.1} parent=5 // pred_fallthru
        _
    $region6: #{tpu_custom_call.1} parent=1 // loop_footer
      %s31 = sadd.s32 1, %s27
    $region7: #{tpu_custom_call.1} parent=1 // loop_footer_branch
      %26 = sbr.rel target = $region3
    $region8: #{tpu_custom_call.1} parent=1 // loop_exit
      _
    %1945 = vsyncpa [#allocation4], 1
    %s1946 = scalar_lea.sflag [#allocation4], 1
    %1947 = vsyncpa %s1946, 1
    %1948 = vsyncpa [#allocation7], 1
    %s1949 = scalar_lea.sflag [#allocation7], 1
    %1950 = vsyncpa %s1949, 1
    %1951 = vsyncpa [#allocation10], 1
    %s1952 = scalar_lea.sflag [#allocation10], 1
    %1953 = vsyncpa %s1952, 1
    %1954 = vsyncpa [#allocation13], 1
    %1955 = vsyncpa [#allocation5], 1
    %s1956 = scalar_lea.sflag [#allocation5], 1
    %1957 = vsyncpa %s1956, 1

// kernel: tpu_custom_call.1
$region0: #{tpu_custom_call.1}
  #allocation0 [shape = 'u32[]', space=smem, size = 0x4, offset = 0x4, fixed_abs, tag = 'smem constant byte address 0x4 - core index']
  #allocation1 [shape = 'u32[144,128]{1,0:T(1,128)}', space=vmem, size = 0x12000, scoped, tag = 'internal scratch']
  #allocation2 [shape = 'f32[8,64]{1,0:T(8,128)}', space=vmem, size = 0x1000, scoped, tag = 'scratch operand']
  %s0 = inlined_call_operand.hbm [shape: f32[2,8,64], index: 0, kind: input, shape index: {}]
  %s1 = inlined_call_operand.hbm [shape: f32[2,8,64], index: 1, kind: input, shape index: {}]
  %s2 = inlined_call_operand.hbm [shape: f32[2,8,64], index: 2, kind: input, shape index: {}]
  %s3 = inlined_call_operand.hbm [shape: f32[2,8,64], index: 3, kind: input, shape index: {}]
  %s4 = inlined_call_operand.hbm [shape: f32[64,64], index: 4, kind: input, shape index: {}]
  %s5 = inlined_call_operand.hbm [shape: f32[64,64], index: 5, kind: input, shape index: {}]
  %s6 = inlined_call_operand.hbm [shape: f32[64,64], index: 6, kind: input, shape index: {}]
  %s7 = inlined_call_operand.vmem [shape: f32[8,64], index: 7, kind: input, shape index: {}]
  %s8 = inlined_call_operand.hbm [shape: f32[2,8,64], index: 8, kind: output, shape index: {}]
  %s9 = sld [smem:[#allocation0]]
  $region93: #{tpu_custom_call.1} parent=0
    _
  %s11 = ssub.s32 1, %s9
  %s12 = scalar_select 0, %s11, %s9
  $region1: #{tpu_custom_call.1} parent=0
    #allocation3 [shape = 'u8[8192]{0}', space=vmem, size = 0x2000, scoped, tag = 'input window, operand 0']
    #allocation4 [shape = 's32[2]{0}', space=sflag, size = 0x8, scoped, tag = 'scoped memory for tpu_custom_call.1']
    #allocation5 [shape = 's32[2]{0}', space=sflag, size = 0x8, scoped, tag = 'scoped memory for tpu_custom_call.1']
    #allocation6 [shape = 'u8[8192]{0}', space=vmem, size = 0x2000, scoped, tag = 'input window, operand 1']
    #allocation7 [shape = 's32[2]{0}', space=sflag, size = 0x8, scoped, tag = 'scoped memory for tpu_custom_call.1']
    #allocation8 [shape = 'u8[8192]{0}', space=vmem, size = 0x2000, scoped, tag = 'input window, operand 2']
    #allocation9 [shape = 'u8[8192]{0}', space=vmem, size = 0x2000, scoped, tag = 'input window, operand 3']
    #allocation10 [shape = 's32[2]{0}', space=sflag, size = 0x8, scoped, tag = 'scoped memory for tpu_custom_call.1']
    #allocation11 [shape = 'u8[32768]{0}', space=vmem, size = 0x8000, scoped, tag = 'input window, operand 4, single buffered']
    #allocation12 [shape = 'u8[32768]{0}', space=vmem, size = 0x8000, scoped, tag = 'input window, operand 5, single buffered']
    #allocation13 [shape = 's32[1]{0}', space=sflag, size = 0x4, scoped, tag = 'scoped memory for tpu_custom_call.1']
    #allocation14 [shape = 'u8[32768]{0}', space=vmem, size = 0x8000, scoped, tag = 'input window, operand 6, single buffered']
    #allocation15 [shape = 'u8[8192]{0}', space=vmem, size = 0x2000, scoped, tag = 'output window, operand 0']
    %13 = vsyncpa [#allocation4], 0
    %s14 = scalar_lea.sflag [#allocation4], 1
    %15 = vsyncpa %s14, 0
    %16 = vsyncpa [#allocation7], 0
    %s17 = scalar_lea.sflag [#allocation7], 1
    %18 = vsyncpa %s17, 0
    %19 = vsyncpa [#allocation10], 0
    %s20 = scalar_lea.sflag [#allocation10], 1
    %21 = vsyncpa %s20, 0
    %22 = vsyncpa [#allocation13], 0
    %23 = vsyncpa [#allocation5], 0
    %s24 = scalar_lea.sflag [#allocation5], 1
    %25 = vsyncpa %s24, 0
    loop: start=0, step=1, limit=4
    $region2: #{tpu_custom_call.1} parent=1 // loop_pre_header
      _
    $region3: #{tpu_custom_call.1} parent=1 // loop_header
      %s27 = sphi 0, %s31
      %p28 = scmp.ge.s32.totalorder %s27, 4
      %s37 = sphi 0, %s39
      %s40 = sphi 0, %s37
      %s41 = sphi 0, %s40
      %s57 = sphi 0, %s41
      %s63 = sphi 0, %s65
      %s66 = sphi 0, %s63
      %s67 = sphi 0, %s66
      %s83 = sphi 0, %s67
      %s89 = sphi 0, %s91
      %s92 = sphi 0, %s89
      %s93 = sphi 0, %s92
      %s109 = sphi 0, %s93
      %s115 = sphi 0, %s117
      %s118 = sphi 0, %s115
      %s119 = sphi 0, %s118
      %s135 = sphi 0, %s119
      %s139 = sphi 0, %s139
      %s141 = sphi 0, %s139
      %s142 = sphi 0, %s141
      %s156 = sphi 0, %s142
      %s160 = sphi 0, %s160
      %s162 = sphi 0, %s160
      %s163 = sphi 0, %s162
      %s177 = sphi 0, %s163
      %s181 = sphi 0, %s181
      %s183 = sphi 0, %s181
      %s184 = sphi 0, %s183
      %s198 = sphi 0, %s184
      %s202 = sphi 0, %s202
      %s204 = sphi 0, %s202
      %s205 = sphi 0, %s204
      %s219 = sphi 0, %s205
      %s225 = sphi 0, %s227
      %s228 = sphi 0, %s225
      %s229 = sphi 0, %s228
      %s245 = sphi 0, %s229
    $region4: #{tpu_custom_call.1} parent=1 // loop_header_branch
      %30 = sbr.rel (%p28) target = $region8
    $region5: #{tpu_custom_call.1} parent=1 // loop_body
      %s32 = ssub.s32 %s27, 1
      %s33 = ssub.s32 %s27, 2
      %s34 = sadd.s32 %s27, 1
      %s35 = ssub.s32 %s27, %s34
      %p36 = scmp.eq.s32.totalorder %s35, 0
      %s38 = sadd.s32 %s37, 1
      %s39 = scalar_select %p36, %s37, %s38
      %p42 = pneg %p36
      %p43 = scmp.eq.s32.totalorder %s27, 1
      %p44 = por %p42, %p43
      %p45 = scmp.ne.s32.totalorder %s37, %s40
      %p46 = scmp.eq.s32.totalorder %s27, 0
      %p47 = por %p45, %p46
      %p48 = scmp.ne.s32.totalorder %s37, %s40
      %p49 = scmp.eq.s32.totalorder %s32, 1
      %p50 = por %p48, %p49
      %p51 = scmp.ne.s32.totalorder %s40, %s41
      %p52 = scmp.eq.s32.totalorder %s32, 0
      %p53 = por %p51, %p52
      %p54 = scmp.ne.s32.totalorder %s40, %s41
      %p55 = scmp.eq.s32.totalorder %s33, 1
      %p56 = por %p54, %p55
      %p58 = scmp.ne.s32.totalorder %s41, %s57
      %p59 = scmp.eq.s32.totalorder %s33, 0
      %p60 = por %p58, %p59
      %s61 = ssub.s32 %s27, %s34
      %p62 = scmp.eq.s32.totalorder %s61, 0
      %s64 = sadd.s32 %s63, 1
      %s65 = scalar_select %p62, %s63, %s64
      %p68 = pneg %p62
      %p69 = scmp.eq.s32.totalorder %s27, 1
      %p70 = por %p68, %p69
      %p71 = scmp.ne.s32.totalorder %s63, %s66
      %p72 = scmp.eq.s32.totalorder %s27, 0
      %p73 = por %p71, %p72
      %p74 = scmp.ne.s32.totalorder %s63, %s66
      %p75 = scmp.eq.s32.totalorder %s32, 1
      %p76 = por %p74, %p75
      %p77 = scmp.ne.s32.totalorder %s66, %s67
      %p78 = scmp.eq.s32.totalorder %s32, 0
      %p79 = por %p77, %p78
      %p80 = scmp.ne.s32.totalorder %s66, %s67
      %p81 = scmp.eq.s32.totalorder %s33, 1
      %p82 = por %p80, %p81
      %p84 = scmp.ne.s32.totalorder %s67, %s83
      %p85 = scmp.eq.s32.totalorder %s33, 0
      %p86 = por %p84, %p85
      %s87 = ssub.s32 %s27, %s34
      %p88 = scmp.eq.s32.totalorder %s87, 0
      %s90 = sadd.s32 %s89, 1
      %s91 = scalar_select %p88, %s89, %s90
      %p94 = pneg %p88
      %p95 = scmp.eq.s32.totalorder %s27, 1
      %p96 = por %p94, %p95
      %p97 = scmp.ne.s32.totalorder %s89, %s92
      %p98 = scmp.eq.s32.totalorder %s27, 0
      %p99 = por %p97, %p98
      %p100 = scmp.ne.s32.totalorder %s89, %s92
      %p101 = scmp.eq.s32.totalorder %s32, 1
      %p102 = por %p100, %p101
      %p103 = scmp.ne.s32.totalorder %s92, %s93
      %p104 = scmp.eq.s32.totalorder %s32, 0
      %p105 = por %p103, %p104
      %p106 = scmp.ne.s32.totalorder %s92, %s93
      %p107 = scmp.eq.s32.totalorder %s33, 1
      %p108 = por %p106, %p107
      %p110 = scmp.ne.s32.totalorder %s93, %s109
      %p111 = scmp.eq.s32.totalorder %s33, 0
      %p112 = por %p110, %p111
      %s113 = ssub.s32 %s27, %s34
      %p114 = scmp.eq.s32.totalorder %s113, 0
      %s116 = sadd.s32 %s115, 1
      %s117 = scalar_select %p114, %s115, %s116
      %p120 = pneg %p114
      %p121 = scmp.eq.s32.totalorder %s27, 1
      %p122 = por %p120, %p121
      %p123 = scmp.ne.s32.totalorder %s115, %s118
      %p124 = scmp.eq.s32.totalorder %s27, 0
      %p125 = por %p123, %p124
      %p126 = scmp.ne.s32.totalorder %s115, %s118
      %p127 = scmp.eq.s32.totalorder %s32, 1
      %p128 = por %p126, %p127
      %p129 = scmp.ne.s32.totalorder %s118, %s119
      %p130 = scmp.eq.s32.totalorder %s32, 0
      %p131 = por %p129, %p130
      %p132 = scmp.ne.s32.totalorder %s118, %s119
      %p133 = scmp.eq.s32.totalorder %s33, 1
      %p134 = por %p132, %p133
      %p136 = scmp.ne.s32.totalorder %s119, %s135
      %p137 = scmp.eq.s32.totalorder %s33, 0
      %p138 = por %p136, %p137
      %s140 = sadd.s32 %s139, 1
      %p143 = scmp.eq.s32.totalorder %s27, 1
      %p144 = scmp.ne.s32.totalorder %s139, %s141
      %p145 = scmp.eq.s32.totalorder %s27, 0
      %p146 = por %p144, %p145
      %p147 = scmp.ne.s32.totalorder %s139, %s141
      %p148 = scmp.eq.s32.totalorder %s32, 1
      %p149 = por %p147, %p148
      %p150 = scmp.ne.s32.totalorder %s141, %s142
      %p151 = scmp.eq.s32.totalorder %s32, 0
      %p152 = por %p150, %p151
      %p153 = scmp.ne.s32.totalorder %s141, %s142
      %p154 = scmp.eq.s32.totalorder %s33, 1
      %p155 = por %p153, %p154
      %p157 = scmp.ne.s32.totalorder %s142, %s156
      %p158 = scmp.eq.s32.totalorder %s33, 0
      %p159 = por %p157, %p158
      %s161 = sadd.s32 %s160, 1
      %p164 = scmp.eq.s32.totalorder %s27, 1
      %p165 = scmp.ne.s32.totalorder %s160, %s162
      %p166 = scmp.eq.s32.totalorder %s27, 0
      %p167 = por %p165, %p166
      %p168 = scmp.ne.s32.totalorder %s160, %s162
      %p169 = scmp.eq.s32.totalorder %s32, 1
      %p170 = por %p168, %p169
      %p171 = scmp.ne.s32.totalorder %s162, %s163
      %p172 = scmp.eq.s32.totalorder %s32, 0
      %p173 = por %p171, %p172
      %p174 = scmp.ne.s32.totalorder %s162, %s163
      %p175 = scmp.eq.s32.totalorder %s33, 1
      %p176 = por %p174, %p175
      %p178 = scmp.ne.s32.totalorder %s163, %s177
      %p179 = scmp.eq.s32.totalorder %s33, 0
      %p180 = por %p178, %p179
      %s182 = sadd.s32 %s181, 1
      %p185 = scmp.eq.s32.totalorder %s27, 1
      %p186 = scmp.ne.s32.totalorder %s181, %s183
      %p187 = scmp.eq.s32.totalorder %s27, 0
      %p188 = por %p186, %p187
      %p189 = scmp.ne.s32.totalorder %s181, %s183
      %p190 = scmp.eq.s32.totalorder %s32, 1
      %p191 = por %p189, %p190
      %p192 = scmp.ne.s32.totalorder %s183, %s184
      %p193 = scmp.eq.s32.totalorder %s32, 0
      %p194 = por %p192, %p193
      %p195 = scmp.ne.s32.totalorder %s183, %s184
      %p196 = scmp.eq.s32.totalorder %s33, 1
      %p197 = por %p195, %p196
      %p199 = scmp.ne.s32.totalorder %s184, %s198
      %p200 = scmp.eq.s32.totalorder %s33, 0
      %p201 = por %p199, %p200
      %s203 = sadd.s32 %s202, 1
      %p206 = scmp.eq.s32.totalorder %s27, 1
      %p207 = scmp.ne.s32.totalorder %s202, %s204
      %p208 = scmp.eq.s32.totalorder %s27, 0
      %p209 = por %p207, %p208
      %p210 = scmp.ne.s32.totalorder %s202, %s204
      %p211 = scmp.eq.s32.totalorder %s32, 1
      %p212 = por %p210, %p211
      %p213 = scmp.ne.s32.totalorder %s204, %s205
      %p214 = scmp.eq.s32.totalorder %s32, 0
      %p215 = por %p213, %p214
      %p216 = scmp.ne.s32.totalorder %s204, %s205
      %p217 = scmp.eq.s32.totalorder %s33, 1
      %p218 = por %p216, %p217
      %p220 = scmp.ne.s32.totalorder %s205, %s219
      %p221 = scmp.eq.s32.totalorder %s33, 0
      %p222 = por %p220, %p221
      %s223 = ssub.s32 %s27, %s34
      %p224 = scmp.eq.s32.totalorder %s223, 0
      %s226 = sadd.s32 %s225, 1
      %s227 = scalar_select %p224, %s225, %s226
      %p230 = pneg %p224
      %p231 = scmp.eq.s32.totalorder %s27, 1
      %p232 = por %p230, %p231
      %p233 = scmp.ne.s32.totalorder %s225, %s228
      %p234 = scmp.eq.s32.totalorder %s27, 0
      %p235 = por %p233, %p234
      %p236 = scmp.ne.s32.totalorder %s225, %s228
      %p237 = scmp.eq.s32.totalorder %s32, 1
      %p238 = por %p236, %p237
      %p239 = scmp.ne.s32.totalorder %s228, %s229
      %p240 = scmp.eq.s32.totalorder %s32, 0
      %p241 = por %p239, %p240
      %p242 = scmp.ne.s32.totalorder %s228, %s229
      %p243 = scmp.eq.s32.totalorder %s33, 1
      %p244 = por %p242, %p243
      %p246 = scmp.ne.s32.totalorder %s229, %s245
      %p247 = scmp.eq.s32.totalorder %s33, 0
      %p248 = por %p246, %p247
      %p249 = scmp.le.s32.totalorder 1, %s27
      %p250 = scmp.lt.s32.totalorder %s27, 3
      %p251 = pnand %p249, %p250
      %p252 = pneg %p251
      // Predicated region
      $region9: #{tpu_custom_call.1} parent=5 // pred_check
        _
      $region10: #{tpu_custom_call.1} parent=5 // pred_check_branch
        %254 = sbr.rel (%p251) target = $region12
      $region11: #{tpu_custom_call.1} parent=5 // pred_region
        %s255 = ssub.s32 %s27, 1
        // Predicated region
        $region13: #{tpu_custom_call.1} parent=11 // pred_check
          %p256 = pneg %p152
        $region14: #{tpu_custom_call.1} parent=11 // pred_check_branch
          %258 = sbr.rel (%p256) target = $region16
        $region15: #{tpu_custom_call.1} parent=11 // pred_region
          %s260 = ssub.s32 1024, 1024
          %261 = vsyncadd [#allocation10], %s260
          %s262 = sshll.u32 [#allocation11], 4
          %s263 = int_to_ptr.vmem [resolvable:$true] %s262
          %268 = dma.hbm_to_vmem [thread:$0]  %s4, 1024, %s263, [#allocation10], 128, 128, 8
        $region16: #{tpu_custom_call.1} parent=11 // pred_fallthru
          _
        // Predicated region
        $region17: #{tpu_custom_call.1} parent=11 // pred_check
          %p269 = pneg %p173
        $region18: #{tpu_custom_call.1} parent=11 // pred_check_branch
          %271 = sbr.rel (%p269) target = $region20
        $region19: #{tpu_custom_call.1} parent=11 // pred_region
          %s273 = ssub.s32 1024, 1024
          %274 = vsyncadd [#allocation13], %s273
          %s275 = sshll.u32 [#allocation12], 4
          %s276 = int_to_ptr.vmem [resolvable:$true] %s275
          %281 = dma.hbm_to_vmem [thread:$0]  %s5, 1024, %s276, [#allocation13], 128, 128, 8
        $region20: #{tpu_custom_call.1} parent=11 // pred_fallthru
          _
        // Predicated region
        $region21: #{tpu_custom_call.1} parent=11 // pred_check
          %p282 = pneg %p194
        $region22: #{tpu_custom_call.1} parent=11 // pred_check_branch
          %284 = sbr.rel (%p282) target = $region24
        $region23: #{tpu_custom_call.1} parent=11 // pred_region
          %s286 = ssub.s32 1024, 1024
          %287 = vsyncadd [#allocation13], %s286
          %s288 = sshll.u32 [#allocation14], 4
          %s289 = int_to_ptr.vmem [resolvable:$true] %s288
          %294 = dma.hbm_to_vmem [thread:$0]  %s6, 1024, %s289, [#allocation13], 128, 128, 8
        $region24: #{tpu_custom_call.1} parent=11 // pred_fallthru
          _
        // Predicated region
        $region25: #{tpu_custom_call.1} parent=11 // pred_check
          %p295 = pneg %p215
        $region26: #{tpu_custom_call.1} parent=11 // pred_check_branch
          %297 = sbr.rel (%p295) target = $region28
        $region27: #{tpu_custom_call.1} parent=11 // pred_region
          _
        $region28: #{tpu_custom_call.1} parent=11 // pred_fallthru
          _
      $region12: #{tpu_custom_call.1} parent=5 // pred_fallthru
        _
      %p298 = scmp.lt.s32.totalorder %s27, 2
      // Predicated region
      $region29: #{tpu_custom_call.1} parent=5 // pred_check
        %p299 = pneg %p298
      $region30: #{tpu_custom_call.1} parent=5 // pred_check_branch
        %301 = sbr.rel (%p299) target = $region32
      $region31: #{tpu_custom_call.1} parent=5 // pred_region
        // Predicated region
        $region33: #{tpu_custom_call.1} parent=31 // pred_check
          %p302 = pneg %p47
        $region34: #{tpu_custom_call.1} parent=31 // pred_check_branch
          %304 = sbr.rel (%p302) target = $region36
        $region35: #{tpu_custom_call.1} parent=31 // pred_region
          %s305 = sand.u32 %s37, 1
          %s306 = scalar_lea.sflag [#allocation4], %s305
          %s307 = sand.u32 %s37, 1
          %s308 = smul.addr %s307, 8
          %s309 = scalar_lea.vmem [#allocation3], %s308
          %s311 = ssub.s32 128, 128
          %312 = vsyncadd %s306, %s311
          %s313 = smul.addr %s27, 128
          %s314 = scalar_lea.hbm %s0, %s313
          %s316 = sshll.u32 %s309, 4
          %s317 = int_to_ptr.vmem [resolvable:$true] %s316
          %319 = dma.hbm_to_vmem [thread:$0]  %s314, 128, %s317, %s306
        $region36: #{tpu_custom_call.1} parent=31 // pred_fallthru
          _
        // Predicated region
        $region37: #{tpu_custom_call.1} parent=31 // pred_check
          %p320 = pneg %p73
        $region38: #{tpu_custom_call.1} parent=31 // pred_check_branch
          %322 = sbr.rel (%p320) target = $region40
        $region39: #{tpu_custom_call.1} parent=31 // pred_region
          %s323 = sand.u32 %s27, 1
          %s324 = scalar_lea.sflag [#allocation7], %s323
          %s325 = sand.u32 %s63, 1
          %s326 = smul.addr %s325, 8
          %s327 = scalar_lea.vmem [#allocation6], %s326
          %s329 = ssub.s32 128, 128
          %330 = vsyncadd %s324, %s329
          %s331 = smul.addr %s27, 128
          %s332 = scalar_lea.hbm %s1, %s331
          %s334 = sshll.u32 %s327, 4
          %s335 = int_to_ptr.vmem [resolvable:$true] %s334
          %337 = dma.hbm_to_vmem [thread:$0]  %s332, 128, %s335, %s324
        $region40: #{tpu_custom_call.1} parent=31 // pred_fallthru
          _
        // Predicated region
        $region41: #{tpu_custom_call.1} parent=31 // pred_check
          %p338 = pneg %p99
        $region42: #{tpu_custom_call.1} parent=31 // pred_check_branch
          %340 = sbr.rel (%p338) target = $region44
        $region43: #{tpu_custom_call.1} parent=31 // pred_region
          %s341 = sand.u32 %s27, 1
          %s342 = scalar_lea.sflag [#allocation7], %s341
          %s343 = sand.u32 %s89, 1
          %s344 = smul.addr %s343, 8
          %s345 = scalar_lea.vmem [#allocation8], %s344
          %s347 = ssub.s32 128, 128
          %348 = vsyncadd %s342, %s347
          %s349 = smul.addr %s27, 128
          %s350 = scalar_lea.hbm %s2, %s349
          %s352 = sshll.u32 %s345, 4
          %s353 = int_to_ptr.vmem [resolvable:$true] %s352
          %355 = dma.hbm_to_vmem [thread:$0]  %s350, 128, %s353, %s342
        $region44: #{tpu_custom_call.1} parent=31 // pred_fallthru
          _
        // Predicated region
        $region45: #{tpu_custom_call.1} parent=31 // pred_check
          %p356 = pneg %p125
        $region46: #{tpu_custom_call.1} parent=31 // pred_check_branch
          %358 = sbr.rel (%p356) target = $region48
        $region47: #{tpu_custom_call.1} parent=31 // pred_region
          %s359 = sand.u32 %s27, 1
          %s360 = scalar_lea.sflag [#allocation10], %s359
          %s361 = sand.u32 %s115, 1
          %s362 = smul.addr %s361, 8
          %s363 = scalar_lea.vmem [#allocation9], %s362
          %s365 = ssub.s32 128, 128
          %366 = vsyncadd %s360, %s365
          %s367 = smul.addr %s27, 128
          %s368 = scalar_lea.hbm %s3, %s367
          %s370 = sshll.u32 %s363, 4
          %s371 = int_to_ptr.vmem [resolvable:$true] %s370
          %373 = dma.hbm_to_vmem [thread:$0]  %s368, 128, %s371, %s360
        $region48: #{tpu_custom_call.1} parent=31 // pred_fallthru
          _
      $region32: #{tpu_custom_call.1} parent=5 // pred_fallthru
        _
      %p374 = scmp.le.s32.totalorder 1, %s27
      %p375 = scmp.lt.s32.totalorder %s27, 3
      %p376 = pnand %p374, %p375
      %p377 = pneg %p376
      // Predicated region
      $region49: #{tpu_custom_call.1} parent=5 // pred_check
        _
      $region50: #{tpu_custom_call.1} parent=5 // pred_check_branch
        %379 = sbr.rel (%p376) target = $region52
      $region51: #{tpu_custom_call.1} parent=5 // pred_region
        %s380 = ssub.s32 %s27, 1
        %s381 = sand.u32 %s40, 1
        %s382 = scalar_lea.sflag [#allocation4], %s381
        %s383 = sand.u32 %s40, 1
        %s384 = smul.addr %s383, 8
        %s385 = scalar_lea.vmem [#allocation3], %s384
        // Predicated region
        $region53: #{tpu_custom_call.1} parent=51 // pred_check
          %p386 = pneg %p53
        $region54: #{tpu_custom_call.1} parent=51 // pred_check_branch
          %388 = sbr.rel (%p386) target = $region56
        $region55: #{tpu_custom_call.1} parent=51 // pred_region
          %389 = dma.done %s382, 128
        $region56: #{tpu_custom_call.1} parent=51 // pred_fallthru
          _
        %s390 = sand.u32 %s32, 1
        %s391 = scalar_lea.sflag [#allocation7], %s390
        %s392 = sand.u32 %s66, 1
        %s393 = smul.addr %s392, 8
        %s394 = scalar_lea.vmem [#allocation6], %s393
        // Predicated region
        $region57: #{tpu_custom_call.1} parent=51 // pred_check
          %p395 = pneg %p79
        $region58: #{tpu_custom_call.1} parent=51 // pred_check_branch
          %397 = sbr.rel (%p395) target = $region60
        $region59: #{tpu_custom_call.1} parent=51 // pred_region
          %398 = dma.done %s391, 128
        $region60: #{tpu_custom_call.1} parent=51 // pred_fallthru
          _
        %s399 = sand.u32 %s32, 1
        %s400 = scalar_lea.sflag [#allocation7], %s399
        %s401 = sand.u32 %s92, 1
        %s402 = smul.addr %s401, 8
        %s403 = scalar_lea.vmem [#allocation8], %s402
        // Predicated region
        $region61: #{tpu_custom_call.1} parent=51 // pred_check
          %p404 = pneg %p105
        $region62: #{tpu_custom_call.1} parent=51 // pred_check_branch
          %406 = sbr.rel (%p404) target = $region64
        $region63: #{tpu_custom_call.1} parent=51 // pred_region
          %407 = dma.done %s400, 128
        $region64: #{tpu_custom_call.1} parent=51 // pred_fallthru
          _
        %s408 = sand.u32 %s32, 1
        %s409 = scalar_lea.sflag [#allocation10], %s408
        %s410 = sand.u32 %s118, 1
        %s411 = smul.addr %s410, 8
        %s412 = scalar_lea.vmem [#allocation9], %s411
        // Predicated region
        $region65: #{tpu_custom_call.1} parent=51 // pred_check
          %p413 = pneg %p131
        $region66: #{tpu_custom_call.1} parent=51 // pred_check_branch
          %415 = sbr.rel (%p413) target = $region68
        $region67: #{tpu_custom_call.1} parent=51 // pred_region
          %416 = dma.done %s409, 128
        $region68: #{tpu_custom_call.1} parent=51 // pred_fallthru
          _
        // Predicated region
        $region69: #{tpu_custom_call.1} parent=51 // pred_check
          %p417 = pneg %p152
        $region70: #{tpu_custom_call.1} parent=51 // pred_check_branch
          %419 = sbr.rel (%p417) target = $region72
        $region71: #{tpu_custom_call.1} parent=51 // pred_region
          %420 = dma.done [#allocation10], 1024
        $region72: #{tpu_custom_call.1} parent=51 // pred_fallthru
          _
        // Predicated region
        $region73: #{tpu_custom_call.1} parent=51 // pred_check
          %p421 = pneg %p173
        $region74: #{tpu_custom_call.1} parent=51 // pred_check_branch
          %423 = sbr.rel (%p421) target = $region76
        $region75: #{tpu_custom_call.1} parent=51 // pred_region
          %424 = dma.done [#allocation13], 1024
        $region76: #{tpu_custom_call.1} parent=51 // pred_fallthru
          _
        // Predicated region
        $region77: #{tpu_custom_call.1} parent=51 // pred_check
          %p425 = pneg %p194
        $region78: #{tpu_custom_call.1} parent=51 // pred_check_branch
          %427 = sbr.rel (%p425) target = $region80
        $region79: #{tpu_custom_call.1} parent=51 // pred_region
          %428 = dma.done [#allocation13], 1024
        $region80: #{tpu_custom_call.1} parent=51 // pred_fallthru
          _
        %s429 = sand.u32 %s40, 1
        %s430 = scalar_lea.sflag [#allocation4], %s429
        %s431 = sand.u32 %s40, 1
        %s432 = smul.addr %s431, 8
        %s433 = scalar_lea.vmem [#allocation3], %s432
        %p434 = pneg %p53
        %p435 = pneg %p50
        %s436 = sand.u32 %s32, 1
        %s437 = scalar_lea.sflag [#allocation7], %s436
        %s438 = sand.u32 %s66, 1
        %s439 = smul.addr %s438, 8
        %s440 = scalar_lea.vmem [#allocation6], %s439
        %p441 = pneg %p79
        %p442 = pneg %p76
        %s443 = sand.u32 %s32, 1
        %s444 = scalar_lea.sflag [#allocation7], %s443
        %s445 = sand.u32 %s92, 1
        %s446 = smul.addr %s445, 8
        %s447 = scalar_lea.vmem [#allocation8], %s446
        %p448 = pneg %p105
        %p449 = pneg %p102
        %s450 = sand.u32 %s32, 1
        %s451 = scalar_lea.sflag [#allocation10], %s450
        %s452 = sand.u32 %s118, 1
        %s453 = smul.addr %s452, 8
        %s454 = scalar_lea.vmem [#allocation9], %s453
        %p455 = pneg %p131
        %p456 = pneg %p128
        %p457 = pneg %p152
        %p458 = pneg %p149
        %p459 = pneg %p173
        %p460 = pneg %p170
        %p461 = pneg %p194
        %p462 = pneg %p191
        %p463 = pneg %p215
        %p464 = pneg %p212
        %p465 = pneg %p241
        %p466 = pneg %p238
        %s467 = sand.u32 %s228, 1
        %s468 = scalar_lea.sflag [#allocation5], %s467
        %s469 = sand.u32 %s228, 1
        %s470 = smul.addr %s469, 8
        %s471 = scalar_lea.vmem [#allocation15], %s470
        %v472 = vld [vmem:[%s7] sm:$0xff]
        %v473 = vld [vmem:[%s385] sm:$0xff]
        %v474 = vld [vmem:[%s394] sm:$0xff]
        %v475 = vld [vmem:[%s403] sm:$0xff]
        %v476 = vld [vmem:[#allocation11] sm:$0xff]
        %v477 = vld [vmem:[#allocation11 + $0x8] sm:$0xff]
        %v478 = vld [vmem:[#allocation11 + $0x10] sm:$0xff]
        %v479 = vld [vmem:[#allocation11 + $0x18] sm:$0xff]
        %v480 = vld [vmem:[#allocation11 + $0x20] sm:$0xff]
        %v481 = vld [vmem:[#allocation11 + $0x28] sm:$0xff]
        %v482 = vld [vmem:[#allocation11 + $0x30] sm:$0xff]
        %v483 = vld [vmem:[#allocation11 + $0x38] sm:$0xff]
        %v484 = vlaneseq
        %v485 = vshrl.u32 %v484, 7
        %v486 = vsub.s32 0, %v485
        %v487 = vrot.slane %v472, %v486
        %vm488 = vcmask 523264
        %v490 = vsel %vm488, %v473, 0
        %v493 = vsel %vm488, %v474, 0
        %v496 = vsel %vm488, %v475, 0
        %498 = vmatprep.subr.mxu0 0.0
        %499 = vmatpush1.msra.mxu0 %v476
        %500 = vmatprep.subr.mxu0 0.0
        %501 = vmatpush1.msra.mxu0 %v477
        %502 = vmatprep.subr.mxu0 0.0
        %503 = vmatpush1.msra.mxu0 %v478
        %504 = vmatprep.subr.mxu0 0.0
        %505 = vmatpush1.msra.mxu0 %v479
        %506 = vmatprep.subr.mxu0 0.0
        %507 = vmatpush1.msra.mxu0 %v480
        %508 = vmatprep.subr.mxu0 0.0
        %509 = vmatpush1.msra.mxu0 %v481
        %510 = vmatprep.subr.mxu0 0.0
        %511 = vmatpush1.msra.mxu0 %v482
        %512 = vmatprep.subr.mxu0 0.0
        %513 = vmatpush1.msra.mxu0 %v483
        %514 = vmatprep.subr.mxu0 0.0
        %515 = vmatpush1.msra.mxu0 0.0
        %516 = vmatprep.subr.mxu0 0.0
        %517 = vmatpush1.msra.mxu0 0.0
        %518 = vmatprep.subr.mxu0 0.0
        %519 = vmatpush1.msra.mxu0 0.0
        %520 = vmatprep.subr.mxu0 0.0
        %521 = vmatpush1.msra.mxu0 0.0
        %522 = vmatprep.subr.mxu0 0.0
        %523 = vmatpush1.msra.mxu0 0.0
        %524 = vmatprep.subr.mxu0 0.0
        %525 = vmatpush1.msra.mxu0 0.0
        %526 = vmatprep.subr.mxu0 0.0
        %527 = vmatpush1.msra.mxu0 0.0
        %528 = vmatprep.subr.mxu0 0.0
        %529 = vmatpush1.msra.mxu0 0.0
        %530 = vmatprep.subr.mxu0 0.0
        %531 = vmatpush1.msra.mxu0 0.0
        %532 = vmatprep.subr.mxu0 0.0
        %533 = vmatpush1.msra.mxu0 0.0
        %534 = vmatprep.subr.mxu0 0.0
        %535 = vmatpush1.msra.mxu0 0.0
        %536 = vmatprep.subr.mxu0 0.0
        %537 = vmatpush1.msra.mxu0 0.0
        %538 = vmatprep.subr.mxu0 0.0
        %539 = vmatpush1.msra.mxu0 0.0
        %540 = vmatprep.subr.mxu0 0.0
        %541 = vmatpush1.msra.mxu0 0.0
        %542 = vmatprep.subr.mxu0 0.0
        %543 = vmatpush1.msra.mxu0 0.0
        %544 = vmatprep.subr.mxu0 0.0
        %545 = vmatpush1.msra.mxu0 0.0
        %546 = vmatprep.subr.mxu0 0.0
        %547 = vmatpush1.msra.mxu0 0.0
        %548 = vmatprep.subr.mxu0 0.0
        %549 = vmatpush1.msra.mxu0 0.0
        %550 = vmatprep.subr.mxu0 0.0
        %551 = vmatpush1.msra.mxu0 0.0
        %552 = vmatprep.subr.mxu0 0.0
        %553 = vmatpush1.msra.mxu0 0.0
        %554 = vmatprep.subr.mxu0 0.0
        %555 = vmatpush1.msra.mxu0 0.0
        %556 = vmatprep.subr.mxu0 0.0
        %557 = vmatpush1.msra.mxu0 0.0
        %558 = vmatprep.subr.mxu0 0.0
        %559 = vmatpush1.msra.mxu0 0.0
        %560 = vmatprep.subr.mxu0 0.0
        %561 = vmatpush1.msra.mxu0 0.0
        %562 = vmatprep.mubr.f32.mxu0 0.0
        %563 = vmatmul.mubr.f32.gmra.mrb[0].mxu0 %v490
        %v564 = vpop.f32.mrb[0].mxu0
        %v565 = vadd.f32 %v487, %v564
        %v566 = vpop.f32.mrb[0].mxu0
        %567 = vmatprep.mubr.f32.mxu0 0.0
        %568 = vmatmul.mubr.f32.gmra.mrb[0].mxu0 %v493
        %v569 = vpop.f32.mrb[0].mxu0
        %v570 = vadd.f32 %v487, %v569
        %v571 = vpop.f32.mrb[0].mxu0
        %572 = vmatprep.mubr.f32.mxu0 0.0
        %573 = vmatmul.mubr.f32.gmra.mrb[0].mxu0 %v496
        %v574 = vpop.f32.mrb[0].mxu0
        %v575 = vadd.f32 %v487, %v574
        %v576 = vpop.f32.mrb[0].mxu0
        %577 = vdwg.mxu0
        %v578 = vld [vmem:[%s412] sm:$0xff]
        %v579 = vld [vmem:[#allocation12] sm:$0xff]
        %v580 = vld [vmem:[#allocation12 + $0x8] sm:$0xff]
        %v581 = vld [vmem:[#allocation12 + $0x10] sm:$0xff]
        %v582 = vld [vmem:[#allocation12 + $0x18] sm:$0xff]
        %v583 = vld [vmem:[#allocation12 + $0x20] sm:$0xff]
        %v584 = vld [vmem:[#allocation12 + $0x28] sm:$0xff]
        %v585 = vld [vmem:[#allocation12 + $0x30] sm:$0xff]
        %v586 = vld [vmem:[#allocation12 + $0x38] sm:$0xff]
        %v588 = vsel %vm488, %v578, 0
        %590 = vmatprep.subr.mxu0 0.0
        %591 = vmatpush1.msra.mxu0 %v579
        %592 = vmatprep.subr.mxu0 0.0
        %593 = vmatpush1.msra.mxu0 %v580
        %594 = vmatprep.subr.mxu0 0.0
        %595 = vmatpush1.msra.mxu0 %v581
        %596 = vmatprep.subr.mxu0 0.0
        %597 = vmatpush1.msra.mxu0 %v582
        %598 = vmatprep.subr.mxu0 0.0
        %599 = vmatpush1.msra.mxu0 %v583
        %600 = vmatprep.subr.mxu0 0.0
        %601 = vmatpush1.msra.mxu0 %v584
        %602 = vmatprep.subr.mxu0 0.0
        %603 = vmatpush1.msra.mxu0 %v585
        %604 = vmatprep.subr.mxu0 0.0
        %605 = vmatpush1.msra.mxu0 %v586
        %606 = vmatprep.subr.mxu0 0.0
        %607 = vmatpush1.msra.mxu0 0.0
        %608 = vmatprep.subr.mxu0 0.0
        %609 = vmatpush1.msra.mxu0 0.0
        %610 = vmatprep.subr.mxu0 0.0
        %611 = vmatpush1.msra.mxu0 0.0
        %612 = vmatprep.subr.mxu0 0.0
        %613 = vmatpush1.msra.mxu0 0.0
        %614 = vmatprep.subr.mxu0 0.0
        %615 = vmatpush1.msra.mxu0 0.0
        %616 = vmatprep.subr.mxu0 0.0
        %617 = vmatpush1.msra.mxu0 0.0
        %618 = vmatprep.subr.mxu0 0.0
        %619 = vmatpush1.msra.mxu0 0.0
        %620 = vmatprep.subr.mxu0 0.0
        %621 = vmatpush1.msra.mxu0 0.0
        %622 = vmatprep.subr.mxu0 0.0
        %623 = vmatpush1.msra.mxu0 0.0
        %624 = vmatprep.subr.mxu0 0.0
        %625 = vmatpush1.msra.mxu0 0.0
        %626 = vmatprep.subr.mxu0 0.0
        %627 = vmatpush1.msra.mxu0 0.0
        %628 = vmatprep.subr.mxu0 0.0
        %629 = vmatpush1.msra.mxu0 0.0
        %630 = vmatprep.subr.mxu0 0.0
        %631 = vmatpush1.msra.mxu0 0.0
        %632 = vmatprep.subr.mxu0 0.0
        %633 = vmatpush1.msra.mxu0 0.0
        %634 = vmatprep.subr.mxu0 0.0
        %635 = vmatpush1.msra.mxu0 0.0
        %636 = vmatprep.subr.mxu0 0.0
        %637 = vmatpush1.msra.mxu0 0.0
        %638 = vmatprep.subr.mxu0 0.0
        %639 = vmatpush1.msra.mxu0 0.0
        %640 = vmatprep.subr.mxu0 0.0
        %641 = vmatpush1.msra.mxu0 0.0
        %642 = vmatprep.subr.mxu0 0.0
        %643 = vmatpush1.msra.mxu0 0.0
        %644 = vmatprep.subr.mxu0 0.0
        %645 = vmatpush1.msra.mxu0 0.0
        %646 = vmatprep.subr.mxu0 0.0
        %647 = vmatpush1.msra.mxu0 0.0
        %648 = vmatprep.subr.mxu0 0.0
        %649 = vmatpush1.msra.mxu0 0.0
        %650 = vmatprep.subr.mxu0 0.0
        %651 = vmatpush1.msra.mxu0 0.0
        %652 = vmatprep.subr.mxu0 0.0
        %653 = vmatpush1.msra.mxu0 0.0
        %654 = vmatprep.mubr.f32.mxu0 0.0
        %655 = vmatmul.mubr.f32.gmra.mrb[0].mxu0 %v588
        %v656 = vpop.f32.mrb[0].mxu0
        %v657 = vadd.f32 0.0, %v656
        %v658 = vpop.f32.mrb[0].mxu0
        %659 = vdwg.mxu0
        %v660 = vmul.f32 %v565, 0.125
        %v661 = vlaneseq
        %v662 = vshrl.u32 %v661, 7
        %v663 = vsub.s32 1, %v662
        %v664 = vrot.slane %v472, %v663
        %v665 = vadd.f32 %v660, %v664
        %v666 = vlaneseq
        %v667 = vshrl.u32 %v666, 7
        %v668 = vsub.s32 2, %v667
        %v669 = vrot.slane %v472, %v668
        %v670 = vadd.f32 %v660, %v669
        %vm671 = vcmask 130048
        %v673 = vsel %vm671, %v670, 0
        %v676 = vsel %vm671, %v657, 0
        %678 = vmatprep.subr.mxu0 0.0
        %679 = vmatpush1.xpose.msra.mxu0 %v676
        %680 = vmatprep.subr.mxu0 0.0
        %681 = vmatpush1.xpose.msra.mxu0 0.0
        %682 = vmatprep.subr.mxu0 0.0
        %683 = vmatpush1.xpose.msra.mxu0 0.0
        %684 = vmatprep.subr.mxu0 0.0
        %685 = vmatpush1.xpose.msra.mxu0 0.0
        %686 = vmatprep.subr.mxu0 0.0
        %687 = vmatpush1.xpose.msra.mxu0 0.0
        %688 = vmatprep.subr.mxu0 0.0
        %689 = vmatpush1.xpose.msra.mxu0 0.0
        %690 = vmatprep.subr.mxu0 0.0
        %691 = vmatpush1.xpose.msra.mxu0 0.0
        %692 = vmatprep.subr.mxu0 0.0
        %693 = vmatpush1.xpose.msra.mxu0 0.0
        %694 = vmatprep.subr.mxu0 0.0
        %695 = vmatpush1.xpose.msra.mxu0 0.0
        %696 = vmatprep.subr.mxu0 0.0
        %697 = vmatpush1.xpose.msra.mxu0 0.0
        %698 = vmatprep.subr.mxu0 0.0
        %699 = vmatpush1.xpose.msra.mxu0 0.0
        %700 = vmatprep.subr.mxu0 0.0
        %701 = vmatpush1.xpose.msra.mxu0 0.0
        %702 = vmatprep.subr.mxu0 0.0
        %703 = vmatpush1.xpose.msra.mxu0 0.0
        %704 = vmatprep.subr.mxu0 0.0
        %705 = vmatpush1.xpose.msra.mxu0 0.0
        %706 = vmatprep.subr.mxu0 0.0
        %707 = vmatpush1.xpose.msra.mxu0 0.0
        %708 = vmatprep.subr.mxu0 0.0
        %709 = vmatpush1.xpose.msra.mxu0 0.0
        %710 = vmatprep.subr.mxu0 0.0
        %711 = vmatpush1.xpose.msra.mxu0 0.0
        %712 = vmatprep.subr.mxu0 0.0
        %713 = vmatpush1.xpose.msra.mxu0 0.0
        %714 = vmatprep.subr.mxu0 0.0
        %715 = vmatpush1.xpose.msra.mxu0 0.0
        %716 = vmatprep.subr.mxu0 0.0
        %717 = vmatpush1.xpose.msra.mxu0 0.0
        %718 = vmatprep.subr.mxu0 0.0
        %719 = vmatpush1.xpose.msra.mxu0 0.0
        %720 = vmatprep.subr.mxu0 0.0
        %721 = vmatpush1.xpose.msra.mxu0 0.0
        %722 = vmatprep.subr.mxu0 0.0
        %723 = vmatpush1.xpose.msra.mxu0 0.0
        %724 = vmatprep.subr.mxu0 0.0
        %725 = vmatpush1.xpose.msra.mxu0 0.0
        %726 = vmatprep.subr.mxu0 0.0
        %727 = vmatpush1.xpose.msra.mxu0 0.0
        %728 = vmatprep.subr.mxu0 0.0
        %729 = vmatpush1.xpose.msra.mxu0 0.0
        %730 = vmatprep.subr.mxu0 0.0
        %731 = vmatpush1.xpose.msra.mxu0 0.0
        %732 = vmatprep.subr.mxu0 0.0
        %733 = vmatpush1.xpose.msra.mxu0 0.0
        %734 = vmatprep.subr.mxu0 0.0
        %735 = vmatpush1.xpose.msra.mxu0 0.0
        %736 = vmatprep.subr.mxu0 0.0
        %737 = vmatpush1.xpose.msra.mxu0 0.0
        %738 = vmatprep.subr.mxu0 0.0
        %739 = vmatpush1.xpose.msra.mxu0 0.0
        %740 = vmatprep.subr.mxu0 0.0
        %741 = vmatpush1.xpose.msra.mxu0 0.0
        %742 = vmatprep.mubr.f32.mxu0 0.0
        %743 = vmatmul.mubr.f32.gmra.mrb[0].mxu0 %v673
        %v744 = vpop.f32.mrb[0].mxu0
        %v745 = vadd.f32 0.0, %v744
        %v746 = vpop.f32.mrb[0].mxu0
        %747 = vdwg.mxu0
        %v749 = vrot.slane %v745, 1
        %vm751 = vcmask 1046528
        %v752 = vsel %vm751, %v749, 0.0
        %754 = vrot.lane.b32.xlu0 %v752, 9
        %v755 = vpop.permute.xlu0 %754
        %vm757 = vcmask 64512
        %v758 = vsel %vm757, %v745, 0.0
        %vm759 = vcmask 72704
        %v760 = vsel %vm759, %v758, %v755
        %v761 = vlaneseq
        %v762 = vshrl.u32 %v761, 7
        %v763 = vsub.s32 7, %v762
        %765 = vrot.lane.b32.xlu0 %v760, 127
        %v766 = vpop.permute.xlu0 %765
        %768 = vrot.lane.b32.xlu0 %v760, 15
        %v769 = vpop.permute.xlu0 %768
        %vm771 = vcmask 121856
        %v772 = vsel %vm771, %v766, %v769
        %v773 = vand.u32 %v763, 1
        %vm774 = vcmp.ne.s32.totalorder %v773, 0
        %v775 = vsel %vm774, 1, 0
        %vm776 = vcmp.eq.s32.totalorder %v775, 1
        %v777 = vsel %vm776, %v772, %v760
        %779 = vrot.lane.b32.xlu0 %v777, 126
        %v780 = vpop.permute.xlu0 %779
        %782 = vrot.lane.b32.xlu0 %v777, 14
        %v783 = vpop.permute.xlu0 %782
        %vm785 = vcmask 113664
        %v786 = vsel %vm785, %v780, %v783
        %v787 = vand.u32 %v763, 2
        %vm788 = vcmp.ne.s32.totalorder %v787, 0
        %v789 = vsel %vm788, 1, 0
        %vm790 = vcmp.eq.s32.totalorder %v789, 1
        %v791 = vsel %vm790, %v786, %v777
        %793 = vrot.lane.b32.xlu0 %v791, 124
        %v794 = vpop.permute.xlu0 %793
        %796 = vrot.lane.b32.xlu0 %v791, 12
        %v797 = vpop.permute.xlu0 %796
        %vm799 = vcmask 97280
        %v800 = vsel %vm799, %v794, %v797
        %v801 = vand.u32 %v763, 4
        %vm802 = vcmp.ne.s32.totalorder %v801, 0
        %v803 = vsel %vm802, 1, 0
        %vm804 = vcmp.eq.s32.totalorder %v803, 1
        %v805 = vsel %vm804, %v800, %v791
        %v807 = vsel %vm671, %v665, 0
        %v810 = vsel %vm671, %v570, 0
        %812 = vmatprep.subr.mxu0 0.0
        %813 = vmatpush1.xpose.msra.mxu0 %v810
        %814 = vmatprep.subr.mxu0 0.0
        %815 = vmatpush1.xpose.msra.mxu0 0.0
        %816 = vmatprep.subr.mxu0 0.0
        %817 = vmatpush1.xpose.msra.mxu0 0.0
        %818 = vmatprep.subr.mxu0 0.0
        %819 = vmatpush1.xpose.msra.mxu0 0.0
        %820 = vmatprep.subr.mxu0 0.0
        %821 = vmatpush1.xpose.msra.mxu0 0.0
        %822 = vmatprep.subr.mxu0 0.0
        %823 = vmatpush1.xpose.msra.mxu0 0.0
        %824 = vmatprep.subr.mxu0 0.0
        %825 = vmatpush1.xpose.msra.mxu0 0.0
        %826 = vmatprep.subr.mxu0 0.0
        %827 = vmatpush1.xpose.msra.mxu0 0.0
        %828 = vmatprep.subr.mxu0 0.0
        %829 = vmatpush1.xpose.msra.mxu0 0.0
        %830 = vmatprep.subr.mxu0 0.0
        %831 = vmatpush1.xpose.msra.mxu0 0.0
        %832 = vmatprep.subr.mxu0 0.0
        %833 = vmatpush1.xpose.msra.mxu0 0.0
        %834 = vmatprep.subr.mxu0 0.0
        %835 = vmatpush1.xpose.msra.mxu0 0.0
        %836 = vmatprep.subr.mxu0 0.0
        %837 = vmatpush1.xpose.msra.mxu0 0.0
        %838 = vmatprep.subr.mxu0 0.0
        %839 = vmatpush1.xpose.msra.mxu0 0.0
        %840 = vmatprep.subr.mxu0 0.0
        %841 = vmatpush1.xpose.msra.mxu0 0.0
        %842 = vmatprep.subr.mxu0 0.0
        %843 = vmatpush1.xpose.msra.mxu0 0.0
        %844 = vmatprep.subr.mxu0 0.0
        %845 = vmatpush1.xpose.msra.mxu0 0.0
        %846 = vmatprep.subr.mxu0 0.0
        %847 = vmatpush1.xpose.msra.mxu0 0.0
        %848 = vmatprep.subr.mxu0 0.0
        %849 = vmatpush1.xpose.msra.mxu0 0.0
        %850 = vmatprep.subr.mxu0 0.0
        %851 = vmatpush1.xpose.msra.mxu0 0.0
        %852 = vmatprep.subr.mxu0 0.0
        %853 = vmatpush1.xpose.msra.mxu0 0.0
        %854 = vmatprep.subr.mxu0 0.0
        %855 = vmatpush1.xpose.msra.mxu0 0.0
        %856 = vmatprep.subr.mxu0 0.0
        %857 = vmatpush1.xpose.msra.mxu0 0.0
        %858 = vmatprep.subr.mxu0 0.0
        %859 = vmatpush1.xpose.msra.mxu0 0.0
        %860 = vmatprep.subr.mxu0 0.0
        %861 = vmatpush1.xpose.msra.mxu0 0.0
        %862 = vmatprep.subr.mxu0 0.0
        %863 = vmatpush1.xpose.msra.mxu0 0.0
        %864 = vmatprep.subr.mxu0 0.0
        %865 = vmatpush1.xpose.msra.mxu0 0.0
        %866 = vmatprep.subr.mxu0 0.0
        %867 = vmatpush1.xpose.msra.mxu0 0.0
        %868 = vmatprep.subr.mxu0 0.0
        %869 = vmatpush1.xpose.msra.mxu0 0.0
        %870 = vmatprep.subr.mxu0 0.0
        %871 = vmatpush1.xpose.msra.mxu0 0.0
        %872 = vmatprep.subr.mxu0 0.0
        %873 = vmatpush1.xpose.msra.mxu0 0.0
        %874 = vmatprep.subr.mxu0 0.0
        %875 = vmatpush1.xpose.msra.mxu0 0.0
        %876 = vmatprep.mubr.f32.mxu0 0.0
        %877 = vmatmul.mubr.f32.gmra.mrb[0].mxu0 %v807
        %v878 = vpop.f32.mrb[0].mxu0
        %v879 = vadd.f32 %v805, %v878
        %v880 = vpop.f32.mrb[0].mxu0
        %881 = vdwg.mxu0
        %v882 = vsel %vm757, %v879, -inf
        %883 = vmax.xlane.f32.xlu0 %v882
        %v884 = vpop.xlane.xlu0 %883
        %v885 = vsub.f32 %v879, %v884
        %v886 = vmul.f32 %v885, 1.442695
        %v887 = vpow.pop %v886
        %v888 = vsel %vm757, %v887, 0.0
        %889 = vadd.xlane.f32.xlu0 %v888
        %v890 = vpop.xlane.xlu0 %889
        %v891 = vrcp.pop %v890
        %v892 = vmul.f32 %v887, %v891
        %v894 = vsel %vm757, %v892, 0
        %896 = vmatprep.subr.mxu0 0.0
        %897 = vmatpush1.msra.mxu0 %v575
        %898 = vmatprep.subr.mxu0 0.0
        %899 = vmatpush1.msra.mxu0 0.0
        %900 = vmatprep.subr.mxu0 0.0
        %901 = vmatpush1.msra.mxu0 0.0
        %902 = vmatprep.subr.mxu0 0.0
        %903 = vmatpush1.msra.mxu0 0.0
        %904 = vmatprep.subr.mxu0 0.0
        %905 = vmatpush1.msra.mxu0 0.0
        %906 = vmatprep.subr.mxu0 0.0
        %907 = vmatpush1.msra.mxu0 0.0
        %908 = vmatprep.subr.mxu0 0.0
        %909 = vmatpush1.msra.mxu0 0.0
        %910 = vmatprep.subr.mxu0 0.0
        %911 = vmatpush1.msra.mxu0 0.0
        %912 = vmatprep.subr.mxu0 0.0
        %913 = vmatpush1.msra.mxu0 0.0
        %914 = vmatprep.subr.mxu0 0.0
        %915 = vmatpush1.msra.mxu0 0.0
        %916 = vmatprep.subr.mxu0 0.0
        %917 = vmatpush1.msra.mxu0 0.0
        %918 = vmatprep.subr.mxu0 0.0
        %919 = vmatpush1.msra.mxu0 0.0
        %920 = vmatprep.subr.mxu0 0.0
        %921 = vmatpush1.msra.mxu0 0.0
        %922 = vmatprep.subr.mxu0 0.0
        %923 = vmatpush1.msra.mxu0 0.0
        %924 = vmatprep.subr.mxu0 0.0
        %925 = vmatpush1.msra.mxu0 0.0
        %926 = vmatprep.subr.mxu0 0.0
        %927 = vmatpush1.msra.mxu0 0.0
        %928 = vmatprep.subr.mxu0 0.0
        %929 = vmatpush1.msra.mxu0 0.0
        %930 = vmatprep.subr.mxu0 0.0
        %931 = vmatpush1.msra.mxu0 0.0
        %932 = vmatprep.subr.mxu0 0.0
        %933 = vmatpush1.msra.mxu0 0.0
        %934 = vmatprep.subr.mxu0 0.0
        %935 = vmatpush1.msra.mxu0 0.0
        %936 = vmatprep.subr.mxu0 0.0
        %937 = vmatpush1.msra.mxu0 0.0
        %938 = vmatprep.subr.mxu0 0.0
        %939 = vmatpush1.msra.mxu0 0.0
        %940 = vmatprep.subr.mxu0 0.0
        %941 = vmatpush1.msra.mxu0 0.0
        %942 = vmatprep.subr.mxu0 0.0
        %943 = vmatpush1.msra.mxu0 0.0
        %944 = vmatprep.subr.mxu0 0.0
        %945 = vmatpush1.msra.mxu0 0.0
        %946 = vmatprep.subr.mxu0 0.0
        %947 = vmatpush1.msra.mxu0 0.0
        %948 = vmatprep.subr.mxu0 0.0
        %949 = vmatpush1.msra.mxu0 0.0
        %950 = vmatprep.subr.mxu0 0.0
        %951 = vmatpush1.msra.mxu0 0.0
        %952 = vmatprep.subr.mxu0 0.0
        %953 = vmatpush1.msra.mxu0 0.0
        %954 = vmatprep.subr.mxu0 0.0
        %955 = vmatpush1.msra.mxu0 0.0
        %956 = vmatprep.subr.mxu0 0.0
        %957 = vmatpush1.msra.mxu0 0.0
        %958 = vmatprep.subr.mxu0 0.0
        %959 = vmatpush1.msra.mxu0 0.0
        %960 = vmatprep.mubr.f32.mxu0 0.0
        %961 = vmatmul.mubr.f32.gmra.mrb[0].mxu0 %v894
        %v962 = vpop.f32.mrb[0].mxu0
        %v963 = vadd.f32 0.0, %v962
        %v964 = vpop.f32.mrb[0].mxu0
        %965 = vdwg.mxu0
        %966 = vst.msk [vmem:[#allocation2] sm:$0xff] %vm671, %v963
        %967 = vrot.lane.b32.xlu0 %v670, 112
        %v968 = vpop.permute.xlu0 %967
        %969 = vrot.lane.b32.xlu0 %v657, 112
        %v970 = vpop.permute.xlu0 %969
        %v971 = vsel %vm671, %v968, 0
        %v973 = vsel %vm671, %v970, 0
        %975 = vmatprep.subr.mxu0 0.0
        %976 = vmatpush1.xpose.msra.mxu0 %v973
        %977 = vmatprep.subr.mxu0 0.0
        %978 = vmatpush1.xpose.msra.mxu0 0.0
        %979 = vmatprep.subr.mxu0 0.0
        %980 = vmatpush1.xpose.msra.mxu0 0.0
        %981 = vmatprep.subr.mxu0 0.0
        %982 = vmatpush1.xpose.msra.mxu0 0.0
        %983 = vmatprep.subr.mxu0 0.0
        %984 = vmatpush1.xpose.msra.mxu0 0.0
        %985 = vmatprep.subr.mxu0 0.0
        %986 = vmatpush1.xpose.msra.mxu0 0.0
        %987 = vmatprep.subr.mxu0 0.0
        %988 = vmatpush1.xpose.msra.mxu0 0.0
        %989 = vmatprep.subr.mxu0 0.0
        %990 = vmatpush1.xpose.msra.mxu0 0.0
        %991 = vmatprep.subr.mxu0 0.0
        %992 = vmatpush1.xpose.msra.mxu0 0.0
        %993 = vmatprep.subr.mxu0 0.0
        %994 = vmatpush1.xpose.msra.mxu0 0.0
        %995 = vmatprep.subr.mxu0 0.0
        %996 = vmatpush1.xpose.msra.mxu0 0.0
        %997 = vmatprep.subr.mxu0 0.0
        %998 = vmatpush1.xpose.msra.mxu0 0.0
        %999 = vmatprep.subr.mxu0 0.0
        %1000 = vmatpush1.xpose.msra.mxu0 0.0
        %1001 = vmatprep.subr.mxu0 0.0
        %1002 = vmatpush1.xpose.msra.mxu0 0.0
        %1003 = vmatprep.subr.mxu0 0.0
        %1004 = vmatpush1.xpose.msra.mxu0 0.0
        %1005 = vmatprep.subr.mxu0 0.0
        %1006 = vmatpush1.xpose.msra.mxu0 0.0
        %1007 = vmatprep.subr.mxu0 0.0
        %1008 = vmatpush1.xpose.msra.mxu0 0.0
        %1009 = vmatprep.subr.mxu0 0.0
        %1010 = vmatpush1.xpose.msra.mxu0 0.0
        %1011 = vmatprep.subr.mxu0 0.0
        %1012 = vmatpush1.xpose.msra.mxu0 0.0
        %1013 = vmatprep.subr.mxu0 0.0
        %1014 = vmatpush1.xpose.msra.mxu0 0.0
        %1015 = vmatprep.subr.mxu0 0.0
        %1016 = vmatpush1.xpose.msra.mxu0 0.0
        %1017 = vmatprep.subr.mxu0 0.0
        %1018 = vmatpush1.xpose.msra.mxu0 0.0
        %1019 = vmatprep.subr.mxu0 0.0
        %1020 = vmatpush1.xpose.msra.mxu0 0.0
        %1021 = vmatprep.subr.mxu0 0.0
        %1022 = vmatpush1.xpose.msra.mxu0 0.0
        %1023 = vmatprep.subr.mxu0 0.0
        %1024 = vmatpush1.xpose.msra.mxu0 0.0
        %1025 = vmatprep.subr.mxu0 0.0
        %1026 = vmatpush1.xpose.msra.mxu0 0.0
        %1027 = vmatprep.subr.mxu0 0.0
        %1028 = vmatpush1.xpose.msra.mxu0 0.0
        %1029 = vmatprep.subr.mxu0 0.0
        %1030 = vmatpush1.xpose.msra.mxu0 0.0
        %1031 = vmatprep.subr.mxu0 0.0
        %1032 = vmatpush1.xpose.msra.mxu0 0.0
        %1033 = vmatprep.subr.mxu0 0.0
        %1034 = vmatpush1.xpose.msra.mxu0 0.0
        %1035 = vmatprep.subr.mxu0 0.0
        %1036 = vmatpush1.xpose.msra.mxu0 0.0
        %1037 = vmatprep.subr.mxu0 0.0
        %1038 = vmatpush1.xpose.msra.mxu0 0.0
        %1039 = vmatprep.mubr.f32.mxu0 0.0
        %1040 = vmatmul.mubr.f32.gmra.mrb[0].mxu0 %v971
        %v1041 = vpop.f32.mrb[0].mxu0
        %v1042 = vadd.f32 0.0, %v1041
        %v1043 = vpop.f32.mrb[0].mxu0
        %1044 = vdwg.mxu0
        %v1046 = vrot.slane %v1042, 1
        %v1048 = vsel %vm751, %v1046, 0.0
        %1050 = vrot.lane.b32.xlu0 %v1048, 9
        %v1051 = vpop.permute.xlu0 %1050
        %v1053 = vsel %vm757, %v1042, 0.0
        %v1054 = vsel %vm759, %v1053, %v1051
        %1056 = vrot.lane.b32.xlu0 %v1054, 127
        %v1057 = vpop.permute.xlu0 %1056
        %1059 = vrot.lane.b32.xlu0 %v1054, 15
        %v1060 = vpop.permute.xlu0 %1059
        %v1062 = vsel %vm771, %v1057, %v1060
        %v1063 = vsel %vm776, %v1062, %v1054
        %1065 = vrot.lane.b32.xlu0 %v1063, 126
        %v1066 = vpop.permute.xlu0 %1065
        %1068 = vrot.lane.b32.xlu0 %v1063, 14
        %v1069 = vpop.permute.xlu0 %1068
        %v1071 = vsel %vm785, %v1066, %v1069
        %v1072 = vsel %vm790, %v1071, %v1063
        %1074 = vrot.lane.b32.xlu0 %v1072, 124
        %v1075 = vpop.permute.xlu0 %1074
        %1077 = vrot.lane.b32.xlu0 %v1072, 12
        %v1078 = vpop.permute.xlu0 %1077
        %v1080 = vsel %vm799, %v1075, %v1078
        %v1081 = vsel %vm804, %v1080, %v1072
        %1082 = vrot.lane.b32.xlu0 %v665, 112
        %v1083 = vpop.permute.xlu0 %1082
        %1084 = vrot.lane.b32.xlu0 %v570, 112
        %v1085 = vpop.permute.xlu0 %1084
        %v1086 = vsel %vm671, %v1083, 0
        %v1088 = vsel %vm671, %v1085, 0
        %1090 = vmatprep.subr.mxu0 0.0
        %1091 = vmatpush1.xpose.msra.mxu0 %v1088
        %1092 = vmatprep.subr.mxu0 0.0
        %1093 = vmatpush1.xpose.msra.mxu0 0.0
        %1094 = vmatprep.subr.mxu0 0.0
        %1095 = vmatpush1.xpose.msra.mxu0 0.0
        %1096 = vmatprep.subr.mxu0 0.0
        %1097 = vmatpush1.xpose.msra.mxu0 0.0
        %1098 = vmatprep.subr.mxu0 0.0
        %1099 = vmatpush1.xpose.msra.mxu0 0.0
        %1100 = vmatprep.subr.mxu0 0.0
        %1101 = vmatpush1.xpose.msra.mxu0 0.0
        %1102 = vmatprep.subr.mxu0 0.0
        %1103 = vmatpush1.xpose.msra.mxu0 0.0
        %1104 = vmatprep.subr.mxu0 0.0
        %1105 = vmatpush1.xpose.msra.mxu0 0.0
        %1106 = vmatprep.subr.mxu0 0.0
        %1107 = vmatpush1.xpose.msra.mxu0 0.0
        %1108 = vmatprep.subr.mxu0 0.0
        %1109 = vmatpush1.xpose.msra.mxu0 0.0
        %1110 = vmatprep.subr.mxu0 0.0
        %1111 = vmatpush1.xpose.msra.mxu0 0.0
        %1112 = vmatprep.subr.mxu0 0.0
        %1113 = vmatpush1.xpose.msra.mxu0 0.0
        %1114 = vmatprep.subr.mxu0 0.0
        %1115 = vmatpush1.xpose.msra.mxu0 0.0
        %1116 = vmatprep.subr.mxu0 0.0
        %1117 = vmatpush1.xpose.msra.mxu0 0.0
        %1118 = vmatprep.subr.mxu0 0.0
        %1119 = vmatpush1.xpose.msra.mxu0 0.0
        %1120 = vmatprep.subr.mxu0 0.0
        %1121 = vmatpush1.xpose.msra.mxu0 0.0
        %1122 = vmatprep.subr.mxu0 0.0
        %1123 = vmatpush1.xpose.msra.mxu0 0.0
        %1124 = vmatprep.subr.mxu0 0.0
        %1125 = vmatpush1.xpose.msra.mxu0 0.0
        %1126 = vmatprep.subr.mxu0 0.0
        %1127 = vmatpush1.xpose.msra.mxu0 0.0
        %1128 = vmatprep.subr.mxu0 0.0
        %1129 = vmatpush1.xpose.msra.mxu0 0.0
        %1130 = vmatprep.subr.mxu0 0.0
        %1131 = vmatpush1.xpose.msra.mxu0 0.0
        %1132 = vmatprep.subr.mxu0 0.0
        %1133 = vmatpush1.xpose.msra.mxu0 0.0
        %1134 = vmatprep.subr.mxu0 0.0
        %1135 = vmatpush1.xpose.msra.mxu0 0.0
        %1136 = vmatprep.subr.mxu0 0.0
        %1137 = vmatpush1.xpose.msra.mxu0 0.0
        %1138 = vmatprep.subr.mxu0 0.0
        %1139 = vmatpush1.xpose.msra.mxu0 0.0
        %1140 = vmatprep.subr.mxu0 0.0
        %1141 = vmatpush1.xpose.msra.mxu0 0.0
        %1142 = vmatprep.subr.mxu0 0.0
        %1143 = vmatpush1.xpose.msra.mxu0 0.0
        %1144 = vmatprep.subr.mxu0 0.0
        %1145 = vmatpush1.xpose.msra.mxu0 0.0
        %1146 = vmatprep.subr.mxu0 0.0
        %1147 = vmatpush1.xpose.msra.mxu0 0.0
        %1148 = vmatprep.subr.mxu0 0.0
        %1149 = vmatpush1.xpose.msra.mxu0 0.0
        %1150 = vmatprep.subr.mxu0 0.0
        %1151 = vmatpush1.xpose.msra.mxu0 0.0
        %1152 = vmatprep.subr.mxu0 0.0
        %1153 = vmatpush1.xpose.msra.mxu0 0.0
        %1154 = vmatprep.mubr.f32.mxu0 0.0
        %1155 = vmatmul.mubr.f32.gmra.mrb[0].mxu0 %v1086
        %v1156 = vpop.f32.mrb[0].mxu0
        %v1157 = vadd.f32 %v1081, %v1156
        %v1158 = vpop.f32.mrb[0].mxu0
        %1159 = vdwg.mxu0
        %v1160 = vsel %vm757, %v1157, -inf
        %1161 = vmax.xlane.f32.xlu0 %v1160
        %v1162 = vpop.xlane.xlu0 %1161
        %v1163 = vsub.f32 %v1157, %v1162
        %v1164 = vmul.f32 %v1163, 1.442695
        %v1165 = vpow.pop %v1164
        %v1166 = vsel %vm757, %v1165, 0.0
        %1167 = vadd.xlane.f32.xlu0 %v1166
        %v1168 = vpop.xlane.xlu0 %1167
        %v1169 = vrcp.pop %v1168
        %v1170 = vmul.f32 %v1165, %v1169
        %1172 = vrot.lane.b32.xlu0 %v575, 112
        %v1173 = vpop.permute.xlu0 %1172
        %v1176 = vsel %vm757, %v1170, 0
        %1178 = vmatprep.subr.mxu0 0.0
        %1179 = vmatpush1.msra.mxu0 %v1173
        %1180 = vmatprep.subr.mxu0 0.0
        %1181 = vmatpush1.msra.mxu0 0.0
        %1182 = vmatprep.subr.mxu0 0.0
        %1183 = vmatpush1.msra.mxu0 0.0
        %1184 = vmatprep.subr.mxu0 0.0
        %1185 = vmatpush1.msra.mxu0 0.0
        %1186 = vmatprep.subr.mxu0 0.0
        %1187 = vmatpush1.msra.mxu0 0.0
        %1188 = vmatprep.subr.mxu0 0.0
        %1189 = vmatpush1.msra.mxu0 0.0
        %1190 = vmatprep.subr.mxu0 0.0
        %1191 = vmatpush1.msra.mxu0 0.0
        %1192 = vmatprep.subr.mxu0 0.0
        %1193 = vmatpush1.msra.mxu0 0.0
        %1194 = vmatprep.subr.mxu0 0.0
        %1195 = vmatpush1.msra.mxu0 0.0
        %1196 = vmatprep.subr.mxu0 0.0
        %1197 = vmatpush1.msra.mxu0 0.0
        %1198 = vmatprep.subr.mxu0 0.0
        %1199 = vmatpush1.msra.mxu0 0.0
        %1200 = vmatprep.subr.mxu0 0.0
        %1201 = vmatpush1.msra.mxu0 0.0
        %1202 = vmatprep.subr.mxu0 0.0
        %1203 = vmatpush1.msra.mxu0 0.0
        %1204 = vmatprep.subr.mxu0 0.0
        %1205 = vmatpush1.msra.mxu0 0.0
        %1206 = vmatprep.subr.mxu0 0.0
        %1207 = vmatpush1.msra.mxu0 0.0
        %1208 = vmatprep.subr.mxu0 0.0
        %1209 = vmatpush1.msra.mxu0 0.0
        %1210 = vmatprep.subr.mxu0 0.0
        %1211 = vmatpush1.msra.mxu0 0.0
        %1212 = vmatprep.subr.mxu0 0.0
        %1213 = vmatpush1.msra.mxu0 0.0
        %1214 = vmatprep.subr.mxu0 0.0
        %1215 = vmatpush1.msra.mxu0 0.0
        %1216 = vmatprep.subr.mxu0 0.0
        %1217 = vmatpush1.msra.mxu0 0.0
        %1218 = vmatprep.subr.mxu0 0.0
        %1219 = vmatpush1.msra.mxu0 0.0
        %1220 = vmatprep.subr.mxu0 0.0
        %1221 = vmatpush1.msra.mxu0 0.0
        %1222 = vmatprep.subr.mxu0 0.0
        %1223 = vmatpush1.msra.mxu0 0.0
        %1224 = vmatprep.subr.mxu0 0.0
        %1225 = vmatpush1.msra.mxu0 0.0
        %1226 = vmatprep.subr.mxu0 0.0
        %1227 = vmatpush1.msra.mxu0 0.0
        %1228 = vmatprep.subr.mxu0 0.0
        %1229 = vmatpush1.msra.mxu0 0.0
        %1230 = vmatprep.subr.mxu0 0.0
        %1231 = vmatpush1.msra.mxu0 0.0
        %1232 = vmatprep.subr.mxu0 0.0
        %1233 = vmatpush1.msra.mxu0 0.0
        %1234 = vmatprep.subr.mxu0 0.0
        %1235 = vmatpush1.msra.mxu0 0.0
        %1236 = vmatprep.subr.mxu0 0.0
        %1237 = vmatpush1.msra.mxu0 0.0
        %1238 = vmatprep.subr.mxu0 0.0
        %1239 = vmatpush1.msra.mxu0 0.0
        %1240 = vmatprep.subr.mxu0 0.0
        %1241 = vmatpush1.msra.mxu0 0.0
        %1242 = vmatprep.mubr.f32.mxu0 0.0
        %1243 = vmatmul.mubr.f32.gmra.mrb[0].mxu0 %v1176
        %v1244 = vpop.f32.mrb[0].mxu0
        %v1245 = vadd.f32 0.0, %v1244
        %v1246 = vpop.f32.mrb[0].mxu0
        %1247 = vdwg.mxu0
        %1249 = vrot.lane.b32.xlu0 %v1245, 16
        %v1250 = vpop.permute.xlu0 %1249
        %vm1252 = vcmask 261248
        %1253 = vst.msk [vmem:[#allocation2] sm:$0xff] %vm1252, %v1250
        %1254 = vrot.lane.b32.xlu0 %v670, 96
        %v1255 = vpop.permute.xlu0 %1254
        %1256 = vrot.lane.b32.xlu0 %v657, 96
        %v1257 = vpop.permute.xlu0 %1256
        %v1258 = vsel %vm671, %v1255, 0
        %v1260 = vsel %vm671, %v1257, 0
        %1262 = vmatprep.subr.mxu0 0.0
        %1263 = vmatpush1.xpose.msra.mxu0 %v1260
        %1264 = vmatprep.subr.mxu0 0.0
        %1265 = vmatpush1.xpose.msra.mxu0 0.0
        %1266 = vmatprep.subr.mxu0 0.0
        %1267 = vmatpush1.xpose.msra.mxu0 0.0
        %1268 = vmatprep.subr.mxu0 0.0
        %1269 = vmatpush1.xpose.msra.mxu0 0.0
        %1270 = vmatprep.subr.mxu0 0.0
        %1271 = vmatpush1.xpose.msra.mxu0 0.0
        %1272 = vmatprep.subr.mxu0 0.0
        %1273 = vmatpush1.xpose.msra.mxu0 0.0
        %1274 = vmatprep.subr.mxu0 0.0
        %1275 = vmatpush1.xpose.msra.mxu0 0.0
        %1276 = vmatprep.subr.mxu0 0.0
        %1277 = vmatpush1.xpose.msra.mxu0 0.0
        %1278 = vmatprep.subr.mxu0 0.0
        %1279 = vmatpush1.xpose.msra.mxu0 0.0
        %1280 = vmatprep.subr.mxu0 0.0
        %1281 = vmatpush1.xpose.msra.mxu0 0.0
        %1282 = vmatprep.subr.mxu0 0.0
        %1283 = vmatpush1.xpose.msra.mxu0 0.0
        %1284 = vmatprep.subr.mxu0 0.0
        %1285 = vmatpush1.xpose.msra.mxu0 0.0
        %1286 = vmatprep.subr.mxu0 0.0
        %1287 = vmatpush1.xpose.msra.mxu0 0.0
        %1288 = vmatprep.subr.mxu0 0.0
        %1289 = vmatpush1.xpose.msra.mxu0 0.0
        %1290 = vmatprep.subr.mxu0 0.0
        %1291 = vmatpush1.xpose.msra.mxu0 0.0
        %1292 = vmatprep.subr.mxu0 0.0
        %1293 = vmatpush1.xpose.msra.mxu0 0.0
        %1294 = vmatprep.subr.mxu0 0.0
        %1295 = vmatpush1.xpose.msra.mxu0 0.0
        %1296 = vmatprep.subr.mxu0 0.0
        %1297 = vmatpush1.xpose.msra.mxu0 0.0
        %1298 = vmatprep.subr.mxu0 0.0
        %1299 = vmatpush1.xpose.msra.mxu0 0.0
        %1300 = vmatprep.subr.mxu0 0.0
        %1301 = vmatpush1.xpose.msra.mxu0 0.0
        %1302 = vmatprep.subr.mxu0 0.0
        %1303 = vmatpush1.xpose.msra.mxu0 0.0
        %1304 = vmatprep.subr.mxu0 0.0
        %1305 = vmatpush1.xpose.msra.mxu0 0.0
        %1306 = vmatprep.subr.mxu0 0.0
        %1307 = vmatpush1.xpose.msra.mxu0 0.0
        %1308 = vmatprep.subr.mxu0 0.0
        %1309 = vmatpush1.xpose.msra.mxu0 0.0
        %1310 = vmatprep.subr.mxu0 0.0
        %1311 = vmatpush1.xpose.msra.mxu0 0.0
        %1312 = vmatprep.subr.mxu0 0.0
        %1313 = vmatpush1.xpose.msra.mxu0 0.0
        %1314 = vmatprep.subr.mxu0 0.0
        %1315 = vmatpush1.xpose.msra.mxu0 0.0
        %1316 = vmatprep.subr.mxu0 0.0
        %1317 = vmatpush1.xpose.msra.mxu0 0.0
        %1318 = vmatprep.subr.mxu0 0.0
        %1319 = vmatpush1.xpose.msra.mxu0 0.0
        %1320 = vmatprep.subr.mxu0 0.0
        %1321 = vmatpush1.xpose.msra.mxu0 0.0
        %1322 = vmatprep.subr.mxu0 0.0
        %1323 = vmatpush1.xpose.msra.mxu0 0.0
        %1324 = vmatprep.subr.mxu0 0.0
        %1325 = vmatpush1.xpose.msra.mxu0 0.0
        %1326 = vmatprep.mubr.f32.mxu0 0.0
        %1327 = vmatmul.mubr.f32.gmra.mrb[0].mxu0 %v1258
        %v1328 = vpop.f32.mrb[0].mxu0
        %v1329 = vadd.f32 0.0, %v1328
        %v1330 = vpop.f32.mrb[0].mxu0
        %1331 = vdwg.mxu0
        %v1333 = vrot.slane %v1329, 1
        %v1335 = vsel %vm751, %v1333, 0.0
        %1337 = vrot.lane.b32.xlu0 %v1335, 9
        %v1338 = vpop.permute.xlu0 %1337
        %v1340 = vsel %vm757, %v1329, 0.0
        %v1341 = vsel %vm759, %v1340, %v1338
        %1343 = vrot.lane.b32.xlu0 %v1341, 127
        %v1344 = vpop.permute.xlu0 %1343
        %1346 = vrot.lane.b32.xlu0 %v1341, 15
        %v1347 = vpop.permute.xlu0 %1346
        %v1349 = vsel %vm771, %v1344, %v1347
        %v1350 = vsel %vm776, %v1349, %v1341
        %1352 = vrot.lane.b32.xlu0 %v1350, 126
        %v1353 = vpop.permute.xlu0 %1352
        %1355 = vrot.lane.b32.xlu0 %v1350, 14
        %v1356 = vpop.permute.xlu0 %1355
        %v1358 = vsel %vm785, %v1353, %v1356
        %v1359 = vsel %vm790, %v1358, %v1350
        %1361 = vrot.lane.b32.xlu0 %v1359, 124
        %v1362 = vpop.permute.xlu0 %1361
        %1364 = vrot.lane.b32.xlu0 %v1359, 12
        %v1365 = vpop.permute.xlu0 %1364
        %v1367 = vsel %vm799, %v1362, %v1365
        %v1368 = vsel %vm804, %v1367, %v1359
        %1369 = vrot.lane.b32.xlu0 %v665, 96
        %v1370 = vpop.permute.xlu0 %1369
        %1371 = vrot.lane.b32.xlu0 %v570, 96
        %v1372 = vpop.permute.xlu0 %1371
        %v1373 = vsel %vm671, %v1370, 0
        %v1375 = vsel %vm671, %v1372, 0
        %1377 = vmatprep.subr.mxu0 0.0
        %1378 = vmatpush1.xpose.msra.mxu0 %v1375
        %1379 = vmatprep.subr.mxu0 0.0
        %1380 = vmatpush1.xpose.msra.mxu0 0.0
        %1381 = vmatprep.subr.mxu0 0.0
        %1382 = vmatpush1.xpose.msra.mxu0 0.0
        %1383 = vmatprep.subr.mxu0 0.0
        %1384 = vmatpush1.xpose.msra.mxu0 0.0
        %1385 = vmatprep.subr.mxu0 0.0
        %1386 = vmatpush1.xpose.msra.mxu0 0.0
        %1387 = vmatprep.subr.mxu0 0.0
        %1388 = vmatpush1.xpose.msra.mxu0 0.0
        %1389 = vmatprep.subr.mxu0 0.0
        %1390 = vmatpush1.xpose.msra.mxu0 0.0
        %1391 = vmatprep.subr.mxu0 0.0
        %1392 = vmatpush1.xpose.msra.mxu0 0.0
        %1393 = vmatprep.subr.mxu0 0.0
        %1394 = vmatpush1.xpose.msra.mxu0 0.0
        %1395 = vmatprep.subr.mxu0 0.0
        %1396 = vmatpush1.xpose.msra.mxu0 0.0
        %1397 = vmatprep.subr.mxu0 0.0
        %1398 = vmatpush1.xpose.msra.mxu0 0.0
        %1399 = vmatprep.subr.mxu0 0.0
        %1400 = vmatpush1.xpose.msra.mxu0 0.0
        %1401 = vmatprep.subr.mxu0 0.0
        %1402 = vmatpush1.xpose.msra.mxu0 0.0
        %1403 = vmatprep.subr.mxu0 0.0
        %1404 = vmatpush1.xpose.msra.mxu0 0.0
        %1405 = vmatprep.subr.mxu0 0.0
        %1406 = vmatpush1.xpose.msra.mxu0 0.0
        %1407 = vmatprep.subr.mxu0 0.0
        %1408 = vmatpush1.xpose.msra.mxu0 0.0
        %1409 = vmatprep.subr.mxu0 0.0
        %1410 = vmatpush1.xpose.msra.mxu0 0.0
        %1411 = vmatprep.subr.mxu0 0.0
        %1412 = vmatpush1.xpose.msra.mxu0 0.0
        %1413 = vmatprep.subr.mxu0 0.0
        %1414 = vmatpush1.xpose.msra.mxu0 0.0
        %1415 = vmatprep.subr.mxu0 0.0
        %1416 = vmatpush1.xpose.msra.mxu0 0.0
        %1417 = vmatprep.subr.mxu0 0.0
        %1418 = vmatpush1.xpose.msra.mxu0 0.0
        %1419 = vmatprep.subr.mxu0 0.0
        %1420 = vmatpush1.xpose.msra.mxu0 0.0
        %1421 = vmatprep.subr.mxu0 0.0
        %1422 = vmatpush1.xpose.msra.mxu0 0.0
        %1423 = vmatprep.subr.mxu0 0.0
        %1424 = vmatpush1.xpose.msra.mxu0 0.0
        %1425 = vmatprep.subr.mxu0 0.0
        %1426 = vmatpush1.xpose.msra.mxu0 0.0
        %1427 = vmatprep.subr.mxu0 0.0
        %1428 = vmatpush1.xpose.msra.mxu0 0.0
        %1429 = vmatprep.subr.mxu0 0.0
        %1430 = vmatpush1.xpose.msra.mxu0 0.0
        %1431 = vmatprep.subr.mxu0 0.0
        %1432 = vmatpush1.xpose.msra.mxu0 0.0
        %1433 = vmatprep.subr.mxu0 0.0
        %1434 = vmatpush1.xpose.msra.mxu0 0.0
        %1435 = vmatprep.subr.mxu0 0.0
        %1436 = vmatpush1.xpose.msra.mxu0 0.0
        %1437 = vmatprep.subr.mxu0 0.0
        %1438 = vmatpush1.xpose.msra.mxu0 0.0
        %1439 = vmatprep.subr.mxu0 0.0
        %1440 = vmatpush1.xpose.msra.mxu0 0.0
        %1441 = vmatprep.mubr.f32.mxu0 0.0
        %1442 = vmatmul.mubr.f32.gmra.mrb[0].mxu0 %v1373
        %v1443 = vpop.f32.mrb[0].mxu0
        %v1444 = vadd.f32 %v1368, %v1443
        %v1445 = vpop.f32.mrb[0].mxu0
        %1446 = vdwg.mxu0
        %v1447 = vsel %vm757, %v1444, -inf
        %1448 = vmax.xlane.f32.xlu0 %v1447
        %v1449 = vpop.xlane.xlu0 %1448
        %v1450 = vsub.f32 %v1444, %v1449
        %v1451 = vmul.f32 %v1450, 1.442695
        %v1452 = vpow.pop %v1451
        %v1453 = vsel %vm757, %v1452, 0.0
        %1454 = vadd.xlane.f32.xlu0 %v1453
        %v1455 = vpop.xlane.xlu0 %1454
        %v1456 = vrcp.pop %v1455
        %v1457 = vmul.f32 %v1452, %v1456
        %1458 = vrot.lane.b32.xlu0 %v575, 96
        %v1459 = vpop.permute.xlu0 %1458
        %v1462 = vsel %vm757, %v1457, 0
        %1464 = vmatprep.subr.mxu0 0.0
        %1465 = vmatpush1.msra.mxu0 %v1459
        %1466 = vmatprep.subr.mxu0 0.0
        %1467 = vmatpush1.msra.mxu0 0.0
        %1468 = vmatprep.subr.mxu0 0.0
        %1469 = vmatpush1.msra.mxu0 0.0
        %1470 = vmatprep.subr.mxu0 0.0
        %1471 = vmatpush1.msra.mxu0 0.0
        %1472 = vmatprep.subr.mxu0 0.0
        %1473 = vmatpush1.msra.mxu0 0.0
        %1474 = vmatprep.subr.mxu0 0.0
        %1475 = vmatpush1.msra.mxu0 0.0
        %1476 = vmatprep.subr.mxu0 0.0
        %1477 = vmatpush1.msra.mxu0 0.0
        %1478 = vmatprep.subr.mxu0 0.0
        %1479 = vmatpush1.msra.mxu0 0.0
        %1480 = vmatprep.subr.mxu0 0.0
        %1481 = vmatpush1.msra.mxu0 0.0
        %1482 = vmatprep.subr.mxu0 0.0
        %1483 = vmatpush1.msra.mxu0 0.0
        %1484 = vmatprep.subr.mxu0 0.0
        %1485 = vmatpush1.msra.mxu0 0.0
        %1486 = vmatprep.subr.mxu0 0.0
        %1487 = vmatpush1.msra.mxu0 0.0
        %1488 = vmatprep.subr.mxu0 0.0
        %1489 = vmatpush1.msra.mxu0 0.0
        %1490 = vmatprep.subr.mxu0 0.0
        %1491 = vmatpush1.msra.mxu0 0.0
        %1492 = vmatprep.subr.mxu0 0.0
        %1493 = vmatpush1.msra.mxu0 0.0
        %1494 = vmatprep.subr.mxu0 0.0
        %1495 = vmatpush1.msra.mxu0 0.0
        %1496 = vmatprep.subr.mxu0 0.0
        %1497 = vmatpush1.msra.mxu0 0.0
        %1498 = vmatprep.subr.mxu0 0.0
        %1499 = vmatpush1.msra.mxu0 0.0
        %1500 = vmatprep.subr.mxu0 0.0
        %1501 = vmatpush1.msra.mxu0 0.0
        %1502 = vmatprep.subr.mxu0 0.0
        %1503 = vmatpush1.msra.mxu0 0.0
        %1504 = vmatprep.subr.mxu0 0.0
        %1505 = vmatpush1.msra.mxu0 0.0
        %1506 = vmatprep.subr.mxu0 0.0
        %1507 = vmatpush1.msra.mxu0 0.0
        %1508 = vmatprep.subr.mxu0 0.0
        %1509 = vmatpush1.msra.mxu0 0.0
        %1510 = vmatprep.subr.mxu0 0.0
        %1511 = vmatpush1.msra.mxu0 0.0
        %1512 = vmatprep.subr.mxu0 0.0
        %1513 = vmatpush1.msra.mxu0 0.0
        %1514 = vmatprep.subr.mxu0 0.0
        %1515 = vmatpush1.msra.mxu0 0.0
        %1516 = vmatprep.subr.mxu0 0.0
        %1517 = vmatpush1.msra.mxu0 0.0
        %1518 = vmatprep.subr.mxu0 0.0
        %1519 = vmatpush1.msra.mxu0 0.0
        %1520 = vmatprep.subr.mxu0 0.0
        %1521 = vmatpush1.msra.mxu0 0.0
        %1522 = vmatprep.subr.mxu0 0.0
        %1523 = vmatpush1.msra.mxu0 0.0
        %1524 = vmatprep.subr.mxu0 0.0
        %1525 = vmatpush1.msra.mxu0 0.0
        %1526 = vmatprep.subr.mxu0 0.0
        %1527 = vmatpush1.msra.mxu0 0.0
        %1528 = vmatprep.mubr.f32.mxu0 0.0
        %1529 = vmatmul.mubr.f32.gmra.mrb[0].mxu0 %v1462
        %v1530 = vpop.f32.mrb[0].mxu0
        %v1531 = vadd.f32 0.0, %v1530
        %v1532 = vpop.f32.mrb[0].mxu0
        %1533 = vdwg.mxu0
        %1535 = vrot.lane.b32.xlu0 %v1531, 32
        %v1536 = vpop.permute.xlu0 %1535
        %vm1538 = vcmask 392448
        %1539 = vst.msk [vmem:[#allocation2] sm:$0xff] %vm1538, %v1536
        %1540 = vrot.lane.b32.xlu0 %v670, 80
        %v1541 = vpop.permute.xlu0 %1540
        %1542 = vrot.lane.b32.xlu0 %v657, 80
        %v1543 = vpop.permute.xlu0 %1542
        %v1544 = vsel %vm671, %v1541, 0
        %v1546 = vsel %vm671, %v1543, 0
        %1548 = vmatprep.subr.mxu0 0.0
        %1549 = vmatpush1.xpose.msra.mxu0 %v1546
        %1550 = vmatprep.subr.mxu0 0.0
        %1551 = vmatpush1.xpose.msra.mxu0 0.0
        %1552 = vmatprep.subr.mxu0 0.0
        %1553 = vmatpush1.xpose.msra.mxu0 0.0
        %1554 = vmatprep.subr.mxu0 0.0
        %1555 = vmatpush1.xpose.msra.mxu0 0.0
        %1556 = vmatprep.subr.mxu0 0.0
        %1557 = vmatpush1.xpose.msra.mxu0 0.0
        %1558 = vmatprep.subr.mxu0 0.0
        %1559 = vmatpush1.xpose.msra.mxu0 0.0
        %1560 = vmatprep.subr.mxu0 0.0
        %1561 = vmatpush1.xpose.msra.mxu0 0.0
        %1562 = vmatprep.subr.mxu0 0.0
        %1563 = vmatpush1.xpose.msra.mxu0 0.0
        %1564 = vmatprep.subr.mxu0 0.0
        %1565 = vmatpush1.xpose.msra.mxu0 0.0
        %1566 = vmatprep.subr.mxu0 0.0
        %1567 = vmatpush1.xpose.msra.mxu0 0.0
        %1568 = vmatprep.subr.mxu0 0.0
        %1569 = vmatpush1.xpose.msra.mxu0 0.0
        %1570 = vmatprep.subr.mxu0 0.0
        %1571 = vmatpush1.xpose.msra.mxu0 0.0
        %1572 = vmatprep.subr.mxu0 0.0
        %1573 = vmatpush1.xpose.msra.mxu0 0.0
        %1574 = vmatprep.subr.mxu0 0.0
        %1575 = vmatpush1.xpose.msra.mxu0 0.0
        %1576 = vmatprep.subr.mxu0 0.0
        %1577 = vmatpush1.xpose.msra.mxu0 0.0
        %1578 = vmatprep.subr.mxu0 0.0
        %1579 = vmatpush1.xpose.msra.mxu0 0.0
        %1580 = vmatprep.subr.mxu0 0.0
        %1581 = vmatpush1.xpose.msra.mxu0 0.0
        %1582 = vmatprep.subr.mxu0 0.0
        %1583 = vmatpush1.xpose.msra.mxu0 0.0
        %1584 = vmatprep.subr.mxu0 0.0
        %1585 = vmatpush1.xpose.msra.mxu0 0.0
        %1586 = vmatprep.subr.mxu0 0.0
        %1587 = vmatpush1.xpose.msra.mxu0 0.0
        %1588 = vmatprep.subr.mxu0 0.0
        %1589 = vmatpush1.xpose.msra.mxu0 0.0
        %1590 = vmatprep.subr.mxu0 0.0
        %1591 = vmatpush1.xpose.msra.mxu0 0.0
        %1592 = vmatprep.subr.mxu0 0.0
        %1593 = vmatpush1.xpose.msra.mxu0 0.0
        %1594 = vmatprep.subr.mxu0 0.0
        %1595 = vmatpush1.xpose.msra.mxu0 0.0
        %1596 = vmatprep.subr.mxu0 0.0
        %1597 = vmatpush1.xpose.msra.mxu0 0.0
        %1598 = vmatprep.subr.mxu0 0.0
        %1599 = vmatpush1.xpose.msra.mxu0 0.0
        %1600 = vmatprep.subr.mxu0 0.0
        %1601 = vmatpush1.xpose.msra.mxu0 0.0
        %1602 = vmatprep.subr.mxu0 0.0
        %1603 = vmatpush1.xpose.msra.mxu0 0.0
        %1604 = vmatprep.subr.mxu0 0.0
        %1605 = vmatpush1.xpose.msra.mxu0 0.0
        %1606 = vmatprep.subr.mxu0 0.0
        %1607 = vmatpush1.xpose.msra.mxu0 0.0
        %1608 = vmatprep.subr.mxu0 0.0
        %1609 = vmatpush1.xpose.msra.mxu0 0.0
        %1610 = vmatprep.subr.mxu0 0.0
        %1611 = vmatpush1.xpose.msra.mxu0 0.0
        %1612 = vmatprep.mubr.f32.mxu0 0.0
        %1613 = vmatmul.mubr.f32.gmra.mrb[0].mxu0 %v1544
        %v1614 = vpop.f32.mrb[0].mxu0
        %v1615 = vadd.f32 0.0, %v1614
        %v1616 = vpop.f32.mrb[0].mxu0
        %1617 = vdwg.mxu0
        %v1619 = vrot.slane %v1615, 1
        %v1621 = vsel %vm751, %v1619, 0.0
        %1623 = vrot.lane.b32.xlu0 %v1621, 9
        %v1624 = vpop.permute.xlu0 %1623
        %v1626 = vsel %vm757, %v1615, 0.0
        %v1627 = vsel %vm759, %v1626, %v1624
        %1629 = vrot.lane.b32.xlu0 %v1627, 127
        %v1630 = vpop.permute.xlu0 %1629
        %1632 = vrot.lane.b32.xlu0 %v1627, 15
        %v1633 = vpop.permute.xlu0 %1632
        %v1635 = vsel %vm771, %v1630, %v1633
        %v1636 = vsel %vm776, %v1635, %v1627
        %1638 = vrot.lane.b32.xlu0 %v1636, 126
        %v1639 = vpop.permute.xlu0 %1638
        %1641 = vrot.lane.b32.xlu0 %v1636, 14
        %v1642 = vpop.permute.xlu0 %1641
        %v1644 = vsel %vm785, %v1639, %v1642
        %v1645 = vsel %vm790, %v1644, %v1636
        %1647 = vrot.lane.b32.xlu0 %v1645, 124
        %v1648 = vpop.permute.xlu0 %1647
        %1650 = vrot.lane.b32.xlu0 %v1645, 12
        %v1651 = vpop.permute.xlu0 %1650
        %v1653 = vsel %vm799, %v1648, %v1651
        %v1654 = vsel %vm804, %v1653, %v1645
        %1655 = vrot.lane.b32.xlu0 %v665, 80
        %v1656 = vpop.permute.xlu0 %1655
        %1657 = vrot.lane.b32.xlu0 %v570, 80
        %v1658 = vpop.permute.xlu0 %1657
        %v1659 = vsel %vm671, %v1656, 0
        %v1661 = vsel %vm671, %v1658, 0
        %1663 = vmatprep.subr.mxu0 0.0
        %1664 = vmatpush1.xpose.msra.mxu0 %v1661
        %1665 = vmatprep.subr.mxu0 0.0
        %1666 = vmatpush1.xpose.msra.mxu0 0.0
        %1667 = vmatprep.subr.mxu0 0.0
        %1668 = vmatpush1.xpose.msra.mxu0 0.0
        %1669 = vmatprep.subr.mxu0 0.0
        %1670 = vmatpush1.xpose.msra.mxu0 0.0
        %1671 = vmatprep.subr.mxu0 0.0
        %1672 = vmatpush1.xpose.msra.mxu0 0.0
        %1673 = vmatprep.subr.mxu0 0.0
        %1674 = vmatpush1.xpose.msra.mxu0 0.0
        %1675 = vmatprep.subr.mxu0 0.0
        %1676 = vmatpush1.xpose.msra.mxu0 0.0
        %1677 = vmatprep.subr.mxu0 0.0
        %1678 = vmatpush1.xpose.msra.mxu0 0.0
        %1679 = vmatprep.subr.mxu0 0.0
        %1680 = vmatpush1.xpose.msra.mxu0 0.0
        %1681 = vmatprep.subr.mxu0 0.0
        %1682 = vmatpush1.xpose.msra.mxu0 0.0
        %1683 = vmatprep.subr.mxu0 0.0
        %1684 = vmatpush1.xpose.msra.mxu0 0.0
        %1685 = vmatprep.subr.mxu0 0.0
        %1686 = vmatpush1.xpose.msra.mxu0 0.0
        %1687 = vmatprep.subr.mxu0 0.0
        %1688 = vmatpush1.xpose.msra.mxu0 0.0
        %1689 = vmatprep.subr.mxu0 0.0
        %1690 = vmatpush1.xpose.msra.mxu0 0.0
        %1691 = vmatprep.subr.mxu0 0.0
        %1692 = vmatpush1.xpose.msra.mxu0 0.0
        %1693 = vmatprep.subr.mxu0 0.0
        %1694 = vmatpush1.xpose.msra.mxu0 0.0
        %1695 = vmatprep.subr.mxu0 0.0
        %1696 = vmatpush1.xpose.msra.mxu0 0.0
        %1697 = vmatprep.subr.mxu0 0.0
        %1698 = vmatpush1.xpose.msra.mxu0 0.0
        %1699 = vmatprep.subr.mxu0 0.0
        %1700 = vmatpush1.xpose.msra.mxu0 0.0
        %1701 = vmatprep.subr.mxu0 0.0
        %1702 = vmatpush1.xpose.msra.mxu0 0.0
        %1703 = vmatprep.subr.mxu0 0.0
        %1704 = vmatpush1.xpose.msra.mxu0 0.0
        %1705 = vmatprep.subr.mxu0 0.0
        %1706 = vmatpush1.xpose.msra.mxu0 0.0
        %1707 = vmatprep.subr.mxu0 0.0
        %1708 = vmatpush1.xpose.msra.mxu0 0.0
        %1709 = vmatprep.subr.mxu0 0.0
        %1710 = vmatpush1.xpose.msra.mxu0 0.0
        %1711 = vmatprep.subr.mxu0 0.0
        %1712 = vmatpush1.xpose.msra.mxu0 0.0
        %1713 = vmatprep.subr.mxu0 0.0
        %1714 = vmatpush1.xpose.msra.mxu0 0.0
        %1715 = vmatprep.subr.mxu0 0.0
        %1716 = vmatpush1.xpose.msra.mxu0 0.0
        %1717 = vmatprep.subr.mxu0 0.0
        %1718 = vmatpush1.xpose.msra.mxu0 0.0
        %1719 = vmatprep.subr.mxu0 0.0
        %1720 = vmatpush1.xpose.msra.mxu0 0.0
        %1721 = vmatprep.subr.mxu0 0.0
        %1722 = vmatpush1.xpose.msra.mxu0 0.0
        %1723 = vmatprep.subr.mxu0 0.0
        %1724 = vmatpush1.xpose.msra.mxu0 0.0
        %1725 = vmatprep.subr.mxu0 0.0
        %1726 = vmatpush1.xpose.msra.mxu0 0.0
        %1727 = vmatprep.mubr.f32.mxu0 0.0
        %1728 = vmatmul.mubr.f32.gmra.mrb[0].mxu0 %v1659
        %v1729 = vpop.f32.mrb[0].mxu0
        %v1730 = vadd.f32 %v1654, %v1729
        %v1731 = vpop.f32.mrb[0].mxu0
        %1732 = vdwg.mxu0
        %v1733 = vsel %vm757, %v1730, -inf
        %1734 = vmax.xlane.f32.xlu0 %v1733
        %v1735 = vpop.xlane.xlu0 %1734
        %v1736 = vsub.f32 %v1730, %v1735
        %v1737 = vmul.f32 %v1736, 1.442695
        %v1738 = vpow.pop %v1737
        %v1739 = vsel %vm757, %v1738, 0.0
        %1740 = vadd.xlane.f32.xlu0 %v1739
        %v1741 = vpop.xlane.xlu0 %1740
        %v1742 = vrcp.pop %v1741
        %v1743 = vmul.f32 %v1738, %v1742
        %1744 = vrot.lane.b32.xlu0 %v575, 80
        %v1745 = vpop.permute.xlu0 %1744
        %v1748 = vsel %vm757, %v1743, 0
        %1750 = vmatprep.subr.mxu0 0.0
        %1751 = vmatpush1.msra.mxu0 %v1745
        %1752 = vmatprep.subr.mxu0 0.0
        %1753 = vmatpush1.msra.mxu0 0.0
        %1754 = vmatprep.subr.mxu0 0.0
        %1755 = vmatpush1.msra.mxu0 0.0
        %1756 = vmatprep.subr.mxu0 0.0
        %1757 = vmatpush1.msra.mxu0 0.0
        %1758 = vmatprep.subr.mxu0 0.0
        %1759 = vmatpush1.msra.mxu0 0.0
        %1760 = vmatprep.subr.mxu0 0.0
        %1761 = vmatpush1.msra.mxu0 0.0
        %1762 = vmatprep.subr.mxu0 0.0
        %1763 = vmatpush1.msra.mxu0 0.0
        %1764 = vmatprep.subr.mxu0 0.0
        %1765 = vmatpush1.msra.mxu0 0.0
        %1766 = vmatprep.subr.mxu0 0.0
        %1767 = vmatpush1.msra.mxu0 0.0
        %1768 = vmatprep.subr.mxu0 0.0
        %1769 = vmatpush1.msra.mxu0 0.0
        %1770 = vmatprep.subr.mxu0 0.0
        %1771 = vmatpush1.msra.mxu0 0.0
        %1772 = vmatprep.subr.mxu0 0.0
        %1773 = vmatpush1.msra.mxu0 0.0
        %1774 = vmatprep.subr.mxu0 0.0
        %1775 = vmatpush1.msra.mxu0 0.0
        %1776 = vmatprep.subr.mxu0 0.0
        %1777 = vmatpush1.msra.mxu0 0.0
        %1778 = vmatprep.subr.mxu0 0.0
        %1779 = vmatpush1.msra.mxu0 0.0
        %1780 = vmatprep.subr.mxu0 0.0
        %1781 = vmatpush1.msra.mxu0 0.0
        %1782 = vmatprep.subr.mxu0 0.0
        %1783 = vmatpush1.msra.mxu0 0.0
        %1784 = vmatprep.subr.mxu0 0.0
        %1785 = vmatpush1.msra.mxu0 0.0
        %1786 = vmatprep.subr.mxu0 0.0
        %1787 = vmatpush1.msra.mxu0 0.0
        %1788 = vmatprep.subr.mxu0 0.0
        %1789 = vmatpush1.msra.mxu0 0.0
        %1790 = vmatprep.subr.mxu0 0.0
        %1791 = vmatpush1.msra.mxu0 0.0
        %1792 = vmatprep.subr.mxu0 0.0
        %1793 = vmatpush1.msra.mxu0 0.0
        %1794 = vmatprep.subr.mxu0 0.0
        %1795 = vmatpush1.msra.mxu0 0.0
        %1796 = vmatprep.subr.mxu0 0.0
        %1797 = vmatpush1.msra.mxu0 0.0
        %1798 = vmatprep.subr.mxu0 0.0
        %1799 = vmatpush1.msra.mxu0 0.0
        %1800 = vmatprep.subr.mxu0 0.0
        %1801 = vmatpush1.msra.mxu0 0.0
        %1802 = vmatprep.subr.mxu0 0.0
        %1803 = vmatpush1.msra.mxu0 0.0
        %1804 = vmatprep.subr.mxu0 0.0
        %1805 = vmatpush1.msra.mxu0 0.0
        %1806 = vmatprep.subr.mxu0 0.0
        %1807 = vmatpush1.msra.mxu0 0.0
        %1808 = vmatprep.subr.mxu0 0.0
        %1809 = vmatpush1.msra.mxu0 0.0
        %1810 = vmatprep.subr.mxu0 0.0
        %1811 = vmatpush1.msra.mxu0 0.0
        %1812 = vmatprep.subr.mxu0 0.0
        %1813 = vmatpush1.msra.mxu0 0.0
        %1814 = vmatprep.mubr.f32.mxu0 0.0
        %1815 = vmatmul.mubr.f32.gmra.mrb[0].mxu0 %v1748
        %v1816 = vpop.f32.mrb[0].mxu0
        %v1817 = vadd.f32 0.0, %v1816
        %v1818 = vpop.f32.mrb[0].mxu0
        %1819 = vdwg.mxu0
        %1821 = vrot.lane.b32.xlu0 %v1817, 48
        %v1822 = vpop.permute.xlu0 %1821
        %vm1824 = vcmask 523648
        %1825 = vst.msk [vmem:[#allocation2] sm:$0xff] %vm1824, %v1822
        %v1826 = vld [vmem:[#allocation2] sm:$0xff]
        %v1827 = vld [vmem:[#allocation14] sm:$0xff]
        %v1828 = vld [vmem:[#allocation14 + $0x8] sm:$0xff]
        %v1829 = vld [vmem:[#allocation14 + $0x10] sm:$0xff]
        %v1830 = vld [vmem:[#allocation14 + $0x18] sm:$0xff]
        %v1831 = vld [vmem:[#allocation14 + $0x20] sm:$0xff]
        %v1832 = vld [vmem:[#allocation14 + $0x28] sm:$0xff]
        %v1833 = vld [vmem:[#allocation14 + $0x30] sm:$0xff]
        %v1834 = vld [vmem:[#allocation14 + $0x38] sm:$0xff]
        %v1835 = vlaneseq
        %v1836 = vshrl.u32 %v1835, 7
        %v1837 = vsub.s32 3, %v1836
        %v1838 = vrot.slane %v472, %v1837
        %v1840 = vsel %vm488, %v1826, 0
        %1842 = vmatprep.subr.mxu0 0.0
        %1843 = vmatpush1.msra.mxu0 %v1827
        %1844 = vmatprep.subr.mxu0 0.0
        %1845 = vmatpush1.msra.mxu0 %v1828
        %1846 = vmatprep.subr.mxu0 0.0
        %1847 = vmatpush1.msra.mxu0 %v1829
        %1848 = vmatprep.subr.mxu0 0.0
        %1849 = vmatpush1.msra.mxu0 %v1830
        %1850 = vmatprep.subr.mxu0 0.0
        %1851 = vmatpush1.msra.mxu0 %v1831
        %1852 = vmatprep.subr.mxu0 0.0
        %1853 = vmatpush1.msra.mxu0 %v1832
        %1854 = vmatprep.subr.mxu0 0.0
        %1855 = vmatpush1.msra.mxu0 %v1833
        %1856 = vmatprep.subr.mxu0 0.0
        %1857 = vmatpush1.msra.mxu0 %v1834
        %1858 = vmatprep.subr.mxu0 0.0
        %1859 = vmatpush1.msra.mxu0 0.0
        %1860 = vmatprep.subr.mxu0 0.0
        %1861 = vmatpush1.msra.mxu0 0.0
        %1862 = vmatprep.subr.mxu0 0.0
        %1863 = vmatpush1.msra.mxu0 0.0
        %1864 = vmatprep.subr.mxu0 0.0
        %1865 = vmatpush1.msra.mxu0 0.0
        %1866 = vmatprep.subr.mxu0 0.0
        %1867 = vmatpush1.msra.mxu0 0.0
        %1868 = vmatprep.subr.mxu0 0.0
        %1869 = vmatpush1.msra.mxu0 0.0
        %1870 = vmatprep.subr.mxu0 0.0
        %1871 = vmatpush1.msra.mxu0 0.0
        %1872 = vmatprep.subr.mxu0 0.0
        %1873 = vmatpush1.msra.mxu0 0.0
        %1874 = vmatprep.subr.mxu0 0.0
        %1875 = vmatpush1.msra.mxu0 0.0
        %1876 = vmatprep.subr.mxu0 0.0
        %1877 = vmatpush1.msra.mxu0 0.0
        %1878 = vmatprep.subr.mxu0 0.0
        %1879 = vmatpush1.msra.mxu0 0.0
        %1880 = vmatprep.subr.mxu0 0.0
        %1881 = vmatpush1.msra.mxu0 0.0
        %1882 = vmatprep.subr.mxu0 0.0
        %1883 = vmatpush1.msra.mxu0 0.0
        %1884 = vmatprep.subr.mxu0 0.0
        %1885 = vmatpush1.msra.mxu0 0.0
        %1886 = vmatprep.subr.mxu0 0.0
        %1887 = vmatpush1.msra.mxu0 0.0
        %1888 = vmatprep.subr.mxu0 0.0
        %1889 = vmatpush1.msra.mxu0 0.0
        %1890 = vmatprep.subr.mxu0 0.0
        %1891 = vmatpush1.msra.mxu0 0.0
        %1892 = vmatprep.subr.mxu0 0.0
        %1893 = vmatpush1.msra.mxu0 0.0
        %1894 = vmatprep.subr.mxu0 0.0
        %1895 = vmatpush1.msra.mxu0 0.0
        %1896 = vmatprep.subr.mxu0 0.0
        %1897 = vmatpush1.msra.mxu0 0.0
        %1898 = vmatprep.subr.mxu0 0.0
        %1899 = vmatpush1.msra.mxu0 0.0
        %1900 = vmatprep.subr.mxu0 0.0
        %1901 = vmatpush1.msra.mxu0 0.0
        %1902 = vmatprep.subr.mxu0 0.0
        %1903 = vmatpush1.msra.mxu0 0.0
        %1904 = vmatprep.subr.mxu0 0.0
        %1905 = vmatpush1.msra.mxu0 0.0
        %1906 = vmatprep.mubr.f32.mxu0 0.0
        %1907 = vmatmul.mubr.f32.gmra.mrb[0].mxu0 %v1840
        %v1908 = vpop.f32.mrb[0].mxu0
        %v1909 = vadd.f32 %v1838, %v1908
        %v1910 = vpop.f32.mrb[0].mxu0
        %1911 = vdwg.mxu0
        %1912 = vst.msk [vmem:[%s471] sm:$0xff] %vm488, %v1909
        %s1913 = sand.u32 %s228, 1
        %s1914 = scalar_lea.sflag [#allocation5], %s1913
        %s1915 = sand.u32 %s228, 1
        %s1916 = smul.addr %s1915, 8
        %s1917 = scalar_lea.vmem [#allocation15], %s1916
        // Predicated region
        $region81: #{tpu_custom_call.1} parent=51 // pred_check
          %p1918 = pneg %p238
        $region82: #{tpu_custom_call.1} parent=51 // pred_check_branch
          %1920 = sbr.rel (%p1918) target = $region84
        $region83: #{tpu_custom_call.1} parent=51 // pred_region
          %s1922 = ssub.s32 128, 128
          %1923 = vsyncadd %s1914, %s1922
          %s1924 = smul.addr %s32, 128
          %s1925 = scalar_lea.hbm %s8, %s1924
          %s1927 = sshll.u32 %s1917, 4
          %s1928 = int_to_ptr.vmem [resolvable:$true] %s1927
          %1930 = dma.vmem_to_hbm [thread:$0]  %s1928, 128, %s1925, %s1914
        $region84: #{tpu_custom_call.1} parent=51 // pred_fallthru
          _
      $region52: #{tpu_custom_call.1} parent=5 // pred_fallthru
        _
      %p1931 = scmp.le.s32.totalorder 2, %s27
      // Predicated region
      $region85: #{tpu_custom_call.1} parent=5 // pred_check
        %p1932 = pneg %p1931
      $region86: #{tpu_custom_call.1} parent=5 // pred_check_branch
        %1934 = sbr.rel (%p1932) target = $region88
      $region87: #{tpu_custom_call.1} parent=5 // pred_region
        %s1935 = ssub.s32 %s27, 2
        // Predicated region
        $region89: #{tpu_custom_call.1} parent=87 // pred_check
          %p1936 = pneg %p244
        $region90: #{tpu_custom_call.1} parent=87 // pred_check_branch
          %1938 = sbr.rel (%p1936) target = $region92
        $region91: #{tpu_custom_call.1} parent=87 // pred_region
          %s1939 = sand.u32 %s229, 1
          %s1940 = scalar_lea.sflag [#allocation5], %s1939
          %s1941 = sand.u32 %s229, 1
          %s1942 = smul.addr %s1941, 8
          %s1943 = scalar_lea.vmem [#allocation15], %s1942
          %1944 = dma.done %s1940, 128
        $region92: #{tpu_custom_call.1} parent=87 // pred_fallthru
          _
      $region88: #{tpu_custom_call.1} parent=5 // pred_fallthru
        _
    $region6: #{tpu_custom_call.1} parent=1 // loop_footer
      %s31 = sadd.s32 1, %s27
    $region7: #{tpu_custom_call.1} parent=1 // loop_footer_branch
      %26 = sbr.rel target = $region3
    $region8: #{tpu_custom_call.1} parent=1 // loop_exit
      _
    %1945 = vsyncpa [#allocation4], 1
    %s1946 = scalar_lea.sflag [#allocation4], 1
    %1947 = vsyncpa %s1946, 1
    %1948 = vsyncpa [#allocation7], 1
    %s1949 = scalar_lea.sflag [#allocation7], 1
    %1950 = vsyncpa %s1949, 1
    %1951 = vsyncpa [#allocation10], 1
    %s1952 = scalar_lea.sflag [#allocation10], 1
    %1953 = vsyncpa %s1952, 1
    %1954 = vsyncpa [#allocation13], 1
    %1955 = vsyncpa [#allocation5], 1
    %s1956 = scalar_lea.sflag [#allocation5], 1
    %1957 = vsyncpa %s1956, 1

</llo_original>
